<compile_context>
chip_gen: v7x
topology: tpu7x:2x2x1
jax: 0.10.0
libtpu: 0.0.40
codegen_flags: <defaults>
</compile_context>

<pallas_src>
import math

import jax
import jax.numpy as jnp
from jax import lax
from jax.experimental import pallas as pl
from jax.experimental.pallas import tpu as pltpu

# ----- model hyper-parameters (small demo shapes consistent with the module) --
ISIZE = 32                 # input feature size
HSIZE = 64                 # attention hidden size (= attn_dim * num_head)
OSIZE = 32                 # output feature size
NUM_HEAD = 8
ADIM = HSIZE // NUM_HEAD   # 8
IAUG = ISIZE + 1           # input + ones column (bias folded into the weights)

# jgate constants (module defaults)
JG_TEMP = 0.33
JG_STRETCH = (-0.1, 1.1)
JG_L0_PEN = 1.0
JG_EPS = 1e-6


# --------------------------------------------------------------------------- #
# Kernel
# --------------------------------------------------------------------------- #
def _self_attn_kernel(x_ref, wq_ref, wk_ref, wv_ref, wo_ref, bo_ref, o_ref):
    """One grid step = `bt` batch elements, full sequence resident in VMEM."""
    bt, seq, _ = x_ref.shape
    bh = bt * NUM_HEAD

    x = x_ref[...].astype(jnp.bfloat16)                          # (bt, S, IAUG)

    # Heads become a leading batch dim via leading-dim broadcast + reshape only
    # (no lane/sublane relayout, no per-head column slices, no concat).
    x_bh = jnp.broadcast_to(x[:, None], (bt, NUM_HEAD, seq, IAUG)
                            ).reshape(bh, seq, IAUG)

    def per_head(w_ref):                                         # (H,a,b)->(bh,a,b)
        w = w_ref[...]
        return jnp.broadcast_to(w[None], (bt,) + w.shape
                                ).reshape((bh,) + w.shape[1:])

    wq = per_head(wq_ref)                                        # (bh, IAUG, ADIM)
    wk = per_head(wk_ref)
    wv = per_head(wv_ref)
    wo = per_head(wo_ref)                                        # (bh, ADIM, OSIZE)

    proj = (((2,), (1,)), ((0,), (0,)))                          # x @ W per (b, h)
    q = lax.dot_general(x_bh, wq, proj, preferred_element_type=jnp.float32)
    k = lax.dot_general(x_bh, wk, proj, preferred_element_type=jnp.float32)
    v = lax.dot_general(x_bh, wv, proj, preferred_element_type=jnp.float32)
    # q already carries the 1/sqrt(adim) scale and the Q/K/V biases (host-folded).

    # Scores without materialising k^T: contract the last dim of both operands.
    s = lax.dot_general(q.astype(jnp.bfloat16), k.astype(jnp.bfloat16),
                        (((2,), (2,)), ((0,), (0,))),
                        preferred_element_type=jnp.float32)      # (bh, S, S) f32
    m = jnp.max(s, axis=-1, keepdims=True)                       # f32 softmax stats
    e = jnp.exp(s - m)
    l = jnp.sum(e, axis=-1, keepdims=True)                       # (bh, S, 1)

    # Unnormalised p @ v; the 1/l normalisation is deferred to the small
    # (S, adim) context and done with the EUP approximate reciprocal.
    ctx = lax.dot_general(e.astype(jnp.bfloat16), v.astype(jnp.bfloat16),
                          (((2,), (1,)), ((0,), (0,))),
                          preferred_element_type=jnp.float32)    # (bh, S, ADIM)
    ctx = ctx * pl.reciprocal(l, approx=True)

    # Per-head output projection (eval gate already folded into wo on the
    # host); heads are reduced with a leading-axis sum -> no lane concat.
    outh = lax.dot_general(ctx.astype(jnp.bfloat16), wo,
                           (((2,), (1,)), ((0,), (0,))),
                           preferred_element_type=jnp.float32)   # (bh, S, OSIZE)
    out = jnp.sum(outh.reshape(bt, NUM_HEAD, seq, OSIZE), axis=1)
    out = out + bo_ref[...][None].astype(jnp.float32)            # (bt, S, OSIZE)
    o_ref[...] = out.astype(o_ref.dtype)


# --------------------------------------------------------------------------- #
# Host-side wrapper
# --------------------------------------------------------------------------- #
def _choose_block_batch(batch, seq):
    """Largest batch tile that divides B, leaves >=2 grid steps when B>=2
    (both v7x TensorCores get work) and keeps the per-step f32 score/exp
    intermediates well inside the scoped VMEM budget."""
    per_elem = 3 * NUM_HEAD * seq * seq * 4          # s, e (+ slack), f32
    budget = 6 * 1024 * 1024
    best = 1
    for cand in range(1, batch + 1):
        if batch % cand:
            continue
        if batch >= 2 and (batch // cand) < 2:
            continue
        if cand * per_elem > budget:
            continue
        best = cand
    return best


def _eval_gates(log_a, nogate):
    """jgate eval path: straight-through hard-concrete gates + l0 penalty."""
    low, high = JG_STRETCH
    concrete = jax.nn.sigmoid(log_a[:, 0])                       # (num_head,)
    clipped = jnp.clip(concrete * (high - low) + low, 0.0, 1.0)
    hard = (clipped > 0.5).astype(jnp.float32)                   # forward value
    gates = jnp.ones_like(hard) if nogate else hard
    jleft = hard.reshape(1, NUM_HEAD, 1, 1)
    p_open = jax.nn.sigmoid(log_a[:, 0] - JG_TEMP * math.log(-low / high))
    p_open = jnp.clip(p_open, JG_EPS, 1.0 - JG_EPS)
    jloss = jnp.mean(JG_L0_PEN * jnp.sum(p_open))                # matches torch code
    return gates, jloss, jleft


def _prepare_weights(params, gates):
    """Fold biases (ones-column), 1/sqrt(adim) scale and the per-head gate
    into head-major bf16 weight tensors consumed by the kernel."""
    wqkv, bqkv, wo, bo, _ = params
    w3 = wqkv.reshape(ISIZE, 3, NUM_HEAD, ADIM)      # columns: (which, head, adim)
    b3 = bqkv.reshape(3, NUM_HEAD, ADIM)

    def head_major(which, scale=1.0):
        w = jnp.transpose(w3[:, which], (1, 0, 2))               # (H, ISIZE, ADIM)
        b = b3[which][:, None, :]                                # (H, 1, ADIM)
        return (jnp.concatenate([w, b], axis=1) * scale).astype(jnp.bfloat16)

    wq = head_major(0, 1.0 / math.sqrt(ADIM))        # fold score scale into Q path
    wk = head_major(1)
    wv = head_major(2)
    wo_g = (wo.reshape(NUM_HEAD, ADIM, OSIZE)
            * gates[:, None, None]).astype(jnp.bfloat16)         # gate folded in
    return wq, wk, wv, wo_g, bo


def self_attn_forward(x, params, *, nogate=False, istrain=False, jprint=False):
    """x: (B, S, isize). Returns (out, jloss, jleft) like the PyTorch module."""
    del jprint                                       # host printing skipped
    del istrain                                      # TODO(synk): eval path only
    B, S, D = x.shape
    assert D == ISIZE

    log_a = params[4]
    gates, jloss, jleft = _eval_gates(log_a, nogate)
    wq, wk, wv, wo_g, bo = _prepare_weights(params, gates)

    # ones column so the Q/K/V biases ride inside the weight matmuls
    x_aug = jnp.concatenate([x, jnp.ones((B, S, 1), x.dtype)], axis=-1)

    bt = _choose_block_batch(B, S)
    grid = (B // bt,)

    flops = B * (2 * S * IAUG * 3 * HSIZE
                 + NUM_HEAD * (2 * S * S * ADIM) * 2
                 + 2 * S * HSIZE * OSIZE)
    transcendentals = B * NUM_HEAD * (S * S + S)
    bytes_accessed = (B * S * IAUG * 4
                      + 2 * (wq.size + wk.size + wv.size + wo_g.size)
                      + bo.size * 4 + B * S * OSIZE * 4)

    out = pl.pallas_call(
        _self_attn_kernel,
        out_shape=jax.ShapeDtypeStruct((B, S, OSIZE), x.dtype),
        grid_spec=pltpu.PrefetchScalarGridSpec(
            num_scalar_prefetch=0,
            grid=grid,
            in_specs=[
                pl.BlockSpec((bt, S, IAUG), lambda b: (b, 0, 0)),            # x
                pl.BlockSpec((NUM_HEAD, IAUG, ADIM), lambda b: (0, 0, 0)),   # Wq
                pl.BlockSpec((NUM_HEAD, IAUG, ADIM), lambda b: (0, 0, 0)),   # Wk
                pl.BlockSpec((NUM_HEAD, IAUG, ADIM), lambda b: (0, 0, 0)),   # Wv
                pl.BlockSpec((NUM_HEAD, ADIM, OSIZE), lambda b: (0, 0, 0)),  # Wo*gate
                pl.BlockSpec((1, OSIZE), lambda b: (0, 0)),                  # bo
            ],
            out_specs=pl.BlockSpec((bt, S, OSIZE), lambda b: (b, 0, 0)),
        ),
        compiler_params=pltpu.CompilerParams(
            dimension_semantics=("parallel",),
            vmem_limit_bytes=32 * 1024 * 1024),
        cost_estimate=pl.CostEstimate(
            flops=flops,
            transcendentals=transcendentals,
            bytes_accessed=bytes_accessed),
    )(x_aug, wq, wk, wv, wo_g, bo)

    return out, jloss, jleft


# --------------------------------------------------------------------------- #
# Params + reference
# --------------------------------------------------------------------------- #
def init_params(key):
    k1, k2, k3, k4, k5 = jax.random.split(key, 5)
    lim1 = 1.0 / math.sqrt(ISIZE)
    wqkv = jax.random.uniform(k1, (ISIZE, 3 * HSIZE), jnp.float32, -lim1, lim1)
    bqkv = jax.random.uniform(k2, (1, 3 * HSIZE), jnp.float32, -lim1, lim1)
    lim2 = 1.0 / math.sqrt(HSIZE)
    wo = jax.random.uniform(k3, (HSIZE, OSIZE), jnp.float32, -lim2, lim2)
    bo = jax.random.uniform(k4, (1, OSIZE), jnp.float32, -lim2, lim2)
    log_a = jax.random.normal(k5, (NUM_HEAD, 1), jnp.float32)    # nn.Embedding(8,1)
    return (wqkv, bqkv, wo, bo, log_a)


def _reference(x, params, *, nogate=False):
    """Plain-JAX f32 reimplementation of the PyTorch forward (eval path)."""
    wqkv, bqkv, wo, bo, log_a = params
    B, S, _ = x.shape
    qkv = (x @ wqkv + bqkv[0]).reshape(B, S, 3, NUM_HEAD, ADIM)
    q = qkv[:, :, 0].transpose(0, 2, 1, 3)                       # (B,H,S,adim)
    k = qkv[:, :, 1].transpose(0, 2, 3, 1)                       # (B,H,adim,S)
    v = qkv[:, :, 2].transpose(0, 2, 1, 3)                       # (B,H,S,adim)
    scores = jnp.einsum('bhqd,bhdk->bhqk', q, k) / math.sqrt(ADIM)
    p = jax.nn.softmax(scores, axis=-1)
    low, high = JG_STRETCH
    gates = (jnp.clip(jax.nn.sigmoid(log_a[:, 0]) * (high - low) + low,
                      0.0, 1.0) > 0.5).astype(jnp.float32)
    if nogate:
        gates = jnp.ones_like(gates)
    ctx = jnp.einsum('bhqk,bhkd->bhqd', p, v) * gates[None, :, None, None]
    ctx = ctx.transpose(0, 2, 1, 3).reshape(B, S, HSIZE)
    return ctx @ wo + bo[0]


if __name__ == "__main__":
    key = jax.random.PRNGKey(0)
    kp, kx = jax.random.split(key, 2)
    params = init_params(kp)

    B, S = 4, 16
    x = jax.random.normal(kx, (B, S, ISIZE), jnp.float32)

    out, jloss, jleft = self_attn_forward(x, params, nogate=False, istrain=False)
    out = jax.block_until_ready(out)

    ref = _reference(x, params, nogate=False)
    assert out.shape == (B, S, OSIZE)
    assert jleft.shape == (1, NUM_HEAD, 1, 1)
    # bf16 matmul operands + approximate reciprocal -> compare loosely vs f32 ref.
    assert jnp.allclose(out, ref, atol=2e-2, rtol=2e-2), "mismatch vs reference"
    print("KERNEL_OK")
</pallas_src>

<mosaic_0001>
module attributes {stable_mosaic.version = 11 : i64} {
  func.func @_self_attn_kernel(%arg0: i32, %arg1: memref<2x16x33xf32, #tpu.memory_space<vmem>>, %arg2: memref<8x33x8xbf16, #tpu.memory_space<vmem>>, %arg3: memref<8x33x8xbf16, #tpu.memory_space<vmem>>, %arg4: memref<8x33x8xbf16, #tpu.memory_space<vmem>>, %arg5: memref<8x8x32xbf16, #tpu.memory_space<vmem>>, %arg6: memref<1x32xf32, #tpu.memory_space<vmem>>, %arg7: memref<2x16x32xf32, #tpu.memory_space<vmem>>) attributes {dimension_semantics = [#tpu.dimension_semantics<parallel>], iteration_bounds = array<i64: 2>, scalar_prefetch = 0 : i64, scratch_operands = 0 : i64, tpu.core_type = #tpu.core_type<tc>, window_params = [{transform_indices = @transform_0, window_bounds = array<i64: 2, 16, 33>}, {pipeline_mode = #tpu.pipeline_mode<synchronous>, transform_indices = @transform_1, window_bounds = array<i64: 8, 33, 8>}, {pipeline_mode = #tpu.pipeline_mode<synchronous>, transform_indices = @transform_2, window_bounds = array<i64: 8, 33, 8>}, {pipeline_mode = #tpu.pipeline_mode<synchronous>, transform_indices = @transform_3, window_bounds = array<i64: 8, 33, 8>}, {pipeline_mode = #tpu.pipeline_mode<synchronous>, transform_indices = @transform_4, window_bounds = array<i64: 8, 8, 32>}, {pipeline_mode = #tpu.pipeline_mode<synchronous>, transform_indices = @transform_5, window_bounds = array<i64: 1, 32>}, {transform_indices = @transform_6, window_bounds = array<i64: 2, 16, 32>}]} {
    %c0 = arith.constant 0 : index
    %c0_0 = arith.constant 0 : index
    %c0_1 = arith.constant 0 : index
    %0 = vector.load %arg1[%c0, %c0_0, %c0_1] : memref<2x16x33xf32, #tpu.memory_space<vmem>>, vector<2x16x33xf32>
    %1 = arith.truncf %0 : vector<2x16x33xf32> to vector<2x16x33xbf16>
    %2 = vector.shape_cast %1 : vector<2x16x33xbf16> to vector<2x1x16x33xbf16>
    %3 = vector.shape_cast %2 : vector<2x1x16x33xbf16> to vector<2x1x16x33xbf16>
    %4 = vector.broadcast %3 : vector<2x1x16x33xbf16> to vector<2x8x16x33xbf16>
    %5 = vector.shape_cast %4 : vector<2x8x16x33xbf16> to vector<16x16x33xbf16>
    %c0_2 = arith.constant 0 : index
    %c0_3 = arith.constant 0 : index
    %c0_4 = arith.constant 0 : index
    %6 = vector.load %arg2[%c0_2, %c0_3, %c0_4] : memref<8x33x8xbf16, #tpu.memory_space<vmem>>, vector<8x33x8xbf16>
    %7 = vector.shape_cast %6 : vector<8x33x8xbf16> to vector<1x8x33x8xbf16>
    %8 = vector.shape_cast %7 : vector<1x8x33x8xbf16> to vector<1x8x33x8xbf16>
    %9 = vector.broadcast %8 : vector<1x8x33x8xbf16> to vector<2x8x33x8xbf16>
    %10 = vector.shape_cast %9 : vector<2x8x33x8xbf16> to vector<16x33x8xbf16>
    %c0_5 = arith.constant 0 : index
    %c0_6 = arith.constant 0 : index
    %c0_7 = arith.constant 0 : index
    %11 = vector.load %arg3[%c0_5, %c0_6, %c0_7] : memref<8x33x8xbf16, #tpu.memory_space<vmem>>, vector<8x33x8xbf16>
    %12 = vector.shape_cast %11 : vector<8x33x8xbf16> to vector<1x8x33x8xbf16>
    %13 = vector.shape_cast %12 : vector<1x8x33x8xbf16> to vector<1x8x33x8xbf16>
    %14 = vector.broadcast %13 : vector<1x8x33x8xbf16> to vector<2x8x33x8xbf16>
    %15 = vector.shape_cast %14 : vector<2x8x33x8xbf16> to vector<16x33x8xbf16>
    %c0_8 = arith.constant 0 : index
    %c0_9 = arith.constant 0 : index
    %c0_10 = arith.constant 0 : index
    %16 = vector.load %arg4[%c0_8, %c0_9, %c0_10] : memref<8x33x8xbf16, #tpu.memory_space<vmem>>, vector<8x33x8xbf16>
    %17 = vector.shape_cast %16 : vector<8x33x8xbf16> to vector<1x8x33x8xbf16>
    %18 = vector.shape_cast %17 : vector<1x8x33x8xbf16> to vector<1x8x33x8xbf16>
    %19 = vector.broadcast %18 : vector<1x8x33x8xbf16> to vector<2x8x33x8xbf16>
    %20 = vector.shape_cast %19 : vector<2x8x33x8xbf16> to vector<16x33x8xbf16>
    %c0_11 = arith.constant 0 : index
    %c0_12 = arith.constant 0 : index
    %c0_13 = arith.constant 0 : index
    %21 = vector.load %arg5[%c0_11, %c0_12, %c0_13] : memref<8x8x32xbf16, #tpu.memory_space<vmem>>, vector<8x8x32xbf16>
    %22 = vector.shape_cast %21 : vector<8x8x32xbf16> to vector<1x8x8x32xbf16>
    %23 = vector.shape_cast %22 : vector<1x8x8x32xbf16> to vector<1x8x8x32xbf16>
    %24 = vector.broadcast %23 : vector<1x8x8x32xbf16> to vector<2x8x8x32xbf16>
    %25 = vector.shape_cast %24 : vector<2x8x8x32xbf16> to vector<16x8x32xbf16>
    %cst = arith.constant dense<0.000000e+00> : vector<16x16x8xf32>
    %26 = tpu.matmul %5, %10, %cst {dimension_numbers = #tpu.dot_dimension_numbers<[2], [1], [1], [2], [0, 0, 0, 1, 1, 2], [0], [0]>} : vector<16x16x33xbf16>, vector<16x33x8xbf16>, vector<16x16x8xf32> -> vector<16x16x8xf32>
    %cst_14 = arith.constant dense<0.000000e+00> : vector<16x16x8xf32>
    %27 = tpu.matmul %5, %15, %cst_14 {dimension_numbers = #tpu.dot_dimension_numbers<[2], [1], [1], [2], [0, 0, 0, 1, 1, 2], [0], [0]>} : vector<16x16x33xbf16>, vector<16x33x8xbf16>, vector<16x16x8xf32> -> vector<16x16x8xf32>
    %cst_15 = arith.constant dense<0.000000e+00> : vector<16x16x8xf32>
    %28 = tpu.matmul %5, %20, %cst_15 {dimension_numbers = #tpu.dot_dimension_numbers<[2], [1], [1], [2], [0, 0, 0, 1, 1, 2], [0], [0]>} : vector<16x16x33xbf16>, vector<16x33x8xbf16>, vector<16x16x8xf32> -> vector<16x16x8xf32>
    %29 = arith.truncf %26 : vector<16x16x8xf32> to vector<16x16x8xbf16>
    %30 = arith.truncf %27 : vector<16x16x8xf32> to vector<16x16x8xbf16>
    %cst_16 = arith.constant dense<0.000000e+00> : vector<16x16x16xf32>
    %31 = tpu.matmul %29, %30, %cst_16 {dimension_numbers = #tpu.dot_dimension_numbers<[2], [2], [1], [1], [0, 0, 0, 1, 1, 1], [0], [0]>} : vector<16x16x8xbf16>, vector<16x16x8xbf16>, vector<16x16x16xf32> -> vector<16x16x16xf32>
    %cst_17 = arith.constant dense<0xFF800000> : vector<16x16xf32>
    %32 = vector.multi_reduction <maximumf>, %31, %cst_17 [2] : vector<16x16x16xf32> to vector<16x16xf32>
    %33 = vector.shape_cast %32 : vector<16x16xf32> to vector<16x16x1xf32>
    %34 = vector.broadcast %33 : vector<16x16x1xf32> to vector<16x16x16xf32>
    %35 = arith.subf %31, %34 : vector<16x16x16xf32>
    %36 = math.exp %35 : vector<16x16x16xf32>
    %cst_18 = arith.constant dense<0.000000e+00> : vector<16x16xf32>
    %37 = vector.multi_reduction <add>, %36, %cst_18 [2] : vector<16x16x16xf32> to vector<16x16xf32>
    %38 = vector.shape_cast %37 : vector<16x16xf32> to vector<16x16x1xf32>
    %39 = arith.truncf %36 : vector<16x16x16xf32> to vector<16x16x16xbf16>
    %40 = arith.truncf %28 : vector<16x16x8xf32> to vector<16x16x8xbf16>
    %cst_19 = arith.constant dense<0.000000e+00> : vector<16x16x8xf32>
    %41 = tpu.matmul %39, %40, %cst_19 {dimension_numbers = #tpu.dot_dimension_numbers<[2], [1], [1], [2], [0, 0, 0, 1, 1, 2], [0], [0]>} : vector<16x16x16xbf16>, vector<16x16x8xbf16>, vector<16x16x8xf32> -> vector<16x16x8xf32>
    %42 = tpu.reciprocal %38 {approx = true} : vector<16x16x1xf32> -> vector<16x16x1xf32>
    %43 = vector.broadcast %42 : vector<16x16x1xf32> to vector<16x16x8xf32>
    %44 = arith.mulf %41, %43 : vector<16x16x8xf32>
    %45 = arith.truncf %44 : vector<16x16x8xf32> to vector<16x16x8xbf16>
    %cst_20 = arith.constant dense<0.000000e+00> : vector<16x16x32xf32>
    %46 = tpu.matmul %45, %25, %cst_20 {dimension_numbers = #tpu.dot_dimension_numbers<[2], [1], [1], [2], [0, 0, 0, 1, 1, 2], [0], [0]>} : vector<16x16x8xbf16>, vector<16x8x32xbf16>, vector<16x16x32xf32> -> vector<16x16x32xf32>
    %47 = vector.shape_cast %46 : vector<16x16x32xf32> to vector<2x8x16x32xf32>
    %cst_21 = arith.constant dense<0.000000e+00> : vector<2x16x32xf32>
    %48 = vector.multi_reduction <add>, %47, %cst_21 [1] : vector<2x8x16x32xf32> to vector<2x16x32xf32>
    %c0_22 = arith.constant 0 : index
    %c0_23 = arith.constant 0 : index
    %49 = vector.load %arg6[%c0_22, %c0_23] : memref<1x32xf32, #tpu.memory_space<vmem>>, vector<1x32xf32>
    %50 = vector.shape_cast %49 : vector<1x32xf32> to vector<1x1x32xf32>
    %51 = vector.broadcast %50 : vector<1x1x32xf32> to vector<2x16x32xf32>
    %52 = arith.addf %48, %51 : vector<2x16x32xf32>
    %c0_24 = arith.constant 0 : index
    %c0_25 = arith.constant 0 : index
    %c0_26 = arith.constant 0 : index
    %53 = vector.load %arg7[%c0_24, %c0_25, %c0_26] : memref<2x16x32xf32, #tpu.memory_space<vmem>>, vector<2x16x32xf32>
    tpu.vector_store %arg7[%c0_24, %c0_25, %c0_26], %52 {strides = array<i32>} : memref<2x16x32xf32, #tpu.memory_space<vmem>>, vector<2x16x32xf32>,
    return
  }
  func.func @transform_0(%arg0: i32) -> (i32, i32, i32) {
    %c0_i32 = arith.constant 0 : i32
    %c0_i32_0 = arith.constant 0 : i32
    %c0_i32_1 = arith.constant 0 : i32
    return %arg0, %c0_i32, %c0_i32_0 : i32, i32, i32
  }
  func.func @transform_1(%arg0: i32) -> (i32, i32, i32) {
    %c0_i32 = arith.constant 0 : i32
    %c0_i32_0 = arith.constant 0 : i32
    %c0_i32_1 = arith.constant 0 : i32
    %c0_i32_2 = arith.constant 0 : i32
    return %c0_i32, %c0_i32_0, %c0_i32_1 : i32, i32, i32
  }
  func.func @transform_2(%arg0: i32) -> (i32, i32, i32) {
    %c0_i32 = arith.constant 0 : i32
    %c0_i32_0 = arith.constant 0 : i32
    %c0_i32_1 = arith.constant 0 : i32
    %c0_i32_2 = arith.constant 0 : i32
    return %c0_i32, %c0_i32_0, %c0_i32_1 : i32, i32, i32
  }
  func.func @transform_3(%arg0: i32) -> (i32, i32, i32) {
    %c0_i32 = arith.constant 0 : i32
    %c0_i32_0 = arith.constant 0 : i32
    %c0_i32_1 = arith.constant 0 : i32
    %c0_i32_2 = arith.constant 0 : i32
    return %c0_i32, %c0_i32_0, %c0_i32_1 : i32, i32, i32
  }
  func.func @transform_4(%arg0: i32) -> (i32, i32, i32) {
    %c0_i32 = arith.constant 0 : i32
    %c0_i32_0 = arith.constant 0 : i32
    %c0_i32_1 = arith.constant 0 : i32
    %c0_i32_2 = arith.constant 0 : i32
    return %c0_i32, %c0_i32_0, %c0_i32_1 : i32, i32, i32
  }
  func.func @transform_5(%arg0: i32) -> (i32, i32) {
    %c0_i32 = arith.constant 0 : i32
    %c0_i32_0 = arith.constant 0 : i32
    %c0_i32_1 = arith.constant 0 : i32
    return %c0_i32, %c0_i32_0 : i32, i32
  }
  func.func @transform_6(%arg0: i32) -> (i32, i32, i32) {
    %c0_i32 = arith.constant 0 : i32
    %c0_i32_0 = arith.constant 0 : i32
    %c0_i32_1 = arith.constant 0 : i32
    return %arg0, %c0_i32, %c0_i32_0 : i32, i32, i32
  }
}

</mosaic_0001>

<llo_original>
// kernel: tpu_custom_call.1
$region0: #{tpu_custom_call.1}
  #allocation0 [shape = 'u32[]', space=smem, size = 0x4, offset = 0x4, fixed_abs, tag = 'smem constant byte address 0x4 - core index']
  #allocation1 [shape = 'u32[144,128]{1,0:T(1,128)}', space=vmem, size = 0x12000, scoped, tag = 'internal scratch']
  %s0 = inlined_call_operand.vmem [shape: f32[4,16,33], index: 0, kind: input, shape index: {}]
  %s1 = inlined_call_operand.vmem [shape: bf16[8,33,8], index: 1, kind: input, shape index: {}]
  %s2 = inlined_call_operand.vmem [shape: bf16[8,33,8], index: 2, kind: input, shape index: {}]
  %s3 = inlined_call_operand.vmem [shape: bf16[8,33,8], index: 3, kind: input, shape index: {}]
  %s4 = inlined_call_operand.vmem [shape: bf16[8,8,32], index: 4, kind: input, shape index: {}]
  %s5 = inlined_call_operand.vmem [shape: f32[1,32], index: 5, kind: input, shape index: {}]
  %s6 = inlined_call_operand.hbm [shape: f32[4,16,32], index: 6, kind: output, shape index: {}]
  %s7 = sld [smem:[#allocation0]]
  $region57: #{tpu_custom_call.1} parent=0
    _
  %s9 = ssub.s32 1, %s7
  %s10 = scalar_select 0, %s9, %s7
  $region1: #{tpu_custom_call.1} parent=0
    #allocation2 [shape = 'u8[32768]{0}', space=vmem, size = 0x8000, scoped, tag = 'output window, operand 0']
    #allocation3 [shape = 's32[2]{0}', space=sflag, size = 0x8, scoped, tag = 'scoped memory for tpu_custom_call.1']
    %11 = vsyncpa [#allocation3], 0
    %s12 = scalar_lea.sflag [#allocation3], 1
    %13 = vsyncpa %s12, 0
    loop: start=0, step=1, limit=4
    $region2: #{tpu_custom_call.1} parent=1 // loop_pre_header
      _
    $region3: #{tpu_custom_call.1} parent=1 // loop_header
      %s15 = sphi 0, %s19
      %p16 = scmp.ge.s32.totalorder %s15, 4
      %s25 = sphi 0, %s27
      %s28 = sphi 0, %s25
      %s29 = sphi 0, %s28
      %s45 = sphi 0, %s29
      %s49 = sphi 0, %s49
      %s51 = sphi 0, %s49
      %s52 = sphi 0, %s51
      %s66 = sphi 0, %s52
      %s70 = sphi 0, %s70
      %s72 = sphi 0, %s70
      %s73 = sphi 0, %s72
      %s87 = sphi 0, %s73
      %s91 = sphi 0, %s91
      %s93 = sphi 0, %s91
      %s94 = sphi 0, %s93
      %s108 = sphi 0, %s94
      %s112 = sphi 0, %s112
      %s114 = sphi 0, %s112
      %s115 = sphi 0, %s114
      %s129 = sphi 0, %s115
      %s133 = sphi 0, %s133
      %s135 = sphi 0, %s133
      %s136 = sphi 0, %s135
      %s150 = sphi 0, %s136
      %s156 = sphi 0, %s158
      %s159 = sphi 0, %s156
      %s160 = sphi 0, %s159
      %s176 = sphi 0, %s160
    $region4: #{tpu_custom_call.1} parent=1 // loop_header_branch
      %18 = sbr.rel (%p16) target = $region8
    $region5: #{tpu_custom_call.1} parent=1 // loop_body
      %s20 = ssub.s32 %s15, 1
      %s21 = ssub.s32 %s15, 2
      %s22 = sadd.s32 %s15, 1
      %s23 = ssub.s32 %s15, %s22
      %p24 = scmp.eq.s32.totalorder %s23, 0
      %s26 = sadd.s32 %s25, 1
      %s27 = scalar_select %p24, %s25, %s26
      %p30 = pneg %p24
      %p31 = scmp.eq.s32.totalorder %s15, 1
      %p32 = por %p30, %p31
      %p33 = scmp.ne.s32.totalorder %s25, %s28
      %p34 = scmp.eq.s32.totalorder %s15, 0
      %p35 = por %p33, %p34
      %p36 = scmp.ne.s32.totalorder %s25, %s28
      %p37 = scmp.eq.s32.totalorder %s20, 1
      %p38 = por %p36, %p37
      %p39 = scmp.ne.s32.totalorder %s28, %s29
      %p40 = scmp.eq.s32.totalorder %s20, 0
      %p41 = por %p39, %p40
      %p42 = scmp.ne.s32.totalorder %s28, %s29
      %p43 = scmp.eq.s32.totalorder %s21, 1
      %p44 = por %p42, %p43
      %p46 = scmp.ne.s32.totalorder %s29, %s45
      %p47 = scmp.eq.s32.totalorder %s21, 0
      %p48 = por %p46, %p47
      %s50 = sadd.s32 %s49, 1
      %p53 = scmp.eq.s32.totalorder %s15, 1
      %p54 = scmp.ne.s32.totalorder %s49, %s51
      %p55 = scmp.eq.s32.totalorder %s15, 0
      %p56 = por %p54, %p55
      %p57 = scmp.ne.s32.totalorder %s49, %s51
      %p58 = scmp.eq.s32.totalorder %s20, 1
      %p59 = por %p57, %p58
      %p60 = scmp.ne.s32.totalorder %s51, %s52
      %p61 = scmp.eq.s32.totalorder %s20, 0
      %p62 = por %p60, %p61
      %p63 = scmp.ne.s32.totalorder %s51, %s52
      %p64 = scmp.eq.s32.totalorder %s21, 1
      %p65 = por %p63, %p64
      %p67 = scmp.ne.s32.totalorder %s52, %s66
      %p68 = scmp.eq.s32.totalorder %s21, 0
      %p69 = por %p67, %p68
      %s71 = sadd.s32 %s70, 1
      %p74 = scmp.eq.s32.totalorder %s15, 1
      %p75 = scmp.ne.s32.totalorder %s70, %s72
      %p76 = scmp.eq.s32.totalorder %s15, 0
      %p77 = por %p75, %p76
      %p78 = scmp.ne.s32.totalorder %s70, %s72
      %p79 = scmp.eq.s32.totalorder %s20, 1
      %p80 = por %p78, %p79
      %p81 = scmp.ne.s32.totalorder %s72, %s73
      %p82 = scmp.eq.s32.totalorder %s20, 0
      %p83 = por %p81, %p82
      %p84 = scmp.ne.s32.totalorder %s72, %s73
      %p85 = scmp.eq.s32.totalorder %s21, 1
      %p86 = por %p84, %p85
      %p88 = scmp.ne.s32.totalorder %s73, %s87
      %p89 = scmp.eq.s32.totalorder %s21, 0
      %p90 = por %p88, %p89
      %s92 = sadd.s32 %s91, 1
      %p95 = scmp.eq.s32.totalorder %s15, 1
      %p96 = scmp.ne.s32.totalorder %s91, %s93
      %p97 = scmp.eq.s32.totalorder %s15, 0
      %p98 = por %p96, %p97
      %p99 = scmp.ne.s32.totalorder %s91, %s93
      %p100 = scmp.eq.s32.totalorder %s20, 1
      %p101 = por %p99, %p100
      %p102 = scmp.ne.s32.totalorder %s93, %s94
      %p103 = scmp.eq.s32.totalorder %s20, 0
      %p104 = por %p102, %p103
      %p105 = scmp.ne.s32.totalorder %s93, %s94
      %p106 = scmp.eq.s32.totalorder %s21, 1
      %p107 = por %p105, %p106
      %p109 = scmp.ne.s32.totalorder %s94, %s108
      %p110 = scmp.eq.s32.totalorder %s21, 0
      %p111 = por %p109, %p110
      %s113 = sadd.s32 %s112, 1
      %p116 = scmp.eq.s32.totalorder %s15, 1
      %p117 = scmp.ne.s32.totalorder %s112, %s114
      %p118 = scmp.eq.s32.totalorder %s15, 0
      %p119 = por %p117, %p118
      %p120 = scmp.ne.s32.totalorder %s112, %s114
      %p121 = scmp.eq.s32.totalorder %s20, 1
      %p122 = por %p120, %p121
      %p123 = scmp.ne.s32.totalorder %s114, %s115
      %p124 = scmp.eq.s32.totalorder %s20, 0
      %p125 = por %p123, %p124
      %p126 = scmp.ne.s32.totalorder %s114, %s115
      %p127 = scmp.eq.s32.totalorder %s21, 1
      %p128 = por %p126, %p127
      %p130 = scmp.ne.s32.totalorder %s115, %s129
      %p131 = scmp.eq.s32.totalorder %s21, 0
      %p132 = por %p130, %p131
      %s134 = sadd.s32 %s133, 1
      %p137 = scmp.eq.s32.totalorder %s15, 1
      %p138 = scmp.ne.s32.totalorder %s133, %s135
      %p139 = scmp.eq.s32.totalorder %s15, 0
      %p140 = por %p138, %p139
      %p141 = scmp.ne.s32.totalorder %s133, %s135
      %p142 = scmp.eq.s32.totalorder %s20, 1
      %p143 = por %p141, %p142
      %p144 = scmp.ne.s32.totalorder %s135, %s136
      %p145 = scmp.eq.s32.totalorder %s20, 0
      %p146 = por %p144, %p145
      %p147 = scmp.ne.s32.totalorder %s135, %s136
      %p148 = scmp.eq.s32.totalorder %s21, 1
      %p149 = por %p147, %p148
      %p151 = scmp.ne.s32.totalorder %s136, %s150
      %p152 = scmp.eq.s32.totalorder %s21, 0
      %p153 = por %p151, %p152
      %s154 = ssub.s32 %s15, %s22
      %p155 = scmp.eq.s32.totalorder %s154, 0
      %s157 = sadd.s32 %s156, 1
      %s158 = scalar_select %p155, %s156, %s157
      %p161 = pneg %p155
      %p162 = scmp.eq.s32.totalorder %s15, 1
      %p163 = por %p161, %p162
      %p164 = scmp.ne.s32.totalorder %s156, %s159
      %p165 = scmp.eq.s32.totalorder %s15, 0
      %p166 = por %p164, %p165
      %p167 = scmp.ne.s32.totalorder %s156, %s159
      %p168 = scmp.eq.s32.totalorder %s20, 1
      %p169 = por %p167, %p168
      %p170 = scmp.ne.s32.totalorder %s159, %s160
      %p171 = scmp.eq.s32.totalorder %s20, 0
      %p172 = por %p170, %p171
      %p173 = scmp.ne.s32.totalorder %s159, %s160
      %p174 = scmp.eq.s32.totalorder %s21, 1
      %p175 = por %p173, %p174
      %p177 = scmp.ne.s32.totalorder %s160, %s176
      %p178 = scmp.eq.s32.totalorder %s21, 0
      %p179 = por %p177, %p178
      %p180 = scmp.le.s32.totalorder 1, %s15
      %p181 = scmp.lt.s32.totalorder %s15, 3
      %p182 = pnand %p180, %p181
      %p183 = pneg %p182
      // Predicated region
      $region9: #{tpu_custom_call.1} parent=5 // pred_check
        _
      $region10: #{tpu_custom_call.1} parent=5 // pred_check_branch
        %185 = sbr.rel (%p182) target = $region12
      $region11: #{tpu_custom_call.1} parent=5 // pred_region
        %s186 = ssub.s32 %s15, 1
        // Predicated region
        $region13: #{tpu_custom_call.1} parent=11 // pred_check
          %p187 = pneg %p62
        $region14: #{tpu_custom_call.1} parent=11 // pred_check_branch
          %189 = sbr.rel (%p187) target = $region16
        $region15: #{tpu_custom_call.1} parent=11 // pred_region
          _
        $region16: #{tpu_custom_call.1} parent=11 // pred_fallthru
          _
        // Predicated region
        $region17: #{tpu_custom_call.1} parent=11 // pred_check
          %p190 = pneg %p83
        $region18: #{tpu_custom_call.1} parent=11 // pred_check_branch
          %192 = sbr.rel (%p190) target = $region20
        $region19: #{tpu_custom_call.1} parent=11 // pred_region
          _
        $region20: #{tpu_custom_call.1} parent=11 // pred_fallthru
          _
        // Predicated region
        $region21: #{tpu_custom_call.1} parent=11 // pred_check
          %p193 = pneg %p104
        $region22: #{tpu_custom_call.1} parent=11 // pred_check_branch
          %195 = sbr.rel (%p193) target = $region24
        $region23: #{tpu_custom_call.1} parent=11 // pred_region
          _
        $region24: #{tpu_custom_call.1} parent=11 // pred_fallthru
          _
        // Predicated region
        $region25: #{tpu_custom_call.1} parent=11 // pred_check
          %p196 = pneg %p125
        $region26: #{tpu_custom_call.1} parent=11 // pred_check_branch
          %198 = sbr.rel (%p196) target = $region28
        $region27: #{tpu_custom_call.1} parent=11 // pred_region
          _
        $region28: #{tpu_custom_call.1} parent=11 // pred_fallthru
          _
        // Predicated region
        $region29: #{tpu_custom_call.1} parent=11 // pred_check
          %p199 = pneg %p146
        $region30: #{tpu_custom_call.1} parent=11 // pred_check_branch
          %201 = sbr.rel (%p199) target = $region32
        $region31: #{tpu_custom_call.1} parent=11 // pred_region
          _
        $region32: #{tpu_custom_call.1} parent=11 // pred_fallthru
          _
      $region12: #{tpu_custom_call.1} parent=5 // pred_fallthru
        _
      %p202 = scmp.lt.s32.totalorder %s15, 2
      // Predicated region
      $region33: #{tpu_custom_call.1} parent=5 // pred_check
        %p203 = pneg %p202
      $region34: #{tpu_custom_call.1} parent=5 // pred_check_branch
        %205 = sbr.rel (%p203) target = $region36
      $region35: #{tpu_custom_call.1} parent=5 // pred_region
        // Predicated region
        $region37: #{tpu_custom_call.1} parent=35 // pred_check
          %p206 = pneg %p35
        $region38: #{tpu_custom_call.1} parent=35 // pred_check_branch
          %208 = sbr.rel (%p206) target = $region40
        $region39: #{tpu_custom_call.1} parent=35 // pred_region
          %s209 = smul.u32 2, %s15
          %p210 = scmp.lt.s32.totalorder %s209, 3
          %s211 = scalar_select %p210, %s209, 3
          %s212 = smul.addr %s211, 2
          %s213 = smul.addr %s212, 8
          %s214 = scalar_lea.vmem %s0, %s213
          %s215 = smul.u32 2, %s15
        $region40: #{tpu_custom_call.1} parent=35 // pred_fallthru
          _
      $region36: #{tpu_custom_call.1} parent=5 // pred_fallthru
        _
      %p216 = scmp.le.s32.totalorder 1, %s15
      %p217 = scmp.lt.s32.totalorder %s15, 3
      %p218 = pnand %p216, %p217
      %p219 = pneg %p218
      // Predicated region
      $region41: #{tpu_custom_call.1} parent=5 // pred_check
        _
      $region42: #{tpu_custom_call.1} parent=5 // pred_check_branch
        %221 = sbr.rel (%p218) target = $region44
      $region43: #{tpu_custom_call.1} parent=5 // pred_region
        %s222 = ssub.s32 %s15, 1
        %s223 = smul.u32 2, %s20
        %p224 = scmp.lt.s32.totalorder %s223, 3
        %s225 = scalar_select %p224, %s223, 3
        %s226 = smul.addr %s225, 2
        %s227 = smul.addr %s226, 8
        %s228 = scalar_lea.vmem %s0, %s227
        %p229 = pneg %p41
        %p230 = pneg %p38
        %p231 = pneg %p62
        %p232 = pneg %p59
        %p233 = pneg %p83
        %p234 = pneg %p80
        %p235 = pneg %p104
        %p236 = pneg %p101
        %p237 = pneg %p125
        %p238 = pneg %p122
        %p239 = pneg %p146
        %p240 = pneg %p143
        %p241 = pneg %p172
        %p242 = pneg %p169
        %s243 = sand.u32 %s159, 1
        %s244 = scalar_lea.sflag [#allocation3], %s243
        %s245 = sand.u32 %s159, 1
        %s246 = smul.addr %s245, 32
        %s247 = scalar_lea.vmem [#allocation2], %s246
        %s248 = smul.u32 2, %s20
        %p249 = scmp.lt.s32.totalorder %s248, 3
        %s250 = scalar_select %p249, %s248, 3
        %s251 = smul.addr %s250, 2
        %s252 = smul.addr %s251, 8
        %s253 = scalar_lea.vmem %s0, %s252
        %s254 = smul.u32 2, %s20
        %s255 = smul.u32 2, %s20
        %v257 = vld [vmem:[%s253] sm:$0xff]
        %v258 = vld [vmem:[%s253 + $0x8] sm:$0xff]
        %v259 = vld [vmem:[%s253 + $0x10] sm:$0xff]
        %v260 = vld [vmem:[%s253 + $0x18] sm:$0xff]
        %v261 = vpack.c.bf16 %v258, %v257
        %v262 = vpack.c.bf16 %v260, %v259
        %v263 = vld [vmem:[%s1] sm:$0xf]
        %v264 = vld [vmem:[%s1 + $0x4] sm:$0xf]
        %v265 = vld [vmem:[%s1 + $0x8] sm:$0xf]
        %v266 = vld [vmem:[%s1 + $0xc] sm:$0xf]
        %v267 = vld [vmem:[%s1 + $0x10] sm:$0x1]
        %v268 = vld [vmem:[%s1 + $0x14] sm:$0xf]
        %v269 = vld [vmem:[%s1 + $0x18] sm:$0xf]
        %v270 = vld [vmem:[%s1 + $0x1c] sm:$0xf]
        %v271 = vld [vmem:[%s1 + $0x20] sm:$0xf]
        %v272 = vld [vmem:[%s1 + $0x24] sm:$0x1]
        %v273 = vld [vmem:[%s1 + $0x28] sm:$0xf]
        %v274 = vld [vmem:[%s1 + $0x2c] sm:$0xf]
        %v275 = vld [vmem:[%s1 + $0x30] sm:$0xf]
        %v276 = vld [vmem:[%s1 + $0x34] sm:$0xf]
        %v277 = vld [vmem:[%s1 + $0x38] sm:$0x1]
        %v278 = vld [vmem:[%s1 + $0x3c] sm:$0xf]
        %v279 = vld [vmem:[%s1 + $0x40] sm:$0xf]
        %v280 = vld [vmem:[%s1 + $0x44] sm:$0xf]
        %v281 = vld [vmem:[%s1 + $0x48] sm:$0xf]
        %v282 = vld [vmem:[%s1 + $0x4c] sm:$0x1]
        %v283 = vld [vmem:[%s1 + $0x50] sm:$0xf]
        %v284 = vld [vmem:[%s1 + $0x54] sm:$0xf]
        %v285 = vld [vmem:[%s1 + $0x58] sm:$0xf]
        %v286 = vld [vmem:[%s1 + $0x5c] sm:$0xf]
        %v287 = vld [vmem:[%s1 + $0x60] sm:$0x1]
        %v288 = vld [vmem:[%s1 + $0x64] sm:$0xf]
        %v289 = vld [vmem:[%s1 + $0x68] sm:$0xf]
        %v290 = vld [vmem:[%s1 + $0x6c] sm:$0xf]
        %v291 = vld [vmem:[%s1 + $0x70] sm:$0xf]
        %v292 = vld [vmem:[%s1 + $0x74] sm:$0x1]
        %v293 = vld [vmem:[%s1 + $0x78] sm:$0xf]
        %v294 = vld [vmem:[%s1 + $0x7c] sm:$0xf]
        %v295 = vld [vmem:[%s1 + $0x80] sm:$0xf]
        %v296 = vld [vmem:[%s1 + $0x84] sm:$0xf]
        %v297 = vld [vmem:[%s1 + $0x88] sm:$0x1]
        %v298 = vld [vmem:[%s1 + $0x8c] sm:$0xf]
        %v299 = vld [vmem:[%s1 + $0x90] sm:$0xf]
        %v300 = vld [vmem:[%s1 + $0x94] sm:$0xf]
        %v301 = vld [vmem:[%s1 + $0x98] sm:$0xf]
        %v302 = vld [vmem:[%s1 + $0x9c] sm:$0x1]
        %v303 = vld [vmem:[%s2] sm:$0xf]
        %v304 = vld [vmem:[%s2 + $0x4] sm:$0xf]
        %v305 = vld [vmem:[%s2 + $0x8] sm:$0xf]
        %v306 = vld [vmem:[%s2 + $0xc] sm:$0xf]
        %v307 = vld [vmem:[%s2 + $0x10] sm:$0x1]
        %v308 = vld [vmem:[%s2 + $0x14] sm:$0xf]
        %v309 = vld [vmem:[%s2 + $0x18] sm:$0xf]
        %v310 = vld [vmem:[%s2 + $0x1c] sm:$0xf]
        %v311 = vld [vmem:[%s2 + $0x20] sm:$0xf]
        %v312 = vld [vmem:[%s2 + $0x24] sm:$0x1]
        %v313 = vld [vmem:[%s2 + $0x28] sm:$0xf]
        %v314 = vld [vmem:[%s2 + $0x2c] sm:$0xf]
        %v315 = vld [vmem:[%s2 + $0x30] sm:$0xf]
        %v316 = vld [vmem:[%s2 + $0x34] sm:$0xf]
        %v317 = vld [vmem:[%s2 + $0x38] sm:$0x1]
        %v318 = vld [vmem:[%s2 + $0x3c] sm:$0xf]
        %v319 = vld [vmem:[%s2 + $0x40] sm:$0xf]
        %v320 = vld [vmem:[%s2 + $0x44] sm:$0xf]
        %v321 = vld [vmem:[%s2 + $0x48] sm:$0xf]
        %v322 = vld [vmem:[%s2 + $0x4c] sm:$0x1]
        %v323 = vld [vmem:[%s2 + $0x50] sm:$0xf]
        %v324 = vld [vmem:[%s2 + $0x54] sm:$0xf]
        %v325 = vld [vmem:[%s2 + $0x58] sm:$0xf]
        %v326 = vld [vmem:[%s2 + $0x5c] sm:$0xf]
        %v327 = vld [vmem:[%s2 + $0x60] sm:$0x1]
        %v328 = vld [vmem:[%s2 + $0x64] sm:$0xf]
        %v329 = vld [vmem:[%s2 + $0x68] sm:$0xf]
        %v330 = vld [vmem:[%s2 + $0x6c] sm:$0xf]
        %v331 = vld [vmem:[%s2 + $0x70] sm:$0xf]
        %v332 = vld [vmem:[%s2 + $0x74] sm:$0x1]
        %v333 = vld [vmem:[%s2 + $0x78] sm:$0xf]
        %v334 = vld [vmem:[%s2 + $0x7c] sm:$0xf]
        %v335 = vld [vmem:[%s2 + $0x80] sm:$0xf]
        %v336 = vld [vmem:[%s2 + $0x84] sm:$0xf]
        %v337 = vld [vmem:[%s2 + $0x88] sm:$0x1]
        %v338 = vld [vmem:[%s2 + $0x8c] sm:$0xf]
        %v339 = vld [vmem:[%s2 + $0x90] sm:$0xf]
        %v340 = vld [vmem:[%s2 + $0x94] sm:$0xf]
        %v341 = vld [vmem:[%s2 + $0x98] sm:$0xf]
        %v342 = vld [vmem:[%s2 + $0x9c] sm:$0x1]
        %v343 = vld [vmem:[%s3] sm:$0xf]
        %v344 = vld [vmem:[%s3 + $0x4] sm:$0xf]
        %v345 = vld [vmem:[%s3 + $0x8] sm:$0xf]
        %v346 = vld [vmem:[%s3 + $0xc] sm:$0xf]
        %v347 = vld [vmem:[%s3 + $0x10] sm:$0x1]
        %v348 = vld [vmem:[%s3 + $0x14] sm:$0xf]
        %v349 = vld [vmem:[%s3 + $0x18] sm:$0xf]
        %v350 = vld [vmem:[%s3 + $0x1c] sm:$0xf]
        %v351 = vld [vmem:[%s3 + $0x20] sm:$0xf]
        %v352 = vld [vmem:[%s3 + $0x24] sm:$0x1]
        %v353 = vld [vmem:[%s3 + $0x28] sm:$0xf]
        %v354 = vld [vmem:[%s3 + $0x2c] sm:$0xf]
        %v355 = vld [vmem:[%s3 + $0x30] sm:$0xf]
        %v356 = vld [vmem:[%s3 + $0x34] sm:$0xf]
        %v357 = vld [vmem:[%s3 + $0x38] sm:$0x1]
        %v358 = vld [vmem:[%s3 + $0x3c] sm:$0xf]
        %v359 = vld [vmem:[%s3 + $0x40] sm:$0xf]
        %v360 = vld [vmem:[%s3 + $0x44] sm:$0xf]
        %v361 = vld [vmem:[%s3 + $0x48] sm:$0xf]
        %v362 = vld [vmem:[%s3 + $0x4c] sm:$0x1]
        %v363 = vld [vmem:[%s3 + $0x50] sm:$0xf]
        %v364 = vld [vmem:[%s3 + $0x54] sm:$0xf]
        %v365 = vld [vmem:[%s3 + $0x58] sm:$0xf]
        %v366 = vld [vmem:[%s3 + $0x5c] sm:$0xf]
        %v367 = vld [vmem:[%s3 + $0x60] sm:$0x1]
        %v368 = vld [vmem:[%s3 + $0x64] sm:$0xf]
        %v369 = vld [vmem:[%s3 + $0x68] sm:$0xf]
        %v370 = vld [vmem:[%s3 + $0x6c] sm:$0xf]
        %v371 = vld [vmem:[%s3 + $0x70] sm:$0xf]
        %v372 = vld [vmem:[%s3 + $0x74] sm:$0x1]
        %v373 = vld [vmem:[%s3 + $0x78] sm:$0xf]
        %v374 = vld [vmem:[%s3 + $0x7c] sm:$0xf]
        %v375 = vld [vmem:[%s3 + $0x80] sm:$0xf]
        %v376 = vld [vmem:[%s3 + $0x84] sm:$0xf]
        %v377 = vld [vmem:[%s3 + $0x88] sm:$0x1]
        %v378 = vld [vmem:[%s3 + $0x8c] sm:$0xf]
        %v379 = vld [vmem:[%s3 + $0x90] sm:$0xf]
        %v380 = vld [vmem:[%s3 + $0x94] sm:$0xf]
        %v381 = vld [vmem:[%s3 + $0x98] sm:$0xf]
        %v382 = vld [vmem:[%s3 + $0x9c] sm:$0x1]
        %v383 = vld [vmem:[%s4] sm:$0xf]
        %v384 = vld [vmem:[%s4 + $0x4] sm:$0xf]
        %v385 = vld [vmem:[%s4 + $0x8] sm:$0xf]
        %v386 = vld [vmem:[%s4 + $0xc] sm:$0xf]
        %v387 = vld [vmem:[%s4 + $0x10] sm:$0xf]
        %v388 = vld [vmem:[%s4 + $0x14] sm:$0xf]
        %v389 = vld [vmem:[%s4 + $0x18] sm:$0xf]
        %v390 = vld [vmem:[%s4 + $0x1c] sm:$0xf]
        %v396 = vunpack.c.l.b16 %v263
        %v397 = vunpack.c.l.b16 %v264
        %v398 = vunpack.c.l.b16 %v265
        %v399 = vunpack.c.l.b16 %v266
        %v400 = vunpack.c.l.b16 %v267
        %v401 = vpack.c.b16 %v397, %v396
        %v402 = vpack.c.b16 %v399, %v398
        %v403 = vpack.c.b16 %v400, %v400
        %vm406 = vcmask 269312
        %v408 = vsel %vm406, %v261, 0
        %vm410 = vcmask 1040384
        %v411 = vsel 0, 4294967295, 65535
        %v412 = vsel %vm410, %v411, 0
        %v414 = vand.u32 %v403, %v412
        %416 = vmatprep.subr.bf16.mxu0 0
        %417 = vmatpush1.bf16.msra.mxu0 %v401
        %418 = vmatprep.subr.bf16.mxu0 0
        %419 = vmatpush1.bf16.msra.mxu0 %v402
        %420 = vmatprep.subr.bf16.mxu0 0
        %421 = vmatpush1.bf16.msra.mxu0 %v414
        %422 = vmatprep.subr.bf16.mxu0 0
        %423 = vmatpush1.bf16.msra.mxu0 0
        %424 = vmatprep.subr.bf16.mxu0 0
        %425 = vmatpush1.bf16.msra.mxu0 0
        %426 = vmatprep.subr.bf16.mxu0 0
        %427 = vmatpush1.bf16.msra.mxu0 0
        %428 = vmatprep.subr.bf16.mxu0 0
        %429 = vmatpush1.bf16.msra.mxu0 0
        %430 = vmatprep.subr.bf16.mxu0 0
        %431 = vmatpush1.bf16.msra.mxu0 0
        %432 = vmatprep.subr.bf16.mxu0 0
        %433 = vmatpush1.bf16.msra.mxu0 0
        %434 = vmatprep.subr.bf16.mxu0 0
        %435 = vmatpush1.bf16.msra.mxu0 0
        %436 = vmatprep.subr.bf16.mxu0 0
        %437 = vmatpush1.bf16.msra.mxu0 0
        %438 = vmatprep.subr.bf16.mxu0 0
        %439 = vmatpush1.bf16.msra.mxu0 0
        %440 = vmatprep.subr.bf16.mxu0 0
        %441 = vmatpush1.bf16.msra.mxu0 0
        %442 = vmatprep.subr.bf16.mxu0 0
        %443 = vmatpush1.bf16.msra.mxu0 0
        %444 = vmatprep.subr.bf16.mxu0 0
        %445 = vmatpush1.bf16.msra.mxu0 0
        %446 = vmatprep.subr.bf16.mxu0 0
        %447 = vmatpush1.bf16.msra.mxu0 0
        %448 = vmatprep.mubr.bf16.mxu0 0
        %449 = vmatmul.mubr.bf16.gmra.mrb[0].mxu0 %v408
        %v450 = vpop.f32.mrb[0].mxu0
        %v451 = vadd.f32 0.0, %v450
        %v452 = vpop.f32.mrb[0].mxu0
        %v453 = vpop.f32.mrb[0].mxu0
        %v454 = vadd.f32 0.0, %v453
        %v455 = vpop.f32.mrb[0].mxu0
        %456 = vdwg.mxu0
        %v462 = vunpack.c.l.b16 %v268
        %v463 = vunpack.c.l.b16 %v269
        %v464 = vunpack.c.l.b16 %v270
        %v465 = vunpack.c.l.b16 %v271
        %v466 = vunpack.c.l.b16 %v272
        %v467 = vpack.c.b16 %v463, %v462
        %v468 = vpack.c.b16 %v465, %v464
        %v469 = vpack.c.b16 %v466, %v466
        %v473 = vand.u32 %v469, %v412
        %475 = vmatprep.subr.bf16.mxu0 0
        %476 = vmatpush1.bf16.msra.mxu0 %v467
        %477 = vmatprep.subr.bf16.mxu0 0
        %478 = vmatpush1.bf16.msra.mxu0 %v468
        %479 = vmatprep.subr.bf16.mxu0 0
        %480 = vmatpush1.bf16.msra.mxu0 %v473
        %481 = vmatprep.subr.bf16.mxu0 0
        %482 = vmatpush1.bf16.msra.mxu0 0
        %483 = vmatprep.subr.bf16.mxu0 0
        %484 = vmatpush1.bf16.msra.mxu0 0
        %485 = vmatprep.subr.bf16.mxu0 0
        %486 = vmatpush1.bf16.msra.mxu0 0
        %487 = vmatprep.subr.bf16.mxu0 0
        %488 = vmatpush1.bf16.msra.mxu0 0
        %489 = vmatprep.subr.bf16.mxu0 0
        %490 = vmatpush1.bf16.msra.mxu0 0
        %491 = vmatprep.subr.bf16.mxu0 0
        %492 = vmatpush1.bf16.msra.mxu0 0
        %493 = vmatprep.subr.bf16.mxu0 0
        %494 = vmatpush1.bf16.msra.mxu0 0
        %495 = vmatprep.subr.bf16.mxu0 0
        %496 = vmatpush1.bf16.msra.mxu0 0
        %497 = vmatprep.subr.bf16.mxu0 0
        %498 = vmatpush1.bf16.msra.mxu0 0
        %499 = vmatprep.subr.bf16.mxu0 0
        %500 = vmatpush1.bf16.msra.mxu0 0
        %501 = vmatprep.subr.bf16.mxu0 0
        %502 = vmatpush1.bf16.msra.mxu0 0
        %503 = vmatprep.subr.bf16.mxu0 0
        %504 = vmatpush1.bf16.msra.mxu0 0
        %505 = vmatprep.subr.bf16.mxu0 0
        %506 = vmatpush1.bf16.msra.mxu0 0
        %507 = vmatprep.mubr.bf16.mxu0 0
        %508 = vmatmul.mubr.bf16.gmra.mrb[0].mxu0 %v408
        %v509 = vpop.f32.mrb[0].mxu0
        %v510 = vadd.f32 0.0, %v509
        %v511 = vpop.f32.mrb[0].mxu0
        %v512 = vpop.f32.mrb[0].mxu0
        %v513 = vadd.f32 0.0, %v512
        %v514 = vpop.f32.mrb[0].mxu0
        %515 = vdwg.mxu0
        %v521 = vunpack.c.l.b16 %v273
        %v522 = vunpack.c.l.b16 %v274
        %v523 = vunpack.c.l.b16 %v275
        %v524 = vunpack.c.l.b16 %v276
        %v525 = vunpack.c.l.b16 %v277
        %v526 = vpack.c.b16 %v522, %v521
        %v527 = vpack.c.b16 %v524, %v523
        %v528 = vpack.c.b16 %v525, %v525
        %v532 = vand.u32 %v528, %v412
        %534 = vmatprep.subr.bf16.mxu0 0
        %535 = vmatpush1.bf16.msra.mxu0 %v526
        %536 = vmatprep.subr.bf16.mxu0 0
        %537 = vmatpush1.bf16.msra.mxu0 %v527
        %538 = vmatprep.subr.bf16.mxu0 0
        %539 = vmatpush1.bf16.msra.mxu0 %v532
        %540 = vmatprep.subr.bf16.mxu0 0
        %541 = vmatpush1.bf16.msra.mxu0 0
        %542 = vmatprep.subr.bf16.mxu0 0
        %543 = vmatpush1.bf16.msra.mxu0 0
        %544 = vmatprep.subr.bf16.mxu0 0
        %545 = vmatpush1.bf16.msra.mxu0 0
        %546 = vmatprep.subr.bf16.mxu0 0
        %547 = vmatpush1.bf16.msra.mxu0 0
        %548 = vmatprep.subr.bf16.mxu0 0
        %549 = vmatpush1.bf16.msra.mxu0 0
        %550 = vmatprep.subr.bf16.mxu0 0
        %551 = vmatpush1.bf16.msra.mxu0 0
        %552 = vmatprep.subr.bf16.mxu0 0
        %553 = vmatpush1.bf16.msra.mxu0 0
        %554 = vmatprep.subr.bf16.mxu0 0
        %555 = vmatpush1.bf16.msra.mxu0 0
        %556 = vmatprep.subr.bf16.mxu0 0
        %557 = vmatpush1.bf16.msra.mxu0 0
        %558 = vmatprep.subr.bf16.mxu0 0
        %559 = vmatpush1.bf16.msra.mxu0 0
        %560 = vmatprep.subr.bf16.mxu0 0
        %561 = vmatpush1.bf16.msra.mxu0 0
        %562 = vmatprep.subr.bf16.mxu0 0
        %563 = vmatpush1.bf16.msra.mxu0 0
        %564 = vmatprep.subr.bf16.mxu0 0
        %565 = vmatpush1.bf16.msra.mxu0 0
        %566 = vmatprep.mubr.bf16.mxu0 0
        %567 = vmatmul.mubr.bf16.gmra.mrb[0].mxu0 %v408
        %v568 = vpop.f32.mrb[0].mxu0
        %v569 = vadd.f32 0.0, %v568
        %v570 = vpop.f32.mrb[0].mxu0
        %v571 = vpop.f32.mrb[0].mxu0
        %v572 = vadd.f32 0.0, %v571
        %v573 = vpop.f32.mrb[0].mxu0
        %574 = vdwg.mxu0
        %v580 = vunpack.c.l.b16 %v278
        %v581 = vunpack.c.l.b16 %v279
        %v582 = vunpack.c.l.b16 %v280
        %v583 = vunpack.c.l.b16 %v281
        %v584 = vunpack.c.l.b16 %v282
        %v585 = vpack.c.b16 %v581, %v580
        %v586 = vpack.c.b16 %v583, %v582
        %v587 = vpack.c.b16 %v584, %v584
        %v591 = vand.u32 %v587, %v412
        %593 = vmatprep.subr.bf16.mxu0 0
        %594 = vmatpush1.bf16.msra.mxu0 %v585
        %595 = vmatprep.subr.bf16.mxu0 0
        %596 = vmatpush1.bf16.msra.mxu0 %v586
        %597 = vmatprep.subr.bf16.mxu0 0
        %598 = vmatpush1.bf16.msra.mxu0 %v591
        %599 = vmatprep.subr.bf16.mxu0 0
        %600 = vmatpush1.bf16.msra.mxu0 0
        %601 = vmatprep.subr.bf16.mxu0 0
        %602 = vmatpush1.bf16.msra.mxu0 0
        %603 = vmatprep.subr.bf16.mxu0 0
        %604 = vmatpush1.bf16.msra.mxu0 0
        %605 = vmatprep.subr.bf16.mxu0 0
        %606 = vmatpush1.bf16.msra.mxu0 0
        %607 = vmatprep.subr.bf16.mxu0 0
        %608 = vmatpush1.bf16.msra.mxu0 0
        %609 = vmatprep.subr.bf16.mxu0 0
        %610 = vmatpush1.bf16.msra.mxu0 0
        %611 = vmatprep.subr.bf16.mxu0 0
        %612 = vmatpush1.bf16.msra.mxu0 0
        %613 = vmatprep.subr.bf16.mxu0 0
        %614 = vmatpush1.bf16.msra.mxu0 0
        %615 = vmatprep.subr.bf16.mxu0 0
        %616 = vmatpush1.bf16.msra.mxu0 0
        %617 = vmatprep.subr.bf16.mxu0 0
        %618 = vmatpush1.bf16.msra.mxu0 0
        %619 = vmatprep.subr.bf16.mxu0 0
        %620 = vmatpush1.bf16.msra.mxu0 0
        %621 = vmatprep.subr.bf16.mxu0 0
        %622 = vmatpush1.bf16.msra.mxu0 0
        %623 = vmatprep.subr.bf16.mxu0 0
        %624 = vmatpush1.bf16.msra.mxu0 0
        %625 = vmatprep.mubr.bf16.mxu0 0
        %626 = vmatmul.mubr.bf16.gmra.mrb[0].mxu0 %v408
        %v627 = vpop.f32.mrb[0].mxu0
        %v628 = vadd.f32 0.0, %v627
        %v629 = vpop.f32.mrb[0].mxu0
        %v630 = vpop.f32.mrb[0].mxu0
        %v631 = vadd.f32 0.0, %v630
        %v632 = vpop.f32.mrb[0].mxu0
        %633 = vdwg.mxu0
        %v639 = vunpack.c.l.b16 %v283
        %v640 = vunpack.c.l.b16 %v284
        %v641 = vunpack.c.l.b16 %v285
        %v642 = vunpack.c.l.b16 %v286
        %v643 = vunpack.c.l.b16 %v287
        %v644 = vpack.c.b16 %v640, %v639
        %v645 = vpack.c.b16 %v642, %v641
        %v646 = vpack.c.b16 %v643, %v643
        %v650 = vand.u32 %v646, %v412
        %652 = vmatprep.subr.bf16.mxu0 0
        %653 = vmatpush1.bf16.msra.mxu0 %v644
        %654 = vmatprep.subr.bf16.mxu0 0
        %655 = vmatpush1.bf16.msra.mxu0 %v645
        %656 = vmatprep.subr.bf16.mxu0 0
        %657 = vmatpush1.bf16.msra.mxu0 %v650
        %658 = vmatprep.subr.bf16.mxu0 0
        %659 = vmatpush1.bf16.msra.mxu0 0
        %660 = vmatprep.subr.bf16.mxu0 0
        %661 = vmatpush1.bf16.msra.mxu0 0
        %662 = vmatprep.subr.bf16.mxu0 0
        %663 = vmatpush1.bf16.msra.mxu0 0
        %664 = vmatprep.subr.bf16.mxu0 0
        %665 = vmatpush1.bf16.msra.mxu0 0
        %666 = vmatprep.subr.bf16.mxu0 0
        %667 = vmatpush1.bf16.msra.mxu0 0
        %668 = vmatprep.subr.bf16.mxu0 0
        %669 = vmatpush1.bf16.msra.mxu0 0
        %670 = vmatprep.subr.bf16.mxu0 0
        %671 = vmatpush1.bf16.msra.mxu0 0
        %672 = vmatprep.subr.bf16.mxu0 0
        %673 = vmatpush1.bf16.msra.mxu0 0
        %674 = vmatprep.subr.bf16.mxu0 0
        %675 = vmatpush1.bf16.msra.mxu0 0
        %676 = vmatprep.subr.bf16.mxu0 0
        %677 = vmatpush1.bf16.msra.mxu0 0
        %678 = vmatprep.subr.bf16.mxu0 0
        %679 = vmatpush1.bf16.msra.mxu0 0
        %680 = vmatprep.subr.bf16.mxu0 0
        %681 = vmatpush1.bf16.msra.mxu0 0
        %682 = vmatprep.subr.bf16.mxu0 0
        %683 = vmatpush1.bf16.msra.mxu0 0
        %684 = vmatprep.mubr.bf16.mxu0 0
        %685 = vmatmul.mubr.bf16.gmra.mrb[0].mxu0 %v408
        %v686 = vpop.f32.mrb[0].mxu0
        %v687 = vadd.f32 0.0, %v686
        %v688 = vpop.f32.mrb[0].mxu0
        %v689 = vpop.f32.mrb[0].mxu0
        %v690 = vadd.f32 0.0, %v689
        %v691 = vpop.f32.mrb[0].mxu0
        %692 = vdwg.mxu0
        %v698 = vunpack.c.l.b16 %v288
        %v699 = vunpack.c.l.b16 %v289
        %v700 = vunpack.c.l.b16 %v290
        %v701 = vunpack.c.l.b16 %v291
        %v702 = vunpack.c.l.b16 %v292
        %v703 = vpack.c.b16 %v699, %v698
        %v704 = vpack.c.b16 %v701, %v700
        %v705 = vpack.c.b16 %v702, %v702
        %v709 = vand.u32 %v705, %v412
        %711 = vmatprep.subr.bf16.mxu0 0
        %712 = vmatpush1.bf16.msra.mxu0 %v703
        %713 = vmatprep.subr.bf16.mxu0 0
        %714 = vmatpush1.bf16.msra.mxu0 %v704
        %715 = vmatprep.subr.bf16.mxu0 0
        %716 = vmatpush1.bf16.msra.mxu0 %v709
        %717 = vmatprep.subr.bf16.mxu0 0
        %718 = vmatpush1.bf16.msra.mxu0 0
        %719 = vmatprep.subr.bf16.mxu0 0
        %720 = vmatpush1.bf16.msra.mxu0 0
        %721 = vmatprep.subr.bf16.mxu0 0
        %722 = vmatpush1.bf16.msra.mxu0 0
        %723 = vmatprep.subr.bf16.mxu0 0
        %724 = vmatpush1.bf16.msra.mxu0 0
        %725 = vmatprep.subr.bf16.mxu0 0
        %726 = vmatpush1.bf16.msra.mxu0 0
        %727 = vmatprep.subr.bf16.mxu0 0
        %728 = vmatpush1.bf16.msra.mxu0 0
        %729 = vmatprep.subr.bf16.mxu0 0
        %730 = vmatpush1.bf16.msra.mxu0 0
        %731 = vmatprep.subr.bf16.mxu0 0
        %732 = vmatpush1.bf16.msra.mxu0 0
        %733 = vmatprep.subr.bf16.mxu0 0
        %734 = vmatpush1.bf16.msra.mxu0 0
        %735 = vmatprep.subr.bf16.mxu0 0
        %736 = vmatpush1.bf16.msra.mxu0 0
        %737 = vmatprep.subr.bf16.mxu0 0
        %738 = vmatpush1.bf16.msra.mxu0 0
        %739 = vmatprep.subr.bf16.mxu0 0
        %740 = vmatpush1.bf16.msra.mxu0 0
        %741 = vmatprep.subr.bf16.mxu0 0
        %742 = vmatpush1.bf16.msra.mxu0 0
        %743 = vmatprep.mubr.bf16.mxu0 0
        %744 = vmatmul.mubr.bf16.gmra.mrb[0].mxu0 %v408
        %v745 = vpop.f32.mrb[0].mxu0
        %v746 = vadd.f32 0.0, %v745
        %v747 = vpop.f32.mrb[0].mxu0
        %v748 = vpop.f32.mrb[0].mxu0
        %v749 = vadd.f32 0.0, %v748
        %v750 = vpop.f32.mrb[0].mxu0
        %751 = vdwg.mxu0
        %v757 = vunpack.c.l.b16 %v293
        %v758 = vunpack.c.l.b16 %v294
        %v759 = vunpack.c.l.b16 %v295
        %v760 = vunpack.c.l.b16 %v296
        %v761 = vunpack.c.l.b16 %v297
        %v762 = vpack.c.b16 %v758, %v757
        %v763 = vpack.c.b16 %v760, %v759
        %v764 = vpack.c.b16 %v761, %v761
        %v768 = vand.u32 %v764, %v412
        %770 = vmatprep.subr.bf16.mxu0 0
        %771 = vmatpush1.bf16.msra.mxu0 %v762
        %772 = vmatprep.subr.bf16.mxu0 0
        %773 = vmatpush1.bf16.msra.mxu0 %v763
        %774 = vmatprep.subr.bf16.mxu0 0
        %775 = vmatpush1.bf16.msra.mxu0 %v768
        %776 = vmatprep.subr.bf16.mxu0 0
        %777 = vmatpush1.bf16.msra.mxu0 0
        %778 = vmatprep.subr.bf16.mxu0 0
        %779 = vmatpush1.bf16.msra.mxu0 0
        %780 = vmatprep.subr.bf16.mxu0 0
        %781 = vmatpush1.bf16.msra.mxu0 0
        %782 = vmatprep.subr.bf16.mxu0 0
        %783 = vmatpush1.bf16.msra.mxu0 0
        %784 = vmatprep.subr.bf16.mxu0 0
        %785 = vmatpush1.bf16.msra.mxu0 0
        %786 = vmatprep.subr.bf16.mxu0 0
        %787 = vmatpush1.bf16.msra.mxu0 0
        %788 = vmatprep.subr.bf16.mxu0 0
        %789 = vmatpush1.bf16.msra.mxu0 0
        %790 = vmatprep.subr.bf16.mxu0 0
        %791 = vmatpush1.bf16.msra.mxu0 0
        %792 = vmatprep.subr.bf16.mxu0 0
        %793 = vmatpush1.bf16.msra.mxu0 0
        %794 = vmatprep.subr.bf16.mxu0 0
        %795 = vmatpush1.bf16.msra.mxu0 0
        %796 = vmatprep.subr.bf16.mxu0 0
        %797 = vmatpush1.bf16.msra.mxu0 0
        %798 = vmatprep.subr.bf16.mxu0 0
        %799 = vmatpush1.bf16.msra.mxu0 0
        %800 = vmatprep.subr.bf16.mxu0 0
        %801 = vmatpush1.bf16.msra.mxu0 0
        %802 = vmatprep.mubr.bf16.mxu0 0
        %803 = vmatmul.mubr.bf16.gmra.mrb[0].mxu0 %v408
        %v804 = vpop.f32.mrb[0].mxu0
        %v805 = vadd.f32 0.0, %v804
        %v806 = vpop.f32.mrb[0].mxu0
        %v807 = vpop.f32.mrb[0].mxu0
        %v808 = vadd.f32 0.0, %v807
        %v809 = vpop.f32.mrb[0].mxu0
        %810 = vdwg.mxu0
        %v816 = vunpack.c.l.b16 %v298
        %v817 = vunpack.c.l.b16 %v299
        %v818 = vunpack.c.l.b16 %v300
        %v819 = vunpack.c.l.b16 %v301
        %v820 = vunpack.c.l.b16 %v302
        %v821 = vpack.c.b16 %v817, %v816
        %v822 = vpack.c.b16 %v819, %v818
        %v823 = vpack.c.b16 %v820, %v820
        %v827 = vand.u32 %v823, %v412
        %829 = vmatprep.subr.bf16.mxu0 0
        %830 = vmatpush1.bf16.msra.mxu0 %v821
        %831 = vmatprep.subr.bf16.mxu0 0
        %832 = vmatpush1.bf16.msra.mxu0 %v822
        %833 = vmatprep.subr.bf16.mxu0 0
        %834 = vmatpush1.bf16.msra.mxu0 %v827
        %835 = vmatprep.subr.bf16.mxu0 0
        %836 = vmatpush1.bf16.msra.mxu0 0
        %837 = vmatprep.subr.bf16.mxu0 0
        %838 = vmatpush1.bf16.msra.mxu0 0
        %839 = vmatprep.subr.bf16.mxu0 0
        %840 = vmatpush1.bf16.msra.mxu0 0
        %841 = vmatprep.subr.bf16.mxu0 0
        %842 = vmatpush1.bf16.msra.mxu0 0
        %843 = vmatprep.subr.bf16.mxu0 0
        %844 = vmatpush1.bf16.msra.mxu0 0
        %845 = vmatprep.subr.bf16.mxu0 0
        %846 = vmatpush1.bf16.msra.mxu0 0
        %847 = vmatprep.subr.bf16.mxu0 0
        %848 = vmatpush1.bf16.msra.mxu0 0
        %849 = vmatprep.subr.bf16.mxu0 0
        %850 = vmatpush1.bf16.msra.mxu0 0
        %851 = vmatprep.subr.bf16.mxu0 0
        %852 = vmatpush1.bf16.msra.mxu0 0
        %853 = vmatprep.subr.bf16.mxu0 0
        %854 = vmatpush1.bf16.msra.mxu0 0
        %855 = vmatprep.subr.bf16.mxu0 0
        %856 = vmatpush1.bf16.msra.mxu0 0
        %857 = vmatprep.subr.bf16.mxu0 0
        %858 = vmatpush1.bf16.msra.mxu0 0
        %859 = vmatprep.subr.bf16.mxu0 0
        %860 = vmatpush1.bf16.msra.mxu0 0
        %861 = vmatprep.mubr.bf16.mxu0 0
        %862 = vmatmul.mubr.bf16.gmra.mrb[0].mxu0 %v408
        %v863 = vpop.f32.mrb[0].mxu0
        %v864 = vadd.f32 0.0, %v863
        %v865 = vpop.f32.mrb[0].mxu0
        %v866 = vpop.f32.mrb[0].mxu0
        %v867 = vadd.f32 0.0, %v866
        %v868 = vpop.f32.mrb[0].mxu0
        %869 = vdwg.mxu0
        %v871 = vsel %vm406, %v262, 0
        %873 = vmatprep.subr.bf16.mxu0 0
        %874 = vmatpush1.bf16.msra.mxu0 %v401
        %875 = vmatprep.subr.bf16.mxu0 0
        %876 = vmatpush1.bf16.msra.mxu0 %v402
        %877 = vmatprep.subr.bf16.mxu0 0
        %878 = vmatpush1.bf16.msra.mxu0 %v414
        %879 = vmatprep.subr.bf16.mxu0 0
        %880 = vmatpush1.bf16.msra.mxu0 0
        %881 = vmatprep.subr.bf16.mxu0 0
        %882 = vmatpush1.bf16.msra.mxu0 0
        %883 = vmatprep.subr.bf16.mxu0 0
        %884 = vmatpush1.bf16.msra.mxu0 0
        %885 = vmatprep.subr.bf16.mxu0 0
        %886 = vmatpush1.bf16.msra.mxu0 0
        %887 = vmatprep.subr.bf16.mxu0 0
        %888 = vmatpush1.bf16.msra.mxu0 0
        %889 = vmatprep.subr.bf16.mxu0 0
        %890 = vmatpush1.bf16.msra.mxu0 0
        %891 = vmatprep.subr.bf16.mxu0 0
        %892 = vmatpush1.bf16.msra.mxu0 0
        %893 = vmatprep.subr.bf16.mxu0 0
        %894 = vmatpush1.bf16.msra.mxu0 0
        %895 = vmatprep.subr.bf16.mxu0 0
        %896 = vmatpush1.bf16.msra.mxu0 0
        %897 = vmatprep.subr.bf16.mxu0 0
        %898 = vmatpush1.bf16.msra.mxu0 0
        %899 = vmatprep.subr.bf16.mxu0 0
        %900 = vmatpush1.bf16.msra.mxu0 0
        %901 = vmatprep.subr.bf16.mxu0 0
        %902 = vmatpush1.bf16.msra.mxu0 0
        %903 = vmatprep.subr.bf16.mxu0 0
        %904 = vmatpush1.bf16.msra.mxu0 0
        %905 = vmatprep.mubr.bf16.mxu0 0
        %906 = vmatmul.mubr.bf16.gmra.mrb[0].mxu0 %v871
        %v907 = vpop.f32.mrb[0].mxu0
        %v908 = vadd.f32 0.0, %v907
        %v909 = vpop.f32.mrb[0].mxu0
        %v910 = vpop.f32.mrb[0].mxu0
        %v911 = vadd.f32 0.0, %v910
        %v912 = vpop.f32.mrb[0].mxu0
        %913 = vdwg.mxu0
        %914 = vmatprep.subr.bf16.mxu0 0
        %915 = vmatpush1.bf16.msra.mxu0 %v467
        %916 = vmatprep.subr.bf16.mxu0 0
        %917 = vmatpush1.bf16.msra.mxu0 %v468
        %918 = vmatprep.subr.bf16.mxu0 0
        %919 = vmatpush1.bf16.msra.mxu0 %v473
        %920 = vmatprep.subr.bf16.mxu0 0
        %921 = vmatpush1.bf16.msra.mxu0 0
        %922 = vmatprep.subr.bf16.mxu0 0
        %923 = vmatpush1.bf16.msra.mxu0 0
        %924 = vmatprep.subr.bf16.mxu0 0
        %925 = vmatpush1.bf16.msra.mxu0 0
        %926 = vmatprep.subr.bf16.mxu0 0
        %927 = vmatpush1.bf16.msra.mxu0 0
        %928 = vmatprep.subr.bf16.mxu0 0
        %929 = vmatpush1.bf16.msra.mxu0 0
        %930 = vmatprep.subr.bf16.mxu0 0
        %931 = vmatpush1.bf16.msra.mxu0 0
        %932 = vmatprep.subr.bf16.mxu0 0
        %933 = vmatpush1.bf16.msra.mxu0 0
        %934 = vmatprep.subr.bf16.mxu0 0
        %935 = vmatpush1.bf16.msra.mxu0 0
        %936 = vmatprep.subr.bf16.mxu0 0
        %937 = vmatpush1.bf16.msra.mxu0 0
        %938 = vmatprep.subr.bf16.mxu0 0
        %939 = vmatpush1.bf16.msra.mxu0 0
        %940 = vmatprep.subr.bf16.mxu0 0
        %941 = vmatpush1.bf16.msra.mxu0 0
        %942 = vmatprep.subr.bf16.mxu0 0
        %943 = vmatpush1.bf16.msra.mxu0 0
        %944 = vmatprep.subr.bf16.mxu0 0
        %945 = vmatpush1.bf16.msra.mxu0 0
        %946 = vmatprep.mubr.bf16.mxu0 0
        %947 = vmatmul.mubr.bf16.gmra.mrb[0].mxu0 %v871
        %v948 = vpop.f32.mrb[0].mxu0
        %v949 = vadd.f32 0.0, %v948
        %v950 = vpop.f32.mrb[0].mxu0
        %v951 = vpop.f32.mrb[0].mxu0
        %v952 = vadd.f32 0.0, %v951
        %v953 = vpop.f32.mrb[0].mxu0
        %954 = vdwg.mxu0
        %955 = vmatprep.subr.bf16.mxu0 0
        %956 = vmatpush1.bf16.msra.mxu0 %v526
        %957 = vmatprep.subr.bf16.mxu0 0
        %958 = vmatpush1.bf16.msra.mxu0 %v527
        %959 = vmatprep.subr.bf16.mxu0 0
        %960 = vmatpush1.bf16.msra.mxu0 %v532
        %961 = vmatprep.subr.bf16.mxu0 0
        %962 = vmatpush1.bf16.msra.mxu0 0
        %963 = vmatprep.subr.bf16.mxu0 0
        %964 = vmatpush1.bf16.msra.mxu0 0
        %965 = vmatprep.subr.bf16.mxu0 0
        %966 = vmatpush1.bf16.msra.mxu0 0
        %967 = vmatprep.subr.bf16.mxu0 0
        %968 = vmatpush1.bf16.msra.mxu0 0
        %969 = vmatprep.subr.bf16.mxu0 0
        %970 = vmatpush1.bf16.msra.mxu0 0
        %971 = vmatprep.subr.bf16.mxu0 0
        %972 = vmatpush1.bf16.msra.mxu0 0
        %973 = vmatprep.subr.bf16.mxu0 0
        %974 = vmatpush1.bf16.msra.mxu0 0
        %975 = vmatprep.subr.bf16.mxu0 0
        %976 = vmatpush1.bf16.msra.mxu0 0
        %977 = vmatprep.subr.bf16.mxu0 0
        %978 = vmatpush1.bf16.msra.mxu0 0
        %979 = vmatprep.subr.bf16.mxu0 0
        %980 = vmatpush1.bf16.msra.mxu0 0
        %981 = vmatprep.subr.bf16.mxu0 0
        %982 = vmatpush1.bf16.msra.mxu0 0
        %983 = vmatprep.subr.bf16.mxu0 0
        %984 = vmatpush1.bf16.msra.mxu0 0
        %985 = vmatprep.subr.bf16.mxu0 0
        %986 = vmatpush1.bf16.msra.mxu0 0
        %987 = vmatprep.mubr.bf16.mxu0 0
        %988 = vmatmul.mubr.bf16.gmra.mrb[0].mxu0 %v871
        %v989 = vpop.f32.mrb[0].mxu0
        %v990 = vadd.f32 0.0, %v989
        %v991 = vpop.f32.mrb[0].mxu0
        %v992 = vpop.f32.mrb[0].mxu0
        %v993 = vadd.f32 0.0, %v992
        %v994 = vpop.f32.mrb[0].mxu0
        %995 = vdwg.mxu0
        %996 = vmatprep.subr.bf16.mxu0 0
        %997 = vmatpush1.bf16.msra.mxu0 %v585
        %998 = vmatprep.subr.bf16.mxu0 0
        %999 = vmatpush1.bf16.msra.mxu0 %v586
        %1000 = vmatprep.subr.bf16.mxu0 0
        %1001 = vmatpush1.bf16.msra.mxu0 %v591
        %1002 = vmatprep.subr.bf16.mxu0 0
        %1003 = vmatpush1.bf16.msra.mxu0 0
        %1004 = vmatprep.subr.bf16.mxu0 0
        %1005 = vmatpush1.bf16.msra.mxu0 0
        %1006 = vmatprep.subr.bf16.mxu0 0
        %1007 = vmatpush1.bf16.msra.mxu0 0
        %1008 = vmatprep.subr.bf16.mxu0 0
        %1009 = vmatpush1.bf16.msra.mxu0 0
        %1010 = vmatprep.subr.bf16.mxu0 0
        %1011 = vmatpush1.bf16.msra.mxu0 0
        %1012 = vmatprep.subr.bf16.mxu0 0
        %1013 = vmatpush1.bf16.msra.mxu0 0
        %1014 = vmatprep.subr.bf16.mxu0 0
        %1015 = vmatpush1.bf16.msra.mxu0 0
        %1016 = vmatprep.subr.bf16.mxu0 0
        %1017 = vmatpush1.bf16.msra.mxu0 0
        %1018 = vmatprep.subr.bf16.mxu0 0
        %1019 = vmatpush1.bf16.msra.mxu0 0
        %1020 = vmatprep.subr.bf16.mxu0 0
        %1021 = vmatpush1.bf16.msra.mxu0 0
        %1022 = vmatprep.subr.bf16.mxu0 0
        %1023 = vmatpush1.bf16.msra.mxu0 0
        %1024 = vmatprep.subr.bf16.mxu0 0
        %1025 = vmatpush1.bf16.msra.mxu0 0
        %1026 = vmatprep.subr.bf16.mxu0 0
        %1027 = vmatpush1.bf16.msra.mxu0 0
        %1028 = vmatprep.mubr.bf16.mxu0 0
        %1029 = vmatmul.mubr.bf16.gmra.mrb[0].mxu0 %v871
        %v1030 = vpop.f32.mrb[0].mxu0
        %v1031 = vadd.f32 0.0, %v1030
        %v1032 = vpop.f32.mrb[0].mxu0
        %v1033 = vpop.f32.mrb[0].mxu0
        %v1034 = vadd.f32 0.0, %v1033
        %v1035 = vpop.f32.mrb[0].mxu0
        %1036 = vdwg.mxu0
        %1037 = vmatprep.subr.bf16.mxu0 0
        %1038 = vmatpush1.bf16.msra.mxu0 %v644
        %1039 = vmatprep.subr.bf16.mxu0 0
        %1040 = vmatpush1.bf16.msra.mxu0 %v645
        %1041 = vmatprep.subr.bf16.mxu0 0
        %1042 = vmatpush1.bf16.msra.mxu0 %v650
        %1043 = vmatprep.subr.bf16.mxu0 0
        %1044 = vmatpush1.bf16.msra.mxu0 0
        %1045 = vmatprep.subr.bf16.mxu0 0
        %1046 = vmatpush1.bf16.msra.mxu0 0
        %1047 = vmatprep.subr.bf16.mxu0 0
        %1048 = vmatpush1.bf16.msra.mxu0 0
        %1049 = vmatprep.subr.bf16.mxu0 0
        %1050 = vmatpush1.bf16.msra.mxu0 0
        %1051 = vmatprep.subr.bf16.mxu0 0
        %1052 = vmatpush1.bf16.msra.mxu0 0
        %1053 = vmatprep.subr.bf16.mxu0 0
        %1054 = vmatpush1.bf16.msra.mxu0 0
        %1055 = vmatprep.subr.bf16.mxu0 0
        %1056 = vmatpush1.bf16.msra.mxu0 0
        %1057 = vmatprep.subr.bf16.mxu0 0
        %1058 = vmatpush1.bf16.msra.mxu0 0
        %1059 = vmatprep.subr.bf16.mxu0 0
        %1060 = vmatpush1.bf16.msra.mxu0 0
        %1061 = vmatprep.subr.bf16.mxu0 0
        %1062 = vmatpush1.bf16.msra.mxu0 0
        %1063 = vmatprep.subr.bf16.mxu0 0
        %1064 = vmatpush1.bf16.msra.mxu0 0
        %1065 = vmatprep.subr.bf16.mxu0 0
        %1066 = vmatpush1.bf16.msra.mxu0 0
        %1067 = vmatprep.subr.bf16.mxu0 0
        %1068 = vmatpush1.bf16.msra.mxu0 0
        %1069 = vmatprep.mubr.bf16.mxu0 0
        %1070 = vmatmul.mubr.bf16.gmra.mrb[0].mxu0 %v871
        %v1071 = vpop.f32.mrb[0].mxu0
        %v1072 = vadd.f32 0.0, %v1071
        %v1073 = vpop.f32.mrb[0].mxu0
        %v1074 = vpop.f32.mrb[0].mxu0
        %v1075 = vadd.f32 0.0, %v1074
        %v1076 = vpop.f32.mrb[0].mxu0
        %1077 = vdwg.mxu0
        %1078 = vmatprep.subr.bf16.mxu0 0
        %1079 = vmatpush1.bf16.msra.mxu0 %v703
        %1080 = vmatprep.subr.bf16.mxu0 0
        %1081 = vmatpush1.bf16.msra.mxu0 %v704
        %1082 = vmatprep.subr.bf16.mxu0 0
        %1083 = vmatpush1.bf16.msra.mxu0 %v709
        %1084 = vmatprep.subr.bf16.mxu0 0
        %1085 = vmatpush1.bf16.msra.mxu0 0
        %1086 = vmatprep.subr.bf16.mxu0 0
        %1087 = vmatpush1.bf16.msra.mxu0 0
        %1088 = vmatprep.subr.bf16.mxu0 0
        %1089 = vmatpush1.bf16.msra.mxu0 0
        %1090 = vmatprep.subr.bf16.mxu0 0
        %1091 = vmatpush1.bf16.msra.mxu0 0
        %1092 = vmatprep.subr.bf16.mxu0 0
        %1093 = vmatpush1.bf16.msra.mxu0 0
        %1094 = vmatprep.subr.bf16.mxu0 0
        %1095 = vmatpush1.bf16.msra.mxu0 0
        %1096 = vmatprep.subr.bf16.mxu0 0
        %1097 = vmatpush1.bf16.msra.mxu0 0
        %1098 = vmatprep.subr.bf16.mxu0 0
        %1099 = vmatpush1.bf16.msra.mxu0 0
        %1100 = vmatprep.subr.bf16.mxu0 0
        %1101 = vmatpush1.bf16.msra.mxu0 0
        %1102 = vmatprep.subr.bf16.mxu0 0
        %1103 = vmatpush1.bf16.msra.mxu0 0
        %1104 = vmatprep.subr.bf16.mxu0 0
        %1105 = vmatpush1.bf16.msra.mxu0 0
        %1106 = vmatprep.subr.bf16.mxu0 0
        %1107 = vmatpush1.bf16.msra.mxu0 0
        %1108 = vmatprep.subr.bf16.mxu0 0
        %1109 = vmatpush1.bf16.msra.mxu0 0
        %1110 = vmatprep.mubr.bf16.mxu0 0
        %1111 = vmatmul.mubr.bf16.gmra.mrb[0].mxu0 %v871
        %v1112 = vpop.f32.mrb[0].mxu0
        %v1113 = vadd.f32 0.0, %v1112
        %v1114 = vpop.f32.mrb[0].mxu0
        %v1115 = vpop.f32.mrb[0].mxu0
        %v1116 = vadd.f32 0.0, %v1115
        %v1117 = vpop.f32.mrb[0].mxu0
        %1118 = vdwg.mxu0
        %1119 = vmatprep.subr.bf16.mxu0 0
        %1120 = vmatpush1.bf16.msra.mxu0 %v762
        %1121 = vmatprep.subr.bf16.mxu0 0
        %1122 = vmatpush1.bf16.msra.mxu0 %v763
        %1123 = vmatprep.subr.bf16.mxu0 0
        %1124 = vmatpush1.bf16.msra.mxu0 %v768
        %1125 = vmatprep.subr.bf16.mxu0 0
        %1126 = vmatpush1.bf16.msra.mxu0 0
        %1127 = vmatprep.subr.bf16.mxu0 0
        %1128 = vmatpush1.bf16.msra.mxu0 0
        %1129 = vmatprep.subr.bf16.mxu0 0
        %1130 = vmatpush1.bf16.msra.mxu0 0
        %1131 = vmatprep.subr.bf16.mxu0 0
        %1132 = vmatpush1.bf16.msra.mxu0 0
        %1133 = vmatprep.subr.bf16.mxu0 0
        %1134 = vmatpush1.bf16.msra.mxu0 0
        %1135 = vmatprep.subr.bf16.mxu0 0
        %1136 = vmatpush1.bf16.msra.mxu0 0
        %1137 = vmatprep.subr.bf16.mxu0 0
        %1138 = vmatpush1.bf16.msra.mxu0 0
        %1139 = vmatprep.subr.bf16.mxu0 0
        %1140 = vmatpush1.bf16.msra.mxu0 0
        %1141 = vmatprep.subr.bf16.mxu0 0
        %1142 = vmatpush1.bf16.msra.mxu0 0
        %1143 = vmatprep.subr.bf16.mxu0 0
        %1144 = vmatpush1.bf16.msra.mxu0 0
        %1145 = vmatprep.subr.bf16.mxu0 0
        %1146 = vmatpush1.bf16.msra.mxu0 0
        %1147 = vmatprep.subr.bf16.mxu0 0
        %1148 = vmatpush1.bf16.msra.mxu0 0
        %1149 = vmatprep.subr.bf16.mxu0 0
        %1150 = vmatpush1.bf16.msra.mxu0 0
        %1151 = vmatprep.mubr.bf16.mxu0 0
        %1152 = vmatmul.mubr.bf16.gmra.mrb[0].mxu0 %v871
        %v1153 = vpop.f32.mrb[0].mxu0
        %v1154 = vadd.f32 0.0, %v1153
        %v1155 = vpop.f32.mrb[0].mxu0
        %v1156 = vpop.f32.mrb[0].mxu0
        %v1157 = vadd.f32 0.0, %v1156
        %v1158 = vpop.f32.mrb[0].mxu0
        %1159 = vdwg.mxu0
        %1160 = vmatprep.subr.bf16.mxu0 0
        %1161 = vmatpush1.bf16.msra.mxu0 %v821
        %1162 = vmatprep.subr.bf16.mxu0 0
        %1163 = vmatpush1.bf16.msra.mxu0 %v822
        %1164 = vmatprep.subr.bf16.mxu0 0
        %1165 = vmatpush1.bf16.msra.mxu0 %v827
        %1166 = vmatprep.subr.bf16.mxu0 0
        %1167 = vmatpush1.bf16.msra.mxu0 0
        %1168 = vmatprep.subr.bf16.mxu0 0
        %1169 = vmatpush1.bf16.msra.mxu0 0
        %1170 = vmatprep.subr.bf16.mxu0 0
        %1171 = vmatpush1.bf16.msra.mxu0 0
        %1172 = vmatprep.subr.bf16.mxu0 0
        %1173 = vmatpush1.bf16.msra.mxu0 0
        %1174 = vmatprep.subr.bf16.mxu0 0
        %1175 = vmatpush1.bf16.msra.mxu0 0
        %1176 = vmatprep.subr.bf16.mxu0 0
        %1177 = vmatpush1.bf16.msra.mxu0 0
        %1178 = vmatprep.subr.bf16.mxu0 0
        %1179 = vmatpush1.bf16.msra.mxu0 0
        %1180 = vmatprep.subr.bf16.mxu0 0
        %1181 = vmatpush1.bf16.msra.mxu0 0
        %1182 = vmatprep.subr.bf16.mxu0 0
        %1183 = vmatpush1.bf16.msra.mxu0 0
        %1184 = vmatprep.subr.bf16.mxu0 0
        %1185 = vmatpush1.bf16.msra.mxu0 0
        %1186 = vmatprep.subr.bf16.mxu0 0
        %1187 = vmatpush1.bf16.msra.mxu0 0
        %1188 = vmatprep.subr.bf16.mxu0 0
        %1189 = vmatpush1.bf16.msra.mxu0 0
        %1190 = vmatprep.subr.bf16.mxu0 0
        %1191 = vmatpush1.bf16.msra.mxu0 0
        %1192 = vmatprep.mubr.bf16.mxu0 0
        %1193 = vmatmul.mubr.bf16.gmra.mrb[0].mxu0 %v871
        %v1194 = vpop.f32.mrb[0].mxu0
        %v1195 = vadd.f32 0.0, %v1194
        %v1196 = vpop.f32.mrb[0].mxu0
        %v1197 = vpop.f32.mrb[0].mxu0
        %v1198 = vadd.f32 0.0, %v1197
        %v1199 = vpop.f32.mrb[0].mxu0
        %1200 = vdwg.mxu0
        %v1206 = vunpack.c.l.b16 %v303
        %v1207 = vunpack.c.l.b16 %v304
        %v1208 = vunpack.c.l.b16 %v305
        %v1209 = vunpack.c.l.b16 %v306
        %v1210 = vunpack.c.l.b16 %v307
        %v1211 = vpack.c.b16 %v1207, %v1206
        %v1212 = vpack.c.b16 %v1209, %v1208
        %v1213 = vpack.c.b16 %v1210, %v1210
        %v1217 = vand.u32 %v1213, %v412
        %1219 = vmatprep.subr.bf16.mxu0 0
        %1220 = vmatpush1.bf16.msra.mxu0 %v1211
        %1221 = vmatprep.subr.bf16.mxu0 0
        %1222 = vmatpush1.bf16.msra.mxu0 %v1212
        %1223 = vmatprep.subr.bf16.mxu0 0
        %1224 = vmatpush1.bf16.msra.mxu0 %v1217
        %1225 = vmatprep.subr.bf16.mxu0 0
        %1226 = vmatpush1.bf16.msra.mxu0 0
        %1227 = vmatprep.subr.bf16.mxu0 0
        %1228 = vmatpush1.bf16.msra.mxu0 0
        %1229 = vmatprep.subr.bf16.mxu0 0
        %1230 = vmatpush1.bf16.msra.mxu0 0
        %1231 = vmatprep.subr.bf16.mxu0 0
        %1232 = vmatpush1.bf16.msra.mxu0 0
        %1233 = vmatprep.subr.bf16.mxu0 0
        %1234 = vmatpush1.bf16.msra.mxu0 0
        %1235 = vmatprep.subr.bf16.mxu0 0
        %1236 = vmatpush1.bf16.msra.mxu0 0
        %1237 = vmatprep.subr.bf16.mxu0 0
        %1238 = vmatpush1.bf16.msra.mxu0 0
        %1239 = vmatprep.subr.bf16.mxu0 0
        %1240 = vmatpush1.bf16.msra.mxu0 0
        %1241 = vmatprep.subr.bf16.mxu0 0
        %1242 = vmatpush1.bf16.msra.mxu0 0
        %1243 = vmatprep.subr.bf16.mxu0 0
        %1244 = vmatpush1.bf16.msra.mxu0 0
        %1245 = vmatprep.subr.bf16.mxu0 0
        %1246 = vmatpush1.bf16.msra.mxu0 0
        %1247 = vmatprep.subr.bf16.mxu0 0
        %1248 = vmatpush1.bf16.msra.mxu0 0
        %1249 = vmatprep.subr.bf16.mxu0 0
        %1250 = vmatpush1.bf16.msra.mxu0 0
        %1251 = vmatprep.mubr.bf16.mxu0 0
        %1252 = vmatmul.mubr.bf16.gmra.mrb[0].mxu0 %v408
        %v1253 = vpop.f32.mrb[0].mxu0
        %v1254 = vadd.f32 0.0, %v1253
        %v1255 = vpop.f32.mrb[0].mxu0
        %v1256 = vpop.f32.mrb[0].mxu0
        %v1257 = vadd.f32 0.0, %v1256
        %v1258 = vpop.f32.mrb[0].mxu0
        %1259 = vdwg.mxu0
        %v1265 = vunpack.c.l.b16 %v308
        %v1266 = vunpack.c.l.b16 %v309
        %v1267 = vunpack.c.l.b16 %v310
        %v1268 = vunpack.c.l.b16 %v311
        %v1269 = vunpack.c.l.b16 %v312
        %v1270 = vpack.c.b16 %v1266, %v1265
        %v1271 = vpack.c.b16 %v1268, %v1267
        %v1272 = vpack.c.b16 %v1269, %v1269
        %v1276 = vand.u32 %v1272, %v412
        %1278 = vmatprep.subr.bf16.mxu0 0
        %1279 = vmatpush1.bf16.msra.mxu0 %v1270
        %1280 = vmatprep.subr.bf16.mxu0 0
        %1281 = vmatpush1.bf16.msra.mxu0 %v1271
        %1282 = vmatprep.subr.bf16.mxu0 0
        %1283 = vmatpush1.bf16.msra.mxu0 %v1276
        %1284 = vmatprep.subr.bf16.mxu0 0
        %1285 = vmatpush1.bf16.msra.mxu0 0
        %1286 = vmatprep.subr.bf16.mxu0 0
        %1287 = vmatpush1.bf16.msra.mxu0 0
        %1288 = vmatprep.subr.bf16.mxu0 0
        %1289 = vmatpush1.bf16.msra.mxu0 0
        %1290 = vmatprep.subr.bf16.mxu0 0
        %1291 = vmatpush1.bf16.msra.mxu0 0
        %1292 = vmatprep.subr.bf16.mxu0 0
        %1293 = vmatpush1.bf16.msra.mxu0 0
        %1294 = vmatprep.subr.bf16.mxu0 0
        %1295 = vmatpush1.bf16.msra.mxu0 0
        %1296 = vmatprep.subr.bf16.mxu0 0
        %1297 = vmatpush1.bf16.msra.mxu0 0
        %1298 = vmatprep.subr.bf16.mxu0 0
        %1299 = vmatpush1.bf16.msra.mxu0 0
        %1300 = vmatprep.subr.bf16.mxu0 0
        %1301 = vmatpush1.bf16.msra.mxu0 0
        %1302 = vmatprep.subr.bf16.mxu0 0
        %1303 = vmatpush1.bf16.msra.mxu0 0
        %1304 = vmatprep.subr.bf16.mxu0 0
        %1305 = vmatpush1.bf16.msra.mxu0 0
        %1306 = vmatprep.subr.bf16.mxu0 0
        %1307 = vmatpush1.bf16.msra.mxu0 0
        %1308 = vmatprep.subr.bf16.mxu0 0
        %1309 = vmatpush1.bf16.msra.mxu0 0
        %1310 = vmatprep.mubr.bf16.mxu0 0
        %1311 = vmatmul.mubr.bf16.gmra.mrb[0].mxu0 %v408
        %v1312 = vpop.f32.mrb[0].mxu0
        %v1313 = vadd.f32 0.0, %v1312
        %v1314 = vpop.f32.mrb[0].mxu0
        %v1315 = vpop.f32.mrb[0].mxu0
        %v1316 = vadd.f32 0.0, %v1315
        %v1317 = vpop.f32.mrb[0].mxu0
        %1318 = vdwg.mxu0
        %v1324 = vunpack.c.l.b16 %v313
        %v1325 = vunpack.c.l.b16 %v314
        %v1326 = vunpack.c.l.b16 %v315
        %v1327 = vunpack.c.l.b16 %v316
        %v1328 = vunpack.c.l.b16 %v317
        %v1329 = vpack.c.b16 %v1325, %v1324
        %v1330 = vpack.c.b16 %v1327, %v1326
        %v1331 = vpack.c.b16 %v1328, %v1328
        %v1335 = vand.u32 %v1331, %v412
        %1337 = vmatprep.subr.bf16.mxu0 0
        %1338 = vmatpush1.bf16.msra.mxu0 %v1329
        %1339 = vmatprep.subr.bf16.mxu0 0
        %1340 = vmatpush1.bf16.msra.mxu0 %v1330
        %1341 = vmatprep.subr.bf16.mxu0 0
        %1342 = vmatpush1.bf16.msra.mxu0 %v1335
        %1343 = vmatprep.subr.bf16.mxu0 0
        %1344 = vmatpush1.bf16.msra.mxu0 0
        %1345 = vmatprep.subr.bf16.mxu0 0
        %1346 = vmatpush1.bf16.msra.mxu0 0
        %1347 = vmatprep.subr.bf16.mxu0 0
        %1348 = vmatpush1.bf16.msra.mxu0 0
        %1349 = vmatprep.subr.bf16.mxu0 0
        %1350 = vmatpush1.bf16.msra.mxu0 0
        %1351 = vmatprep.subr.bf16.mxu0 0
        %1352 = vmatpush1.bf16.msra.mxu0 0
        %1353 = vmatprep.subr.bf16.mxu0 0
        %1354 = vmatpush1.bf16.msra.mxu0 0
        %1355 = vmatprep.subr.bf16.mxu0 0
        %1356 = vmatpush1.bf16.msra.mxu0 0
        %1357 = vmatprep.subr.bf16.mxu0 0
        %1358 = vmatpush1.bf16.msra.mxu0 0
        %1359 = vmatprep.subr.bf16.mxu0 0
        %1360 = vmatpush1.bf16.msra.mxu0 0
        %1361 = vmatprep.subr.bf16.mxu0 0
        %1362 = vmatpush1.bf16.msra.mxu0 0
        %1363 = vmatprep.subr.bf16.mxu0 0
        %1364 = vmatpush1.bf16.msra.mxu0 0
        %1365 = vmatprep.subr.bf16.mxu0 0
        %1366 = vmatpush1.bf16.msra.mxu0 0
        %1367 = vmatprep.subr.bf16.mxu0 0
        %1368 = vmatpush1.bf16.msra.mxu0 0
        %1369 = vmatprep.mubr.bf16.mxu0 0
        %1370 = vmatmul.mubr.bf16.gmra.mrb[0].mxu0 %v408
        %v1371 = vpop.f32.mrb[0].mxu0
        %v1372 = vadd.f32 0.0, %v1371
        %v1373 = vpop.f32.mrb[0].mxu0
        %v1374 = vpop.f32.mrb[0].mxu0
        %v1375 = vadd.f32 0.0, %v1374
        %v1376 = vpop.f32.mrb[0].mxu0
        %1377 = vdwg.mxu0
        %v1383 = vunpack.c.l.b16 %v318
        %v1384 = vunpack.c.l.b16 %v319
        %v1385 = vunpack.c.l.b16 %v320
        %v1386 = vunpack.c.l.b16 %v321
        %v1387 = vunpack.c.l.b16 %v322
        %v1388 = vpack.c.b16 %v1384, %v1383
        %v1389 = vpack.c.b16 %v1386, %v1385
        %v1390 = vpack.c.b16 %v1387, %v1387
        %v1394 = vand.u32 %v1390, %v412
        %1396 = vmatprep.subr.bf16.mxu0 0
        %1397 = vmatpush1.bf16.msra.mxu0 %v1388
        %1398 = vmatprep.subr.bf16.mxu0 0
        %1399 = vmatpush1.bf16.msra.mxu0 %v1389
        %1400 = vmatprep.subr.bf16.mxu0 0
        %1401 = vmatpush1.bf16.msra.mxu0 %v1394
        %1402 = vmatprep.subr.bf16.mxu0 0
        %1403 = vmatpush1.bf16.msra.mxu0 0
        %1404 = vmatprep.subr.bf16.mxu0 0
        %1405 = vmatpush1.bf16.msra.mxu0 0
        %1406 = vmatprep.subr.bf16.mxu0 0
        %1407 = vmatpush1.bf16.msra.mxu0 0
        %1408 = vmatprep.subr.bf16.mxu0 0
        %1409 = vmatpush1.bf16.msra.mxu0 0
        %1410 = vmatprep.subr.bf16.mxu0 0
        %1411 = vmatpush1.bf16.msra.mxu0 0
        %1412 = vmatprep.subr.bf16.mxu0 0
        %1413 = vmatpush1.bf16.msra.mxu0 0
        %1414 = vmatprep.subr.bf16.mxu0 0
        %1415 = vmatpush1.bf16.msra.mxu0 0
        %1416 = vmatprep.subr.bf16.mxu0 0
        %1417 = vmatpush1.bf16.msra.mxu0 0
        %1418 = vmatprep.subr.bf16.mxu0 0
        %1419 = vmatpush1.bf16.msra.mxu0 0
        %1420 = vmatprep.subr.bf16.mxu0 0
        %1421 = vmatpush1.bf16.msra.mxu0 0
        %1422 = vmatprep.subr.bf16.mxu0 0
        %1423 = vmatpush1.bf16.msra.mxu0 0
        %1424 = vmatprep.subr.bf16.mxu0 0
        %1425 = vmatpush1.bf16.msra.mxu0 0
        %1426 = vmatprep.subr.bf16.mxu0 0
        %1427 = vmatpush1.bf16.msra.mxu0 0
        %1428 = vmatprep.mubr.bf16.mxu0 0
        %1429 = vmatmul.mubr.bf16.gmra.mrb[0].mxu0 %v408
        %v1430 = vpop.f32.mrb[0].mxu0
        %v1431 = vadd.f32 0.0, %v1430
        %v1432 = vpop.f32.mrb[0].mxu0
        %v1433 = vpop.f32.mrb[0].mxu0
        %v1434 = vadd.f32 0.0, %v1433
        %v1435 = vpop.f32.mrb[0].mxu0
        %1436 = vdwg.mxu0
        %v1442 = vunpack.c.l.b16 %v323
        %v1443 = vunpack.c.l.b16 %v324
        %v1444 = vunpack.c.l.b16 %v325
        %v1445 = vunpack.c.l.b16 %v326
        %v1446 = vunpack.c.l.b16 %v327
        %v1447 = vpack.c.b16 %v1443, %v1442
        %v1448 = vpack.c.b16 %v1445, %v1444
        %v1449 = vpack.c.b16 %v1446, %v1446
        %v1453 = vand.u32 %v1449, %v412
        %1455 = vmatprep.subr.bf16.mxu0 0
        %1456 = vmatpush1.bf16.msra.mxu0 %v1447
        %1457 = vmatprep.subr.bf16.mxu0 0
        %1458 = vmatpush1.bf16.msra.mxu0 %v1448
        %1459 = vmatprep.subr.bf16.mxu0 0
        %1460 = vmatpush1.bf16.msra.mxu0 %v1453
        %1461 = vmatprep.subr.bf16.mxu0 0
        %1462 = vmatpush1.bf16.msra.mxu0 0
        %1463 = vmatprep.subr.bf16.mxu0 0
        %1464 = vmatpush1.bf16.msra.mxu0 0
        %1465 = vmatprep.subr.bf16.mxu0 0
        %1466 = vmatpush1.bf16.msra.mxu0 0
        %1467 = vmatprep.subr.bf16.mxu0 0
        %1468 = vmatpush1.bf16.msra.mxu0 0
        %1469 = vmatprep.subr.bf16.mxu0 0
        %1470 = vmatpush1.bf16.msra.mxu0 0
        %1471 = vmatprep.subr.bf16.mxu0 0
        %1472 = vmatpush1.bf16.msra.mxu0 0
        %1473 = vmatprep.subr.bf16.mxu0 0
        %1474 = vmatpush1.bf16.msra.mxu0 0
        %1475 = vmatprep.subr.bf16.mxu0 0
        %1476 = vmatpush1.bf16.msra.mxu0 0
        %1477 = vmatprep.subr.bf16.mxu0 0
        %1478 = vmatpush1.bf16.msra.mxu0 0
        %1479 = vmatprep.subr.bf16.mxu0 0
        %1480 = vmatpush1.bf16.msra.mxu0 0
        %1481 = vmatprep.subr.bf16.mxu0 0
        %1482 = vmatpush1.bf16.msra.mxu0 0
        %1483 = vmatprep.subr.bf16.mxu0 0
        %1484 = vmatpush1.bf16.msra.mxu0 0
        %1485 = vmatprep.subr.bf16.mxu0 0
        %1486 = vmatpush1.bf16.msra.mxu0 0
        %1487 = vmatprep.mubr.bf16.mxu0 0
        %1488 = vmatmul.mubr.bf16.gmra.mrb[0].mxu0 %v408
        %v1489 = vpop.f32.mrb[0].mxu0
        %v1490 = vadd.f32 0.0, %v1489
        %v1491 = vpop.f32.mrb[0].mxu0
        %v1492 = vpop.f32.mrb[0].mxu0
        %v1493 = vadd.f32 0.0, %v1492
        %v1494 = vpop.f32.mrb[0].mxu0
        %1495 = vdwg.mxu0
        %v1501 = vunpack.c.l.b16 %v328
        %v1502 = vunpack.c.l.b16 %v329
        %v1503 = vunpack.c.l.b16 %v330
        %v1504 = vunpack.c.l.b16 %v331
        %v1505 = vunpack.c.l.b16 %v332
        %v1506 = vpack.c.b16 %v1502, %v1501
        %v1507 = vpack.c.b16 %v1504, %v1503
        %v1508 = vpack.c.b16 %v1505, %v1505
        %v1512 = vand.u32 %v1508, %v412
        %1514 = vmatprep.subr.bf16.mxu0 0
        %1515 = vmatpush1.bf16.msra.mxu0 %v1506
        %1516 = vmatprep.subr.bf16.mxu0 0
        %1517 = vmatpush1.bf16.msra.mxu0 %v1507
        %1518 = vmatprep.subr.bf16.mxu0 0
        %1519 = vmatpush1.bf16.msra.mxu0 %v1512
        %1520 = vmatprep.subr.bf16.mxu0 0
        %1521 = vmatpush1.bf16.msra.mxu0 0
        %1522 = vmatprep.subr.bf16.mxu0 0
        %1523 = vmatpush1.bf16.msra.mxu0 0
        %1524 = vmatprep.subr.bf16.mxu0 0
        %1525 = vmatpush1.bf16.msra.mxu0 0
        %1526 = vmatprep.subr.bf16.mxu0 0
        %1527 = vmatpush1.bf16.msra.mxu0 0
        %1528 = vmatprep.subr.bf16.mxu0 0
        %1529 = vmatpush1.bf16.msra.mxu0 0
        %1530 = vmatprep.subr.bf16.mxu0 0
        %1531 = vmatpush1.bf16.msra.mxu0 0
        %1532 = vmatprep.subr.bf16.mxu0 0
        %1533 = vmatpush1.bf16.msra.mxu0 0
        %1534 = vmatprep.subr.bf16.mxu0 0
        %1535 = vmatpush1.bf16.msra.mxu0 0
        %1536 = vmatprep.subr.bf16.mxu0 0
        %1537 = vmatpush1.bf16.msra.mxu0 0
        %1538 = vmatprep.subr.bf16.mxu0 0
        %1539 = vmatpush1.bf16.msra.mxu0 0
        %1540 = vmatprep.subr.bf16.mxu0 0
        %1541 = vmatpush1.bf16.msra.mxu0 0
        %1542 = vmatprep.subr.bf16.mxu0 0
        %1543 = vmatpush1.bf16.msra.mxu0 0
        %1544 = vmatprep.subr.bf16.mxu0 0
        %1545 = vmatpush1.bf16.msra.mxu0 0
        %1546 = vmatprep.mubr.bf16.mxu0 0
        %1547 = vmatmul.mubr.bf16.gmra.mrb[0].mxu0 %v408
        %v1548 = vpop.f32.mrb[0].mxu0
        %v1549 = vadd.f32 0.0, %v1548
        %v1550 = vpop.f32.mrb[0].mxu0
        %v1551 = vpop.f32.mrb[0].mxu0
        %v1552 = vadd.f32 0.0, %v1551
        %v1553 = vpop.f32.mrb[0].mxu0
        %1554 = vdwg.mxu0
        %v1560 = vunpack.c.l.b16 %v333
        %v1561 = vunpack.c.l.b16 %v334
        %v1562 = vunpack.c.l.b16 %v335
        %v1563 = vunpack.c.l.b16 %v336
        %v1564 = vunpack.c.l.b16 %v337
        %v1565 = vpack.c.b16 %v1561, %v1560
        %v1566 = vpack.c.b16 %v1563, %v1562
        %v1567 = vpack.c.b16 %v1564, %v1564
        %v1571 = vand.u32 %v1567, %v412
        %1573 = vmatprep.subr.bf16.mxu0 0
        %1574 = vmatpush1.bf16.msra.mxu0 %v1565
        %1575 = vmatprep.subr.bf16.mxu0 0
        %1576 = vmatpush1.bf16.msra.mxu0 %v1566
        %1577 = vmatprep.subr.bf16.mxu0 0
        %1578 = vmatpush1.bf16.msra.mxu0 %v1571
        %1579 = vmatprep.subr.bf16.mxu0 0
        %1580 = vmatpush1.bf16.msra.mxu0 0
        %1581 = vmatprep.subr.bf16.mxu0 0
        %1582 = vmatpush1.bf16.msra.mxu0 0
        %1583 = vmatprep.subr.bf16.mxu0 0
        %1584 = vmatpush1.bf16.msra.mxu0 0
        %1585 = vmatprep.subr.bf16.mxu0 0
        %1586 = vmatpush1.bf16.msra.mxu0 0
        %1587 = vmatprep.subr.bf16.mxu0 0
        %1588 = vmatpush1.bf16.msra.mxu0 0
        %1589 = vmatprep.subr.bf16.mxu0 0
        %1590 = vmatpush1.bf16.msra.mxu0 0
        %1591 = vmatprep.subr.bf16.mxu0 0
        %1592 = vmatpush1.bf16.msra.mxu0 0
        %1593 = vmatprep.subr.bf16.mxu0 0
        %1594 = vmatpush1.bf16.msra.mxu0 0
        %1595 = vmatprep.subr.bf16.mxu0 0
        %1596 = vmatpush1.bf16.msra.mxu0 0
        %1597 = vmatprep.subr.bf16.mxu0 0
        %1598 = vmatpush1.bf16.msra.mxu0 0
        %1599 = vmatprep.subr.bf16.mxu0 0
        %1600 = vmatpush1.bf16.msra.mxu0 0
        %1601 = vmatprep.subr.bf16.mxu0 0
        %1602 = vmatpush1.bf16.msra.mxu0 0
        %1603 = vmatprep.subr.bf16.mxu0 0
        %1604 = vmatpush1.bf16.msra.mxu0 0
        %1605 = vmatprep.mubr.bf16.mxu0 0
        %1606 = vmatmul.mubr.bf16.gmra.mrb[0].mxu0 %v408
        %v1607 = vpop.f32.mrb[0].mxu0
        %v1608 = vadd.f32 0.0, %v1607
        %v1609 = vpop.f32.mrb[0].mxu0
        %v1610 = vpop.f32.mrb[0].mxu0
        %v1611 = vadd.f32 0.0, %v1610
        %v1612 = vpop.f32.mrb[0].mxu0
        %1613 = vdwg.mxu0
        %v1619 = vunpack.c.l.b16 %v338
        %v1620 = vunpack.c.l.b16 %v339
        %v1621 = vunpack.c.l.b16 %v340
        %v1622 = vunpack.c.l.b16 %v341
        %v1623 = vunpack.c.l.b16 %v342
        %v1624 = vpack.c.b16 %v1620, %v1619
        %v1625 = vpack.c.b16 %v1622, %v1621
        %v1626 = vpack.c.b16 %v1623, %v1623
        %v1630 = vand.u32 %v1626, %v412
        %1632 = vmatprep.subr.bf16.mxu0 0
        %1633 = vmatpush1.bf16.msra.mxu0 %v1624
        %1634 = vmatprep.subr.bf16.mxu0 0
        %1635 = vmatpush1.bf16.msra.mxu0 %v1625
        %1636 = vmatprep.subr.bf16.mxu0 0
        %1637 = vmatpush1.bf16.msra.mxu0 %v1630
        %1638 = vmatprep.subr.bf16.mxu0 0
        %1639 = vmatpush1.bf16.msra.mxu0 0
        %1640 = vmatprep.subr.bf16.mxu0 0
        %1641 = vmatpush1.bf16.msra.mxu0 0
        %1642 = vmatprep.subr.bf16.mxu0 0
        %1643 = vmatpush1.bf16.msra.mxu0 0
        %1644 = vmatprep.subr.bf16.mxu0 0
        %1645 = vmatpush1.bf16.msra.mxu0 0
        %1646 = vmatprep.subr.bf16.mxu0 0
        %1647 = vmatpush1.bf16.msra.mxu0 0
        %1648 = vmatprep.subr.bf16.mxu0 0
        %1649 = vmatpush1.bf16.msra.mxu0 0
        %1650 = vmatprep.subr.bf16.mxu0 0
        %1651 = vmatpush1.bf16.msra.mxu0 0
        %1652 = vmatprep.subr.bf16.mxu0 0
        %1653 = vmatpush1.bf16.msra.mxu0 0
        %1654 = vmatprep.subr.bf16.mxu0 0
        %1655 = vmatpush1.bf16.msra.mxu0 0
        %1656 = vmatprep.subr.bf16.mxu0 0
        %1657 = vmatpush1.bf16.msra.mxu0 0
        %1658 = vmatprep.subr.bf16.mxu0 0
        %1659 = vmatpush1.bf16.msra.mxu0 0
        %1660 = vmatprep.subr.bf16.mxu0 0
        %1661 = vmatpush1.bf16.msra.mxu0 0
        %1662 = vmatprep.subr.bf16.mxu0 0
        %1663 = vmatpush1.bf16.msra.mxu0 0
        %1664 = vmatprep.mubr.bf16.mxu0 0
        %1665 = vmatmul.mubr.bf16.gmra.mrb[0].mxu0 %v408
        %v1666 = vpop.f32.mrb[0].mxu0
        %v1667 = vadd.f32 0.0, %v1666
        %v1668 = vpop.f32.mrb[0].mxu0
        %v1669 = vpop.f32.mrb[0].mxu0
        %v1670 = vadd.f32 0.0, %v1669
        %v1671 = vpop.f32.mrb[0].mxu0
        %1672 = vdwg.mxu0
        %1673 = vmatprep.subr.bf16.mxu0 0
        %1674 = vmatpush1.bf16.msra.mxu0 %v1211
        %1675 = vmatprep.subr.bf16.mxu0 0
        %1676 = vmatpush1.bf16.msra.mxu0 %v1212
        %1677 = vmatprep.subr.bf16.mxu0 0
        %1678 = vmatpush1.bf16.msra.mxu0 %v1217
        %1679 = vmatprep.subr.bf16.mxu0 0
        %1680 = vmatpush1.bf16.msra.mxu0 0
        %1681 = vmatprep.subr.bf16.mxu0 0
        %1682 = vmatpush1.bf16.msra.mxu0 0
        %1683 = vmatprep.subr.bf16.mxu0 0
        %1684 = vmatpush1.bf16.msra.mxu0 0
        %1685 = vmatprep.subr.bf16.mxu0 0
        %1686 = vmatpush1.bf16.msra.mxu0 0
        %1687 = vmatprep.subr.bf16.mxu0 0
        %1688 = vmatpush1.bf16.msra.mxu0 0
        %1689 = vmatprep.subr.bf16.mxu0 0
        %1690 = vmatpush1.bf16.msra.mxu0 0
        %1691 = vmatprep.subr.bf16.mxu0 0
        %1692 = vmatpush1.bf16.msra.mxu0 0
        %1693 = vmatprep.subr.bf16.mxu0 0
        %1694 = vmatpush1.bf16.msra.mxu0 0
        %1695 = vmatprep.subr.bf16.mxu0 0
        %1696 = vmatpush1.bf16.msra.mxu0 0
        %1697 = vmatprep.subr.bf16.mxu0 0
        %1698 = vmatpush1.bf16.msra.mxu0 0
        %1699 = vmatprep.subr.bf16.mxu0 0
        %1700 = vmatpush1.bf16.msra.mxu0 0
        %1701 = vmatprep.subr.bf16.mxu0 0
        %1702 = vmatpush1.bf16.msra.mxu0 0
        %1703 = vmatprep.subr.bf16.mxu0 0
        %1704 = vmatpush1.bf16.msra.mxu0 0
        %1705 = vmatprep.mubr.bf16.mxu0 0
        %1706 = vmatmul.mubr.bf16.gmra.mrb[0].mxu0 %v871
        %v1707 = vpop.f32.mrb[0].mxu0
        %v1708 = vadd.f32 0.0, %v1707
        %v1709 = vpop.f32.mrb[0].mxu0
        %v1710 = vpop.f32.mrb[0].mxu0
        %v1711 = vadd.f32 0.0, %v1710
        %v1712 = vpop.f32.mrb[0].mxu0
        %1713 = vdwg.mxu0
        %1714 = vmatprep.subr.bf16.mxu0 0
        %1715 = vmatpush1.bf16.msra.mxu0 %v1270
        %1716 = vmatprep.subr.bf16.mxu0 0
        %1717 = vmatpush1.bf16.msra.mxu0 %v1271
        %1718 = vmatprep.subr.bf16.mxu0 0
        %1719 = vmatpush1.bf16.msra.mxu0 %v1276
        %1720 = vmatprep.subr.bf16.mxu0 0
        %1721 = vmatpush1.bf16.msra.mxu0 0
        %1722 = vmatprep.subr.bf16.mxu0 0
        %1723 = vmatpush1.bf16.msra.mxu0 0
        %1724 = vmatprep.subr.bf16.mxu0 0
        %1725 = vmatpush1.bf16.msra.mxu0 0
        %1726 = vmatprep.subr.bf16.mxu0 0
        %1727 = vmatpush1.bf16.msra.mxu0 0
        %1728 = vmatprep.subr.bf16.mxu0 0
        %1729 = vmatpush1.bf16.msra.mxu0 0
        %1730 = vmatprep.subr.bf16.mxu0 0
        %1731 = vmatpush1.bf16.msra.mxu0 0
        %1732 = vmatprep.subr.bf16.mxu0 0
        %1733 = vmatpush1.bf16.msra.mxu0 0
        %1734 = vmatprep.subr.bf16.mxu0 0
        %1735 = vmatpush1.bf16.msra.mxu0 0
        %1736 = vmatprep.subr.bf16.mxu0 0
        %1737 = vmatpush1.bf16.msra.mxu0 0
        %1738 = vmatprep.subr.bf16.mxu0 0
        %1739 = vmatpush1.bf16.msra.mxu0 0
        %1740 = vmatprep.subr.bf16.mxu0 0
        %1741 = vmatpush1.bf16.msra.mxu0 0
        %1742 = vmatprep.subr.bf16.mxu0 0
        %1743 = vmatpush1.bf16.msra.mxu0 0
        %1744 = vmatprep.subr.bf16.mxu0 0
        %1745 = vmatpush1.bf16.msra.mxu0 0
        %1746 = vmatprep.mubr.bf16.mxu0 0
        %1747 = vmatmul.mubr.bf16.gmra.mrb[0].mxu0 %v871
        %v1748 = vpop.f32.mrb[0].mxu0
        %v1749 = vadd.f32 0.0, %v1748
        %v1750 = vpop.f32.mrb[0].mxu0
        %v1751 = vpop.f32.mrb[0].mxu0
        %v1752 = vadd.f32 0.0, %v1751
        %v1753 = vpop.f32.mrb[0].mxu0
        %1754 = vdwg.mxu0
        %1755 = vmatprep.subr.bf16.mxu0 0
        %1756 = vmatpush1.bf16.msra.mxu0 %v1329
        %1757 = vmatprep.subr.bf16.mxu0 0
        %1758 = vmatpush1.bf16.msra.mxu0 %v1330
        %1759 = vmatprep.subr.bf16.mxu0 0
        %1760 = vmatpush1.bf16.msra.mxu0 %v1335
        %1761 = vmatprep.subr.bf16.mxu0 0
        %1762 = vmatpush1.bf16.msra.mxu0 0
        %1763 = vmatprep.subr.bf16.mxu0 0
        %1764 = vmatpush1.bf16.msra.mxu0 0
        %1765 = vmatprep.subr.bf16.mxu0 0
        %1766 = vmatpush1.bf16.msra.mxu0 0
        %1767 = vmatprep.subr.bf16.mxu0 0
        %1768 = vmatpush1.bf16.msra.mxu0 0
        %1769 = vmatprep.subr.bf16.mxu0 0
        %1770 = vmatpush1.bf16.msra.mxu0 0
        %1771 = vmatprep.subr.bf16.mxu0 0
        %1772 = vmatpush1.bf16.msra.mxu0 0
        %1773 = vmatprep.subr.bf16.mxu0 0
        %1774 = vmatpush1.bf16.msra.mxu0 0
        %1775 = vmatprep.subr.bf16.mxu0 0
        %1776 = vmatpush1.bf16.msra.mxu0 0
        %1777 = vmatprep.subr.bf16.mxu0 0
        %1778 = vmatpush1.bf16.msra.mxu0 0
        %1779 = vmatprep.subr.bf16.mxu0 0
        %1780 = vmatpush1.bf16.msra.mxu0 0
        %1781 = vmatprep.subr.bf16.mxu0 0
        %1782 = vmatpush1.bf16.msra.mxu0 0
        %1783 = vmatprep.subr.bf16.mxu0 0
        %1784 = vmatpush1.bf16.msra.mxu0 0
        %1785 = vmatprep.subr.bf16.mxu0 0
        %1786 = vmatpush1.bf16.msra.mxu0 0
        %1787 = vmatprep.mubr.bf16.mxu0 0
        %1788 = vmatmul.mubr.bf16.gmra.mrb[0].mxu0 %v871
        %v1789 = vpop.f32.mrb[0].mxu0
        %v1790 = vadd.f32 0.0, %v1789
        %v1791 = vpop.f32.mrb[0].mxu0
        %v1792 = vpop.f32.mrb[0].mxu0
        %v1793 = vadd.f32 0.0, %v1792
        %v1794 = vpop.f32.mrb[0].mxu0
        %1795 = vdwg.mxu0
        %1796 = vmatprep.subr.bf16.mxu0 0
        %1797 = vmatpush1.bf16.msra.mxu0 %v1388
        %1798 = vmatprep.subr.bf16.mxu0 0
        %1799 = vmatpush1.bf16.msra.mxu0 %v1389
        %1800 = vmatprep.subr.bf16.mxu0 0
        %1801 = vmatpush1.bf16.msra.mxu0 %v1394
        %1802 = vmatprep.subr.bf16.mxu0 0
        %1803 = vmatpush1.bf16.msra.mxu0 0
        %1804 = vmatprep.subr.bf16.mxu0 0
        %1805 = vmatpush1.bf16.msra.mxu0 0
        %1806 = vmatprep.subr.bf16.mxu0 0
        %1807 = vmatpush1.bf16.msra.mxu0 0
        %1808 = vmatprep.subr.bf16.mxu0 0
        %1809 = vmatpush1.bf16.msra.mxu0 0
        %1810 = vmatprep.subr.bf16.mxu0 0
        %1811 = vmatpush1.bf16.msra.mxu0 0
        %1812 = vmatprep.subr.bf16.mxu0 0
        %1813 = vmatpush1.bf16.msra.mxu0 0
        %1814 = vmatprep.subr.bf16.mxu0 0
        %1815 = vmatpush1.bf16.msra.mxu0 0
        %1816 = vmatprep.subr.bf16.mxu0 0
        %1817 = vmatpush1.bf16.msra.mxu0 0
        %1818 = vmatprep.subr.bf16.mxu0 0
        %1819 = vmatpush1.bf16.msra.mxu0 0
        %1820 = vmatprep.subr.bf16.mxu0 0
        %1821 = vmatpush1.bf16.msra.mxu0 0
        %1822 = vmatprep.subr.bf16.mxu0 0
        %1823 = vmatpush1.bf16.msra.mxu0 0
        %1824 = vmatprep.subr.bf16.mxu0 0
        %1825 = vmatpush1.bf16.msra.mxu0 0
        %1826 = vmatprep.subr.bf16.mxu0 0
        %1827 = vmatpush1.bf16.msra.mxu0 0
        %1828 = vmatprep.mubr.bf16.mxu0 0
        %1829 = vmatmul.mubr.bf16.gmra.mrb[0].mxu0 %v871
        %v1830 = vpop.f32.mrb[0].mxu0
        %v1831 = vadd.f32 0.0, %v1830
        %v1832 = vpop.f32.mrb[0].mxu0
        %v1833 = vpop.f32.mrb[0].mxu0
        %v1834 = vadd.f32 0.0, %v1833
        %v1835 = vpop.f32.mrb[0].mxu0
        %1836 = vdwg.mxu0
        %1837 = vmatprep.subr.bf16.mxu0 0
        %1838 = vmatpush1.bf16.msra.mxu0 %v1447
        %1839 = vmatprep.subr.bf16.mxu0 0
        %1840 = vmatpush1.bf16.msra.mxu0 %v1448
        %1841 = vmatprep.subr.bf16.mxu0 0
        %1842 = vmatpush1.bf16.msra.mxu0 %v1453
        %1843 = vmatprep.subr.bf16.mxu0 0
        %1844 = vmatpush1.bf16.msra.mxu0 0
        %1845 = vmatprep.subr.bf16.mxu0 0
        %1846 = vmatpush1.bf16.msra.mxu0 0
        %1847 = vmatprep.subr.bf16.mxu0 0
        %1848 = vmatpush1.bf16.msra.mxu0 0
        %1849 = vmatprep.subr.bf16.mxu0 0
        %1850 = vmatpush1.bf16.msra.mxu0 0
        %1851 = vmatprep.subr.bf16.mxu0 0
        %1852 = vmatpush1.bf16.msra.mxu0 0
        %1853 = vmatprep.subr.bf16.mxu0 0
        %1854 = vmatpush1.bf16.msra.mxu0 0
        %1855 = vmatprep.subr.bf16.mxu0 0
        %1856 = vmatpush1.bf16.msra.mxu0 0
        %1857 = vmatprep.subr.bf16.mxu0 0
        %1858 = vmatpush1.bf16.msra.mxu0 0
        %1859 = vmatprep.subr.bf16.mxu0 0
        %1860 = vmatpush1.bf16.msra.mxu0 0
        %1861 = vmatprep.subr.bf16.mxu0 0
        %1862 = vmatpush1.bf16.msra.mxu0 0
        %1863 = vmatprep.subr.bf16.mxu0 0
        %1864 = vmatpush1.bf16.msra.mxu0 0
        %1865 = vmatprep.subr.bf16.mxu0 0
        %1866 = vmatpush1.bf16.msra.mxu0 0
        %1867 = vmatprep.subr.bf16.mxu0 0
        %1868 = vmatpush1.bf16.msra.mxu0 0
        %1869 = vmatprep.mubr.bf16.mxu0 0
        %1870 = vmatmul.mubr.bf16.gmra.mrb[0].mxu0 %v871
        %v1871 = vpop.f32.mrb[0].mxu0
        %v1872 = vadd.f32 0.0, %v1871
        %v1873 = vpop.f32.mrb[0].mxu0
        %v1874 = vpop.f32.mrb[0].mxu0
        %v1875 = vadd.f32 0.0, %v1874
        %v1876 = vpop.f32.mrb[0].mxu0
        %1877 = vdwg.mxu0
        %1878 = vmatprep.subr.bf16.mxu0 0
        %1879 = vmatpush1.bf16.msra.mxu0 %v1506
        %1880 = vmatprep.subr.bf16.mxu0 0
        %1881 = vmatpush1.bf16.msra.mxu0 %v1507
        %1882 = vmatprep.subr.bf16.mxu0 0
        %1883 = vmatpush1.bf16.msra.mxu0 %v1512
        %1884 = vmatprep.subr.bf16.mxu0 0
        %1885 = vmatpush1.bf16.msra.mxu0 0
        %1886 = vmatprep.subr.bf16.mxu0 0
        %1887 = vmatpush1.bf16.msra.mxu0 0
        %1888 = vmatprep.subr.bf16.mxu0 0
        %1889 = vmatpush1.bf16.msra.mxu0 0
        %1890 = vmatprep.subr.bf16.mxu0 0
        %1891 = vmatpush1.bf16.msra.mxu0 0
        %1892 = vmatprep.subr.bf16.mxu0 0
        %1893 = vmatpush1.bf16.msra.mxu0 0
        %1894 = vmatprep.subr.bf16.mxu0 0
        %1895 = vmatpush1.bf16.msra.mxu0 0
        %1896 = vmatprep.subr.bf16.mxu0 0
        %1897 = vmatpush1.bf16.msra.mxu0 0
        %1898 = vmatprep.subr.bf16.mxu0 0
        %1899 = vmatpush1.bf16.msra.mxu0 0
        %1900 = vmatprep.subr.bf16.mxu0 0
        %1901 = vmatpush1.bf16.msra.mxu0 0
        %1902 = vmatprep.subr.bf16.mxu0 0
        %1903 = vmatpush1.bf16.msra.mxu0 0
        %1904 = vmatprep.subr.bf16.mxu0 0
        %1905 = vmatpush1.bf16.msra.mxu0 0
        %1906 = vmatprep.subr.bf16.mxu0 0
        %1907 = vmatpush1.bf16.msra.mxu0 0
        %1908 = vmatprep.subr.bf16.mxu0 0
        %1909 = vmatpush1.bf16.msra.mxu0 0
        %1910 = vmatprep.mubr.bf16.mxu0 0
        %1911 = vmatmul.mubr.bf16.gmra.mrb[0].mxu0 %v871
        %v1912 = vpop.f32.mrb[0].mxu0
        %v1913 = vadd.f32 0.0, %v1912
        %v1914 = vpop.f32.mrb[0].mxu0
        %v1915 = vpop.f32.mrb[0].mxu0
        %v1916 = vadd.f32 0.0, %v1915
        %v1917 = vpop.f32.mrb[0].mxu0
        %1918 = vdwg.mxu0
        %1919 = vmatprep.subr.bf16.mxu0 0
        %1920 = vmatpush1.bf16.msra.mxu0 %v1565
        %1921 = vmatprep.subr.bf16.mxu0 0
        %1922 = vmatpush1.bf16.msra.mxu0 %v1566
        %1923 = vmatprep.subr.bf16.mxu0 0
        %1924 = vmatpush1.bf16.msra.mxu0 %v1571
        %1925 = vmatprep.subr.bf16.mxu0 0
        %1926 = vmatpush1.bf16.msra.mxu0 0
        %1927 = vmatprep.subr.bf16.mxu0 0
        %1928 = vmatpush1.bf16.msra.mxu0 0
        %1929 = vmatprep.subr.bf16.mxu0 0
        %1930 = vmatpush1.bf16.msra.mxu0 0
        %1931 = vmatprep.subr.bf16.mxu0 0
        %1932 = vmatpush1.bf16.msra.mxu0 0
        %1933 = vmatprep.subr.bf16.mxu0 0
        %1934 = vmatpush1.bf16.msra.mxu0 0
        %1935 = vmatprep.subr.bf16.mxu0 0
        %1936 = vmatpush1.bf16.msra.mxu0 0
        %1937 = vmatprep.subr.bf16.mxu0 0
        %1938 = vmatpush1.bf16.msra.mxu0 0
        %1939 = vmatprep.subr.bf16.mxu0 0
        %1940 = vmatpush1.bf16.msra.mxu0 0
        %1941 = vmatprep.subr.bf16.mxu0 0
        %1942 = vmatpush1.bf16.msra.mxu0 0
        %1943 = vmatprep.subr.bf16.mxu0 0
        %1944 = vmatpush1.bf16.msra.mxu0 0
        %1945 = vmatprep.subr.bf16.mxu0 0
        %1946 = vmatpush1.bf16.msra.mxu0 0
        %1947 = vmatprep.subr.bf16.mxu0 0
        %1948 = vmatpush1.bf16.msra.mxu0 0
        %1949 = vmatprep.subr.bf16.mxu0 0
        %1950 = vmatpush1.bf16.msra.mxu0 0
        %1951 = vmatprep.mubr.bf16.mxu0 0
        %1952 = vmatmul.mubr.bf16.gmra.mrb[0].mxu0 %v871
        %v1953 = vpop.f32.mrb[0].mxu0
        %v1954 = vadd.f32 0.0, %v1953
        %v1955 = vpop.f32.mrb[0].mxu0
        %v1956 = vpop.f32.mrb[0].mxu0
        %v1957 = vadd.f32 0.0, %v1956
        %v1958 = vpop.f32.mrb[0].mxu0
        %1959 = vdwg.mxu0
        %1960 = vmatprep.subr.bf16.mxu0 0
        %1961 = vmatpush1.bf16.msra.mxu0 %v1624
        %1962 = vmatprep.subr.bf16.mxu0 0
        %1963 = vmatpush1.bf16.msra.mxu0 %v1625
        %1964 = vmatprep.subr.bf16.mxu0 0
        %1965 = vmatpush1.bf16.msra.mxu0 %v1630
        %1966 = vmatprep.subr.bf16.mxu0 0
        %1967 = vmatpush1.bf16.msra.mxu0 0
        %1968 = vmatprep.subr.bf16.mxu0 0
        %1969 = vmatpush1.bf16.msra.mxu0 0
        %1970 = vmatprep.subr.bf16.mxu0 0
        %1971 = vmatpush1.bf16.msra.mxu0 0
        %1972 = vmatprep.subr.bf16.mxu0 0
        %1973 = vmatpush1.bf16.msra.mxu0 0
        %1974 = vmatprep.subr.bf16.mxu0 0
        %1975 = vmatpush1.bf16.msra.mxu0 0
        %1976 = vmatprep.subr.bf16.mxu0 0
        %1977 = vmatpush1.bf16.msra.mxu0 0
        %1978 = vmatprep.subr.bf16.mxu0 0
        %1979 = vmatpush1.bf16.msra.mxu0 0
        %1980 = vmatprep.subr.bf16.mxu0 0
        %1981 = vmatpush1.bf16.msra.mxu0 0
        %1982 = vmatprep.subr.bf16.mxu0 0
        %1983 = vmatpush1.bf16.msra.mxu0 0
        %1984 = vmatprep.subr.bf16.mxu0 0
        %1985 = vmatpush1.bf16.msra.mxu0 0
        %1986 = vmatprep.subr.bf16.mxu0 0
        %1987 = vmatpush1.bf16.msra.mxu0 0
        %1988 = vmatprep.subr.bf16.mxu0 0
        %1989 = vmatpush1.bf16.msra.mxu0 0
        %1990 = vmatprep.subr.bf16.mxu0 0
        %1991 = vmatpush1.bf16.msra.mxu0 0
        %1992 = vmatprep.mubr.bf16.mxu0 0
        %1993 = vmatmul.mubr.bf16.gmra.mrb[0].mxu0 %v871
        %v1994 = vpop.f32.mrb[0].mxu0
        %v1995 = vadd.f32 0.0, %v1994
        %v1996 = vpop.f32.mrb[0].mxu0
        %v1997 = vpop.f32.mrb[0].mxu0
        %v1998 = vadd.f32 0.0, %v1997
        %v1999 = vpop.f32.mrb[0].mxu0
        %2000 = vdwg.mxu0
        %v2006 = vunpack.c.l.b16 %v343
        %v2007 = vunpack.c.l.b16 %v344
        %v2008 = vunpack.c.l.b16 %v345
        %v2009 = vunpack.c.l.b16 %v346
        %v2010 = vunpack.c.l.b16 %v347
        %v2011 = vpack.c.b16 %v2007, %v2006
        %v2012 = vpack.c.b16 %v2009, %v2008
        %v2013 = vpack.c.b16 %v2010, %v2010
        %v2017 = vand.u32 %v2013, %v412
        %2019 = vmatprep.subr.bf16.mxu0 0
        %2020 = vmatpush1.bf16.msra.mxu0 %v2011
        %2021 = vmatprep.subr.bf16.mxu0 0
        %2022 = vmatpush1.bf16.msra.mxu0 %v2012
        %2023 = vmatprep.subr.bf16.mxu0 0
        %2024 = vmatpush1.bf16.msra.mxu0 %v2017
        %2025 = vmatprep.subr.bf16.mxu0 0
        %2026 = vmatpush1.bf16.msra.mxu0 0
        %2027 = vmatprep.subr.bf16.mxu0 0
        %2028 = vmatpush1.bf16.msra.mxu0 0
        %2029 = vmatprep.subr.bf16.mxu0 0
        %2030 = vmatpush1.bf16.msra.mxu0 0
        %2031 = vmatprep.subr.bf16.mxu0 0
        %2032 = vmatpush1.bf16.msra.mxu0 0
        %2033 = vmatprep.subr.bf16.mxu0 0
        %2034 = vmatpush1.bf16.msra.mxu0 0
        %2035 = vmatprep.subr.bf16.mxu0 0
        %2036 = vmatpush1.bf16.msra.mxu0 0
        %2037 = vmatprep.subr.bf16.mxu0 0
        %2038 = vmatpush1.bf16.msra.mxu0 0
        %2039 = vmatprep.subr.bf16.mxu0 0
        %2040 = vmatpush1.bf16.msra.mxu0 0
        %2041 = vmatprep.subr.bf16.mxu0 0
        %2042 = vmatpush1.bf16.msra.mxu0 0
        %2043 = vmatprep.subr.bf16.mxu0 0
        %2044 = vmatpush1.bf16.msra.mxu0 0
        %2045 = vmatprep.subr.bf16.mxu0 0
        %2046 = vmatpush1.bf16.msra.mxu0 0
        %2047 = vmatprep.subr.bf16.mxu0 0
        %2048 = vmatpush1.bf16.msra.mxu0 0
        %2049 = vmatprep.subr.bf16.mxu0 0
        %2050 = vmatpush1.bf16.msra.mxu0 0
        %2051 = vmatprep.mubr.bf16.mxu0 0
        %2052 = vmatmul.mubr.bf16.gmra.mrb[0].mxu0 %v408
        %v2053 = vpop.f32.mrb[0].mxu0
        %v2054 = vadd.f32 0.0, %v2053
        %v2055 = vpop.f32.mrb[0].mxu0
        %v2056 = vpop.f32.mrb[0].mxu0
        %v2057 = vadd.f32 0.0, %v2056
        %v2058 = vpop.f32.mrb[0].mxu0
        %2059 = vdwg.mxu0
        %v2065 = vunpack.c.l.b16 %v348
        %v2066 = vunpack.c.l.b16 %v349
        %v2067 = vunpack.c.l.b16 %v350
        %v2068 = vunpack.c.l.b16 %v351
        %v2069 = vunpack.c.l.b16 %v352
        %v2070 = vpack.c.b16 %v2066, %v2065
        %v2071 = vpack.c.b16 %v2068, %v2067
        %v2072 = vpack.c.b16 %v2069, %v2069
        %v2076 = vand.u32 %v2072, %v412
        %2078 = vmatprep.subr.bf16.mxu0 0
        %2079 = vmatpush1.bf16.msra.mxu0 %v2070
        %2080 = vmatprep.subr.bf16.mxu0 0
        %2081 = vmatpush1.bf16.msra.mxu0 %v2071
        %2082 = vmatprep.subr.bf16.mxu0 0
        %2083 = vmatpush1.bf16.msra.mxu0 %v2076
        %2084 = vmatprep.subr.bf16.mxu0 0
        %2085 = vmatpush1.bf16.msra.mxu0 0
        %2086 = vmatprep.subr.bf16.mxu0 0
        %2087 = vmatpush1.bf16.msra.mxu0 0
        %2088 = vmatprep.subr.bf16.mxu0 0
        %2089 = vmatpush1.bf16.msra.mxu0 0
        %2090 = vmatprep.subr.bf16.mxu0 0
        %2091 = vmatpush1.bf16.msra.mxu0 0
        %2092 = vmatprep.subr.bf16.mxu0 0
        %2093 = vmatpush1.bf16.msra.mxu0 0
        %2094 = vmatprep.subr.bf16.mxu0 0
        %2095 = vmatpush1.bf16.msra.mxu0 0
        %2096 = vmatprep.subr.bf16.mxu0 0
        %2097 = vmatpush1.bf16.msra.mxu0 0
        %2098 = vmatprep.subr.bf16.mxu0 0
        %2099 = vmatpush1.bf16.msra.mxu0 0
        %2100 = vmatprep.subr.bf16.mxu0 0
        %2101 = vmatpush1.bf16.msra.mxu0 0
        %2102 = vmatprep.subr.bf16.mxu0 0
        %2103 = vmatpush1.bf16.msra.mxu0 0
        %2104 = vmatprep.subr.bf16.mxu0 0
        %2105 = vmatpush1.bf16.msra.mxu0 0
        %2106 = vmatprep.subr.bf16.mxu0 0
        %2107 = vmatpush1.bf16.msra.mxu0 0
        %2108 = vmatprep.subr.bf16.mxu0 0
        %2109 = vmatpush1.bf16.msra.mxu0 0
        %2110 = vmatprep.mubr.bf16.mxu0 0
        %2111 = vmatmul.mubr.bf16.gmra.mrb[0].mxu0 %v408
        %v2112 = vpop.f32.mrb[0].mxu0
        %v2113 = vadd.f32 0.0, %v2112
        %v2114 = vpop.f32.mrb[0].mxu0
        %v2115 = vpop.f32.mrb[0].mxu0
        %v2116 = vadd.f32 0.0, %v2115
        %v2117 = vpop.f32.mrb[0].mxu0
        %2118 = vdwg.mxu0
        %v2124 = vunpack.c.l.b16 %v353
        %v2125 = vunpack.c.l.b16 %v354
        %v2126 = vunpack.c.l.b16 %v355
        %v2127 = vunpack.c.l.b16 %v356
        %v2128 = vunpack.c.l.b16 %v357
        %v2129 = vpack.c.b16 %v2125, %v2124
        %v2130 = vpack.c.b16 %v2127, %v2126
        %v2131 = vpack.c.b16 %v2128, %v2128
        %v2135 = vand.u32 %v2131, %v412
        %2137 = vmatprep.subr.bf16.mxu0 0
        %2138 = vmatpush1.bf16.msra.mxu0 %v2129
        %2139 = vmatprep.subr.bf16.mxu0 0
        %2140 = vmatpush1.bf16.msra.mxu0 %v2130
        %2141 = vmatprep.subr.bf16.mxu0 0
        %2142 = vmatpush1.bf16.msra.mxu0 %v2135
        %2143 = vmatprep.subr.bf16.mxu0 0
        %2144 = vmatpush1.bf16.msra.mxu0 0
        %2145 = vmatprep.subr.bf16.mxu0 0
        %2146 = vmatpush1.bf16.msra.mxu0 0
        %2147 = vmatprep.subr.bf16.mxu0 0
        %2148 = vmatpush1.bf16.msra.mxu0 0
        %2149 = vmatprep.subr.bf16.mxu0 0
        %2150 = vmatpush1.bf16.msra.mxu0 0
        %2151 = vmatprep.subr.bf16.mxu0 0
        %2152 = vmatpush1.bf16.msra.mxu0 0
        %2153 = vmatprep.subr.bf16.mxu0 0
        %2154 = vmatpush1.bf16.msra.mxu0 0
        %2155 = vmatprep.subr.bf16.mxu0 0
        %2156 = vmatpush1.bf16.msra.mxu0 0
        %2157 = vmatprep.subr.bf16.mxu0 0
        %2158 = vmatpush1.bf16.msra.mxu0 0
        %2159 = vmatprep.subr.bf16.mxu0 0
        %2160 = vmatpush1.bf16.msra.mxu0 0
        %2161 = vmatprep.subr.bf16.mxu0 0
        %2162 = vmatpush1.bf16.msra.mxu0 0
        %2163 = vmatprep.subr.bf16.mxu0 0
        %2164 = vmatpush1.bf16.msra.mxu0 0
        %2165 = vmatprep.subr.bf16.mxu0 0
        %2166 = vmatpush1.bf16.msra.mxu0 0
        %2167 = vmatprep.subr.bf16.mxu0 0
        %2168 = vmatpush1.bf16.msra.mxu0 0
        %2169 = vmatprep.mubr.bf16.mxu0 0
        %2170 = vmatmul.mubr.bf16.gmra.mrb[0].mxu0 %v408
        %v2171 = vpop.f32.mrb[0].mxu0
        %v2172 = vadd.f32 0.0, %v2171
        %v2173 = vpop.f32.mrb[0].mxu0
        %v2174 = vpop.f32.mrb[0].mxu0
        %v2175 = vadd.f32 0.0, %v2174
        %v2176 = vpop.f32.mrb[0].mxu0
        %2177 = vdwg.mxu0
        %v2183 = vunpack.c.l.b16 %v358
        %v2184 = vunpack.c.l.b16 %v359
        %v2185 = vunpack.c.l.b16 %v360
        %v2186 = vunpack.c.l.b16 %v361
        %v2187 = vunpack.c.l.b16 %v362
        %v2188 = vpack.c.b16 %v2184, %v2183
        %v2189 = vpack.c.b16 %v2186, %v2185
        %v2190 = vpack.c.b16 %v2187, %v2187
        %v2194 = vand.u32 %v2190, %v412
        %2196 = vmatprep.subr.bf16.mxu0 0
        %2197 = vmatpush1.bf16.msra.mxu0 %v2188
        %2198 = vmatprep.subr.bf16.mxu0 0
        %2199 = vmatpush1.bf16.msra.mxu0 %v2189
        %2200 = vmatprep.subr.bf16.mxu0 0
        %2201 = vmatpush1.bf16.msra.mxu0 %v2194
        %2202 = vmatprep.subr.bf16.mxu0 0
        %2203 = vmatpush1.bf16.msra.mxu0 0
        %2204 = vmatprep.subr.bf16.mxu0 0
        %2205 = vmatpush1.bf16.msra.mxu0 0
        %2206 = vmatprep.subr.bf16.mxu0 0
        %2207 = vmatpush1.bf16.msra.mxu0 0
        %2208 = vmatprep.subr.bf16.mxu0 0
        %2209 = vmatpush1.bf16.msra.mxu0 0
        %2210 = vmatprep.subr.bf16.mxu0 0
        %2211 = vmatpush1.bf16.msra.mxu0 0
        %2212 = vmatprep.subr.bf16.mxu0 0
        %2213 = vmatpush1.bf16.msra.mxu0 0
        %2214 = vmatprep.subr.bf16.mxu0 0
        %2215 = vmatpush1.bf16.msra.mxu0 0
        %2216 = vmatprep.subr.bf16.mxu0 0
        %2217 = vmatpush1.bf16.msra.mxu0 0
        %2218 = vmatprep.subr.bf16.mxu0 0
        %2219 = vmatpush1.bf16.msra.mxu0 0
        %2220 = vmatprep.subr.bf16.mxu0 0
        %2221 = vmatpush1.bf16.msra.mxu0 0
        %2222 = vmatprep.subr.bf16.mxu0 0
        %2223 = vmatpush1.bf16.msra.mxu0 0
        %2224 = vmatprep.subr.bf16.mxu0 0
        %2225 = vmatpush1.bf16.msra.mxu0 0
        %2226 = vmatprep.subr.bf16.mxu0 0
        %2227 = vmatpush1.bf16.msra.mxu0 0
        %2228 = vmatprep.mubr.bf16.mxu0 0
        %2229 = vmatmul.mubr.bf16.gmra.mrb[0].mxu0 %v408
        %v2230 = vpop.f32.mrb[0].mxu0
        %v2231 = vadd.f32 0.0, %v2230
        %v2232 = vpop.f32.mrb[0].mxu0
        %v2233 = vpop.f32.mrb[0].mxu0
        %v2234 = vadd.f32 0.0, %v2233
        %v2235 = vpop.f32.mrb[0].mxu0
        %2236 = vdwg.mxu0
        %v2242 = vunpack.c.l.b16 %v363
        %v2243 = vunpack.c.l.b16 %v364
        %v2244 = vunpack.c.l.b16 %v365
        %v2245 = vunpack.c.l.b16 %v366
        %v2246 = vunpack.c.l.b16 %v367
        %v2247 = vpack.c.b16 %v2243, %v2242
        %v2248 = vpack.c.b16 %v2245, %v2244
        %v2249 = vpack.c.b16 %v2246, %v2246
        %v2253 = vand.u32 %v2249, %v412
        %2255 = vmatprep.subr.bf16.mxu0 0
        %2256 = vmatpush1.bf16.msra.mxu0 %v2247
        %2257 = vmatprep.subr.bf16.mxu0 0
        %2258 = vmatpush1.bf16.msra.mxu0 %v2248
        %2259 = vmatprep.subr.bf16.mxu0 0
        %2260 = vmatpush1.bf16.msra.mxu0 %v2253
        %2261 = vmatprep.subr.bf16.mxu0 0
        %2262 = vmatpush1.bf16.msra.mxu0 0
        %2263 = vmatprep.subr.bf16.mxu0 0
        %2264 = vmatpush1.bf16.msra.mxu0 0
        %2265 = vmatprep.subr.bf16.mxu0 0
        %2266 = vmatpush1.bf16.msra.mxu0 0
        %2267 = vmatprep.subr.bf16.mxu0 0
        %2268 = vmatpush1.bf16.msra.mxu0 0
        %2269 = vmatprep.subr.bf16.mxu0 0
        %2270 = vmatpush1.bf16.msra.mxu0 0
        %2271 = vmatprep.subr.bf16.mxu0 0
        %2272 = vmatpush1.bf16.msra.mxu0 0
        %2273 = vmatprep.subr.bf16.mxu0 0
        %2274 = vmatpush1.bf16.msra.mxu0 0
        %2275 = vmatprep.subr.bf16.mxu0 0
        %2276 = vmatpush1.bf16.msra.mxu0 0
        %2277 = vmatprep.subr.bf16.mxu0 0
        %2278 = vmatpush1.bf16.msra.mxu0 0
        %2279 = vmatprep.subr.bf16.mxu0 0
        %2280 = vmatpush1.bf16.msra.mxu0 0
        %2281 = vmatprep.subr.bf16.mxu0 0
        %2282 = vmatpush1.bf16.msra.mxu0 0
        %2283 = vmatprep.subr.bf16.mxu0 0
        %2284 = vmatpush1.bf16.msra.mxu0 0
        %2285 = vmatprep.subr.bf16.mxu0 0
        %2286 = vmatpush1.bf16.msra.mxu0 0
        %2287 = vmatprep.mubr.bf16.mxu0 0
        %2288 = vmatmul.mubr.bf16.gmra.mrb[0].mxu0 %v408
        %v2289 = vpop.f32.mrb[0].mxu0
        %v2290 = vadd.f32 0.0, %v2289
        %v2291 = vpop.f32.mrb[0].mxu0
        %v2292 = vpop.f32.mrb[0].mxu0
        %v2293 = vadd.f32 0.0, %v2292
        %v2294 = vpop.f32.mrb[0].mxu0
        %2295 = vdwg.mxu0
        %v2301 = vunpack.c.l.b16 %v368
        %v2302 = vunpack.c.l.b16 %v369
        %v2303 = vunpack.c.l.b16 %v370
        %v2304 = vunpack.c.l.b16 %v371
        %v2305 = vunpack.c.l.b16 %v372
        %v2306 = vpack.c.b16 %v2302, %v2301
        %v2307 = vpack.c.b16 %v2304, %v2303
        %v2308 = vpack.c.b16 %v2305, %v2305
        %v2312 = vand.u32 %v2308, %v412
        %2314 = vmatprep.subr.bf16.mxu0 0
        %2315 = vmatpush1.bf16.msra.mxu0 %v2306
        %2316 = vmatprep.subr.bf16.mxu0 0
        %2317 = vmatpush1.bf16.msra.mxu0 %v2307
        %2318 = vmatprep.subr.bf16.mxu0 0
        %2319 = vmatpush1.bf16.msra.mxu0 %v2312
        %2320 = vmatprep.subr.bf16.mxu0 0
        %2321 = vmatpush1.bf16.msra.mxu0 0
        %2322 = vmatprep.subr.bf16.mxu0 0
        %2323 = vmatpush1.bf16.msra.mxu0 0
        %2324 = vmatprep.subr.bf16.mxu0 0
        %2325 = vmatpush1.bf16.msra.mxu0 0
        %2326 = vmatprep.subr.bf16.mxu0 0
        %2327 = vmatpush1.bf16.msra.mxu0 0
        %2328 = vmatprep.subr.bf16.mxu0 0
        %2329 = vmatpush1.bf16.msra.mxu0 0
        %2330 = vmatprep.subr.bf16.mxu0 0
        %2331 = vmatpush1.bf16.msra.mxu0 0
        %2332 = vmatprep.subr.bf16.mxu0 0
        %2333 = vmatpush1.bf16.msra.mxu0 0
        %2334 = vmatprep.subr.bf16.mxu0 0
        %2335 = vmatpush1.bf16.msra.mxu0 0
        %2336 = vmatprep.subr.bf16.mxu0 0
        %2337 = vmatpush1.bf16.msra.mxu0 0
        %2338 = vmatprep.subr.bf16.mxu0 0
        %2339 = vmatpush1.bf16.msra.mxu0 0
        %2340 = vmatprep.subr.bf16.mxu0 0
        %2341 = vmatpush1.bf16.msra.mxu0 0
        %2342 = vmatprep.subr.bf16.mxu0 0
        %2343 = vmatpush1.bf16.msra.mxu0 0
        %2344 = vmatprep.subr.bf16.mxu0 0
        %2345 = vmatpush1.bf16.msra.mxu0 0
        %2346 = vmatprep.mubr.bf16.mxu0 0
        %2347 = vmatmul.mubr.bf16.gmra.mrb[0].mxu0 %v408
        %v2348 = vpop.f32.mrb[0].mxu0
        %v2349 = vadd.f32 0.0, %v2348
        %v2350 = vpop.f32.mrb[0].mxu0
        %v2351 = vpop.f32.mrb[0].mxu0
        %v2352 = vadd.f32 0.0, %v2351
        %v2353 = vpop.f32.mrb[0].mxu0
        %2354 = vdwg.mxu0
        %v2360 = vunpack.c.l.b16 %v373
        %v2361 = vunpack.c.l.b16 %v374
        %v2362 = vunpack.c.l.b16 %v375
        %v2363 = vunpack.c.l.b16 %v376
        %v2364 = vunpack.c.l.b16 %v377
        %v2365 = vpack.c.b16 %v2361, %v2360
        %v2366 = vpack.c.b16 %v2363, %v2362
        %v2367 = vpack.c.b16 %v2364, %v2364
        %v2371 = vand.u32 %v2367, %v412
        %2373 = vmatprep.subr.bf16.mxu0 0
        %2374 = vmatpush1.bf16.msra.mxu0 %v2365
        %2375 = vmatprep.subr.bf16.mxu0 0
        %2376 = vmatpush1.bf16.msra.mxu0 %v2366
        %2377 = vmatprep.subr.bf16.mxu0 0
        %2378 = vmatpush1.bf16.msra.mxu0 %v2371
        %2379 = vmatprep.subr.bf16.mxu0 0
        %2380 = vmatpush1.bf16.msra.mxu0 0
        %2381 = vmatprep.subr.bf16.mxu0 0
        %2382 = vmatpush1.bf16.msra.mxu0 0
        %2383 = vmatprep.subr.bf16.mxu0 0
        %2384 = vmatpush1.bf16.msra.mxu0 0
        %2385 = vmatprep.subr.bf16.mxu0 0
        %2386 = vmatpush1.bf16.msra.mxu0 0
        %2387 = vmatprep.subr.bf16.mxu0 0
        %2388 = vmatpush1.bf16.msra.mxu0 0
        %2389 = vmatprep.subr.bf16.mxu0 0
        %2390 = vmatpush1.bf16.msra.mxu0 0
        %2391 = vmatprep.subr.bf16.mxu0 0
        %2392 = vmatpush1.bf16.msra.mxu0 0
        %2393 = vmatprep.subr.bf16.mxu0 0
        %2394 = vmatpush1.bf16.msra.mxu0 0
        %2395 = vmatprep.subr.bf16.mxu0 0
        %2396 = vmatpush1.bf16.msra.mxu0 0
        %2397 = vmatprep.subr.bf16.mxu0 0
        %2398 = vmatpush1.bf16.msra.mxu0 0
        %2399 = vmatprep.subr.bf16.mxu0 0
        %2400 = vmatpush1.bf16.msra.mxu0 0
        %2401 = vmatprep.subr.bf16.mxu0 0
        %2402 = vmatpush1.bf16.msra.mxu0 0
        %2403 = vmatprep.subr.bf16.mxu0 0
        %2404 = vmatpush1.bf16.msra.mxu0 0
        %2405 = vmatprep.mubr.bf16.mxu0 0
        %2406 = vmatmul.mubr.bf16.gmra.mrb[0].mxu0 %v408
        %v2407 = vpop.f32.mrb[0].mxu0
        %v2408 = vadd.f32 0.0, %v2407
        %v2409 = vpop.f32.mrb[0].mxu0
        %v2410 = vpop.f32.mrb[0].mxu0
        %v2411 = vadd.f32 0.0, %v2410
        %v2412 = vpop.f32.mrb[0].mxu0
        %2413 = vdwg.mxu0
        %v2419 = vunpack.c.l.b16 %v378
        %v2420 = vunpack.c.l.b16 %v379
        %v2421 = vunpack.c.l.b16 %v380
        %v2422 = vunpack.c.l.b16 %v381
        %v2423 = vunpack.c.l.b16 %v382
        %v2424 = vpack.c.b16 %v2420, %v2419
        %v2425 = vpack.c.b16 %v2422, %v2421
        %v2426 = vpack.c.b16 %v2423, %v2423
        %v2430 = vand.u32 %v2426, %v412
        %2432 = vmatprep.subr.bf16.mxu0 0
        %2433 = vmatpush1.bf16.msra.mxu0 %v2424
        %2434 = vmatprep.subr.bf16.mxu0 0
        %2435 = vmatpush1.bf16.msra.mxu0 %v2425
        %2436 = vmatprep.subr.bf16.mxu0 0
        %2437 = vmatpush1.bf16.msra.mxu0 %v2430
        %2438 = vmatprep.subr.bf16.mxu0 0
        %2439 = vmatpush1.bf16.msra.mxu0 0
        %2440 = vmatprep.subr.bf16.mxu0 0
        %2441 = vmatpush1.bf16.msra.mxu0 0
        %2442 = vmatprep.subr.bf16.mxu0 0
        %2443 = vmatpush1.bf16.msra.mxu0 0
        %2444 = vmatprep.subr.bf16.mxu0 0
        %2445 = vmatpush1.bf16.msra.mxu0 0
        %2446 = vmatprep.subr.bf16.mxu0 0
        %2447 = vmatpush1.bf16.msra.mxu0 0
        %2448 = vmatprep.subr.bf16.mxu0 0
        %2449 = vmatpush1.bf16.msra.mxu0 0
        %2450 = vmatprep.subr.bf16.mxu0 0
        %2451 = vmatpush1.bf16.msra.mxu0 0
        %2452 = vmatprep.subr.bf16.mxu0 0
        %2453 = vmatpush1.bf16.msra.mxu0 0
        %2454 = vmatprep.subr.bf16.mxu0 0
        %2455 = vmatpush1.bf16.msra.mxu0 0
        %2456 = vmatprep.subr.bf16.mxu0 0
        %2457 = vmatpush1.bf16.msra.mxu0 0
        %2458 = vmatprep.subr.bf16.mxu0 0
        %2459 = vmatpush1.bf16.msra.mxu0 0
        %2460 = vmatprep.subr.bf16.mxu0 0
        %2461 = vmatpush1.bf16.msra.mxu0 0
        %2462 = vmatprep.subr.bf16.mxu0 0
        %2463 = vmatpush1.bf16.msra.mxu0 0
        %2464 = vmatprep.mubr.bf16.mxu0 0
        %2465 = vmatmul.mubr.bf16.gmra.mrb[0].mxu0 %v408
        %v2466 = vpop.f32.mrb[0].mxu0
        %v2467 = vadd.f32 0.0, %v2466
        %v2468 = vpop.f32.mrb[0].mxu0
        %v2469 = vpop.f32.mrb[0].mxu0
        %v2470 = vadd.f32 0.0, %v2469
        %v2471 = vpop.f32.mrb[0].mxu0
        %2472 = vdwg.mxu0
        %2473 = vmatprep.subr.bf16.mxu0 0
        %2474 = vmatpush1.bf16.msra.mxu0 %v2011
        %2475 = vmatprep.subr.bf16.mxu0 0
        %2476 = vmatpush1.bf16.msra.mxu0 %v2012
        %2477 = vmatprep.subr.bf16.mxu0 0
        %2478 = vmatpush1.bf16.msra.mxu0 %v2017
        %2479 = vmatprep.subr.bf16.mxu0 0
        %2480 = vmatpush1.bf16.msra.mxu0 0
        %2481 = vmatprep.subr.bf16.mxu0 0
        %2482 = vmatpush1.bf16.msra.mxu0 0
        %2483 = vmatprep.subr.bf16.mxu0 0
        %2484 = vmatpush1.bf16.msra.mxu0 0
        %2485 = vmatprep.subr.bf16.mxu0 0
        %2486 = vmatpush1.bf16.msra.mxu0 0
        %2487 = vmatprep.subr.bf16.mxu0 0
        %2488 = vmatpush1.bf16.msra.mxu0 0
        %2489 = vmatprep.subr.bf16.mxu0 0
        %2490 = vmatpush1.bf16.msra.mxu0 0
        %2491 = vmatprep.subr.bf16.mxu0 0
        %2492 = vmatpush1.bf16.msra.mxu0 0
        %2493 = vmatprep.subr.bf16.mxu0 0
        %2494 = vmatpush1.bf16.msra.mxu0 0
        %2495 = vmatprep.subr.bf16.mxu0 0
        %2496 = vmatpush1.bf16.msra.mxu0 0
        %2497 = vmatprep.subr.bf16.mxu0 0
        %2498 = vmatpush1.bf16.msra.mxu0 0
        %2499 = vmatprep.subr.bf16.mxu0 0
        %2500 = vmatpush1.bf16.msra.mxu0 0
        %2501 = vmatprep.subr.bf16.mxu0 0
        %2502 = vmatpush1.bf16.msra.mxu0 0
        %2503 = vmatprep.subr.bf16.mxu0 0
        %2504 = vmatpush1.bf16.msra.mxu0 0
        %2505 = vmatprep.mubr.bf16.mxu0 0
        %2506 = vmatmul.mubr.bf16.gmra.mrb[0].mxu0 %v871
        %v2507 = vpop.f32.mrb[0].mxu0
        %v2508 = vadd.f32 0.0, %v2507
        %v2509 = vpop.f32.mrb[0].mxu0
        %v2510 = vpop.f32.mrb[0].mxu0
        %v2511 = vadd.f32 0.0, %v2510
        %v2512 = vpop.f32.mrb[0].mxu0
        %2513 = vdwg.mxu0
        %2514 = vmatprep.subr.bf16.mxu0 0
        %2515 = vmatpush1.bf16.msra.mxu0 %v2070
        %2516 = vmatprep.subr.bf16.mxu0 0
        %2517 = vmatpush1.bf16.msra.mxu0 %v2071
        %2518 = vmatprep.subr.bf16.mxu0 0
        %2519 = vmatpush1.bf16.msra.mxu0 %v2076
        %2520 = vmatprep.subr.bf16.mxu0 0
        %2521 = vmatpush1.bf16.msra.mxu0 0
        %2522 = vmatprep.subr.bf16.mxu0 0
        %2523 = vmatpush1.bf16.msra.mxu0 0
        %2524 = vmatprep.subr.bf16.mxu0 0
        %2525 = vmatpush1.bf16.msra.mxu0 0
        %2526 = vmatprep.subr.bf16.mxu0 0
        %2527 = vmatpush1.bf16.msra.mxu0 0
        %2528 = vmatprep.subr.bf16.mxu0 0
        %2529 = vmatpush1.bf16.msra.mxu0 0
        %2530 = vmatprep.subr.bf16.mxu0 0
        %2531 = vmatpush1.bf16.msra.mxu0 0
        %2532 = vmatprep.subr.bf16.mxu0 0
        %2533 = vmatpush1.bf16.msra.mxu0 0
        %2534 = vmatprep.subr.bf16.mxu0 0
        %2535 = vmatpush1.bf16.msra.mxu0 0
        %2536 = vmatprep.subr.bf16.mxu0 0
        %2537 = vmatpush1.bf16.msra.mxu0 0
        %2538 = vmatprep.subr.bf16.mxu0 0
        %2539 = vmatpush1.bf16.msra.mxu0 0
        %2540 = vmatprep.subr.bf16.mxu0 0
        %2541 = vmatpush1.bf16.msra.mxu0 0
        %2542 = vmatprep.subr.bf16.mxu0 0
        %2543 = vmatpush1.bf16.msra.mxu0 0
        %2544 = vmatprep.subr.bf16.mxu0 0
        %2545 = vmatpush1.bf16.msra.mxu0 0
        %2546 = vmatprep.mubr.bf16.mxu0 0
        %2547 = vmatmul.mubr.bf16.gmra.mrb[0].mxu0 %v871
        %v2548 = vpop.f32.mrb[0].mxu0
        %v2549 = vadd.f32 0.0, %v2548
        %v2550 = vpop.f32.mrb[0].mxu0
        %v2551 = vpop.f32.mrb[0].mxu0
        %v2552 = vadd.f32 0.0, %v2551
        %v2553 = vpop.f32.mrb[0].mxu0
        %2554 = vdwg.mxu0
        %2555 = vmatprep.subr.bf16.mxu0 0
        %2556 = vmatpush1.bf16.msra.mxu0 %v2129
        %2557 = vmatprep.subr.bf16.mxu0 0
        %2558 = vmatpush1.bf16.msra.mxu0 %v2130
        %2559 = vmatprep.subr.bf16.mxu0 0
        %2560 = vmatpush1.bf16.msra.mxu0 %v2135
        %2561 = vmatprep.subr.bf16.mxu0 0
        %2562 = vmatpush1.bf16.msra.mxu0 0
        %2563 = vmatprep.subr.bf16.mxu0 0
        %2564 = vmatpush1.bf16.msra.mxu0 0
        %2565 = vmatprep.subr.bf16.mxu0 0
        %2566 = vmatpush1.bf16.msra.mxu0 0
        %2567 = vmatprep.subr.bf16.mxu0 0
        %2568 = vmatpush1.bf16.msra.mxu0 0
        %2569 = vmatprep.subr.bf16.mxu0 0
        %2570 = vmatpush1.bf16.msra.mxu0 0
        %2571 = vmatprep.subr.bf16.mxu0 0
        %2572 = vmatpush1.bf16.msra.mxu0 0
        %2573 = vmatprep.subr.bf16.mxu0 0
        %2574 = vmatpush1.bf16.msra.mxu0 0
        %2575 = vmatprep.subr.bf16.mxu0 0
        %2576 = vmatpush1.bf16.msra.mxu0 0
        %2577 = vmatprep.subr.bf16.mxu0 0
        %2578 = vmatpush1.bf16.msra.mxu0 0
        %2579 = vmatprep.subr.bf16.mxu0 0
        %2580 = vmatpush1.bf16.msra.mxu0 0
        %2581 = vmatprep.subr.bf16.mxu0 0
        %2582 = vmatpush1.bf16.msra.mxu0 0
        %2583 = vmatprep.subr.bf16.mxu0 0
        %2584 = vmatpush1.bf16.msra.mxu0 0
        %2585 = vmatprep.subr.bf16.mxu0 0
        %2586 = vmatpush1.bf16.msra.mxu0 0
        %2587 = vmatprep.mubr.bf16.mxu0 0
        %2588 = vmatmul.mubr.bf16.gmra.mrb[0].mxu0 %v871
        %v2589 = vpop.f32.mrb[0].mxu0
        %v2590 = vadd.f32 0.0, %v2589
        %v2591 = vpop.f32.mrb[0].mxu0
        %v2592 = vpop.f32.mrb[0].mxu0
        %v2593 = vadd.f32 0.0, %v2592
        %v2594 = vpop.f32.mrb[0].mxu0
        %2595 = vdwg.mxu0
        %2596 = vmatprep.subr.bf16.mxu0 0
        %2597 = vmatpush1.bf16.msra.mxu0 %v2188
        %2598 = vmatprep.subr.bf16.mxu0 0
        %2599 = vmatpush1.bf16.msra.mxu0 %v2189
        %2600 = vmatprep.subr.bf16.mxu0 0
        %2601 = vmatpush1.bf16.msra.mxu0 %v2194
        %2602 = vmatprep.subr.bf16.mxu0 0
        %2603 = vmatpush1.bf16.msra.mxu0 0
        %2604 = vmatprep.subr.bf16.mxu0 0
        %2605 = vmatpush1.bf16.msra.mxu0 0
        %2606 = vmatprep.subr.bf16.mxu0 0
        %2607 = vmatpush1.bf16.msra.mxu0 0
        %2608 = vmatprep.subr.bf16.mxu0 0
        %2609 = vmatpush1.bf16.msra.mxu0 0
        %2610 = vmatprep.subr.bf16.mxu0 0
        %2611 = vmatpush1.bf16.msra.mxu0 0
        %2612 = vmatprep.subr.bf16.mxu0 0
        %2613 = vmatpush1.bf16.msra.mxu0 0
        %2614 = vmatprep.subr.bf16.mxu0 0
        %2615 = vmatpush1.bf16.msra.mxu0 0
        %2616 = vmatprep.subr.bf16.mxu0 0
        %2617 = vmatpush1.bf16.msra.mxu0 0
        %2618 = vmatprep.subr.bf16.mxu0 0
        %2619 = vmatpush1.bf16.msra.mxu0 0
        %2620 = vmatprep.subr.bf16.mxu0 0
        %2621 = vmatpush1.bf16.msra.mxu0 0
        %2622 = vmatprep.subr.bf16.mxu0 0
        %2623 = vmatpush1.bf16.msra.mxu0 0
        %2624 = vmatprep.subr.bf16.mxu0 0
        %2625 = vmatpush1.bf16.msra.mxu0 0
        %2626 = vmatprep.subr.bf16.mxu0 0
        %2627 = vmatpush1.bf16.msra.mxu0 0
        %2628 = vmatprep.mubr.bf16.mxu0 0
        %2629 = vmatmul.mubr.bf16.gmra.mrb[0].mxu0 %v871
        %v2630 = vpop.f32.mrb[0].mxu0
        %v2631 = vadd.f32 0.0, %v2630
        %v2632 = vpop.f32.mrb[0].mxu0
        %v2633 = vpop.f32.mrb[0].mxu0
        %v2634 = vadd.f32 0.0, %v2633
        %v2635 = vpop.f32.mrb[0].mxu0
        %2636 = vdwg.mxu0
        %2637 = vmatprep.subr.bf16.mxu0 0
        %2638 = vmatpush1.bf16.msra.mxu0 %v2247
        %2639 = vmatprep.subr.bf16.mxu0 0
        %2640 = vmatpush1.bf16.msra.mxu0 %v2248
        %2641 = vmatprep.subr.bf16.mxu0 0
        %2642 = vmatpush1.bf16.msra.mxu0 %v2253
        %2643 = vmatprep.subr.bf16.mxu0 0
        %2644 = vmatpush1.bf16.msra.mxu0 0
        %2645 = vmatprep.subr.bf16.mxu0 0
        %2646 = vmatpush1.bf16.msra.mxu0 0
        %2647 = vmatprep.subr.bf16.mxu0 0
        %2648 = vmatpush1.bf16.msra.mxu0 0
        %2649 = vmatprep.subr.bf16.mxu0 0
        %2650 = vmatpush1.bf16.msra.mxu0 0
        %2651 = vmatprep.subr.bf16.mxu0 0
        %2652 = vmatpush1.bf16.msra.mxu0 0
        %2653 = vmatprep.subr.bf16.mxu0 0
        %2654 = vmatpush1.bf16.msra.mxu0 0
        %2655 = vmatprep.subr.bf16.mxu0 0
        %2656 = vmatpush1.bf16.msra.mxu0 0
        %2657 = vmatprep.subr.bf16.mxu0 0
        %2658 = vmatpush1.bf16.msra.mxu0 0
        %2659 = vmatprep.subr.bf16.mxu0 0
        %2660 = vmatpush1.bf16.msra.mxu0 0
        %2661 = vmatprep.subr.bf16.mxu0 0
        %2662 = vmatpush1.bf16.msra.mxu0 0
        %2663 = vmatprep.subr.bf16.mxu0 0
        %2664 = vmatpush1.bf16.msra.mxu0 0
        %2665 = vmatprep.subr.bf16.mxu0 0
        %2666 = vmatpush1.bf16.msra.mxu0 0
        %2667 = vmatprep.subr.bf16.mxu0 0
        %2668 = vmatpush1.bf16.msra.mxu0 0
        %2669 = vmatprep.mubr.bf16.mxu0 0
        %2670 = vmatmul.mubr.bf16.gmra.mrb[0].mxu0 %v871
        %v2671 = vpop.f32.mrb[0].mxu0
        %v2672 = vadd.f32 0.0, %v2671
        %v2673 = vpop.f32.mrb[0].mxu0
        %v2674 = vpop.f32.mrb[0].mxu0
        %v2675 = vadd.f32 0.0, %v2674
        %v2676 = vpop.f32.mrb[0].mxu0
        %2677 = vdwg.mxu0
        %2678 = vmatprep.subr.bf16.mxu0 0
        %2679 = vmatpush1.bf16.msra.mxu0 %v2306
        %2680 = vmatprep.subr.bf16.mxu0 0
        %2681 = vmatpush1.bf16.msra.mxu0 %v2307
        %2682 = vmatprep.subr.bf16.mxu0 0
        %2683 = vmatpush1.bf16.msra.mxu0 %v2312
        %2684 = vmatprep.subr.bf16.mxu0 0
        %2685 = vmatpush1.bf16.msra.mxu0 0
        %2686 = vmatprep.subr.bf16.mxu0 0
        %2687 = vmatpush1.bf16.msra.mxu0 0
        %2688 = vmatprep.subr.bf16.mxu0 0
        %2689 = vmatpush1.bf16.msra.mxu0 0
        %2690 = vmatprep.subr.bf16.mxu0 0
        %2691 = vmatpush1.bf16.msra.mxu0 0
        %2692 = vmatprep.subr.bf16.mxu0 0
        %2693 = vmatpush1.bf16.msra.mxu0 0
        %2694 = vmatprep.subr.bf16.mxu0 0
        %2695 = vmatpush1.bf16.msra.mxu0 0
        %2696 = vmatprep.subr.bf16.mxu0 0
        %2697 = vmatpush1.bf16.msra.mxu0 0
        %2698 = vmatprep.subr.bf16.mxu0 0
        %2699 = vmatpush1.bf16.msra.mxu0 0
        %2700 = vmatprep.subr.bf16.mxu0 0
        %2701 = vmatpush1.bf16.msra.mxu0 0
        %2702 = vmatprep.subr.bf16.mxu0 0
        %2703 = vmatpush1.bf16.msra.mxu0 0
        %2704 = vmatprep.subr.bf16.mxu0 0
        %2705 = vmatpush1.bf16.msra.mxu0 0
        %2706 = vmatprep.subr.bf16.mxu0 0
        %2707 = vmatpush1.bf16.msra.mxu0 0
        %2708 = vmatprep.subr.bf16.mxu0 0
        %2709 = vmatpush1.bf16.msra.mxu0 0
        %2710 = vmatprep.mubr.bf16.mxu0 0
        %2711 = vmatmul.mubr.bf16.gmra.mrb[0].mxu0 %v871
        %v2712 = vpop.f32.mrb[0].mxu0
        %v2713 = vadd.f32 0.0, %v2712
        %v2714 = vpop.f32.mrb[0].mxu0
        %v2715 = vpop.f32.mrb[0].mxu0
        %v2716 = vadd.f32 0.0, %v2715
        %v2717 = vpop.f32.mrb[0].mxu0
        %2718 = vdwg.mxu0
        %2719 = vmatprep.subr.bf16.mxu0 0
        %2720 = vmatpush1.bf16.msra.mxu0 %v2365
        %2721 = vmatprep.subr.bf16.mxu0 0
        %2722 = vmatpush1.bf16.msra.mxu0 %v2366
        %2723 = vmatprep.subr.bf16.mxu0 0
        %2724 = vmatpush1.bf16.msra.mxu0 %v2371
        %2725 = vmatprep.subr.bf16.mxu0 0
        %2726 = vmatpush1.bf16.msra.mxu0 0
        %2727 = vmatprep.subr.bf16.mxu0 0
        %2728 = vmatpush1.bf16.msra.mxu0 0
        %2729 = vmatprep.subr.bf16.mxu0 0
        %2730 = vmatpush1.bf16.msra.mxu0 0
        %2731 = vmatprep.subr.bf16.mxu0 0
        %2732 = vmatpush1.bf16.msra.mxu0 0
        %2733 = vmatprep.subr.bf16.mxu0 0
        %2734 = vmatpush1.bf16.msra.mxu0 0
        %2735 = vmatprep.subr.bf16.mxu0 0
        %2736 = vmatpush1.bf16.msra.mxu0 0
        %2737 = vmatprep.subr.bf16.mxu0 0
        %2738 = vmatpush1.bf16.msra.mxu0 0
        %2739 = vmatprep.subr.bf16.mxu0 0
        %2740 = vmatpush1.bf16.msra.mxu0 0
        %2741 = vmatprep.subr.bf16.mxu0 0
        %2742 = vmatpush1.bf16.msra.mxu0 0
        %2743 = vmatprep.subr.bf16.mxu0 0
        %2744 = vmatpush1.bf16.msra.mxu0 0
        %2745 = vmatprep.subr.bf16.mxu0 0
        %2746 = vmatpush1.bf16.msra.mxu0 0
        %2747 = vmatprep.subr.bf16.mxu0 0
        %2748 = vmatpush1.bf16.msra.mxu0 0
        %2749 = vmatprep.subr.bf16.mxu0 0
        %2750 = vmatpush1.bf16.msra.mxu0 0
        %2751 = vmatprep.mubr.bf16.mxu0 0
        %2752 = vmatmul.mubr.bf16.gmra.mrb[0].mxu0 %v871
        %v2753 = vpop.f32.mrb[0].mxu0
        %v2754 = vadd.f32 0.0, %v2753
        %v2755 = vpop.f32.mrb[0].mxu0
        %v2756 = vpop.f32.mrb[0].mxu0
        %v2757 = vadd.f32 0.0, %v2756
        %v2758 = vpop.f32.mrb[0].mxu0
        %2759 = vdwg.mxu0
        %2760 = vmatprep.subr.bf16.mxu0 0
        %2761 = vmatpush1.bf16.msra.mxu0 %v2424
        %2762 = vmatprep.subr.bf16.mxu0 0
        %2763 = vmatpush1.bf16.msra.mxu0 %v2425
        %2764 = vmatprep.subr.bf16.mxu0 0
        %2765 = vmatpush1.bf16.msra.mxu0 %v2430
        %2766 = vmatprep.subr.bf16.mxu0 0
        %2767 = vmatpush1.bf16.msra.mxu0 0
        %2768 = vmatprep.subr.bf16.mxu0 0
        %2769 = vmatpush1.bf16.msra.mxu0 0
        %2770 = vmatprep.subr.bf16.mxu0 0
        %2771 = vmatpush1.bf16.msra.mxu0 0
        %2772 = vmatprep.subr.bf16.mxu0 0
        %2773 = vmatpush1.bf16.msra.mxu0 0
        %2774 = vmatprep.subr.bf16.mxu0 0
        %2775 = vmatpush1.bf16.msra.mxu0 0
        %2776 = vmatprep.subr.bf16.mxu0 0
        %2777 = vmatpush1.bf16.msra.mxu0 0
        %2778 = vmatprep.subr.bf16.mxu0 0
        %2779 = vmatpush1.bf16.msra.mxu0 0
        %2780 = vmatprep.subr.bf16.mxu0 0
        %2781 = vmatpush1.bf16.msra.mxu0 0
        %2782 = vmatprep.subr.bf16.mxu0 0
        %2783 = vmatpush1.bf16.msra.mxu0 0
        %2784 = vmatprep.subr.bf16.mxu0 0
        %2785 = vmatpush1.bf16.msra.mxu0 0
        %2786 = vmatprep.subr.bf16.mxu0 0
        %2787 = vmatpush1.bf16.msra.mxu0 0
        %2788 = vmatprep.subr.bf16.mxu0 0
        %2789 = vmatpush1.bf16.msra.mxu0 0
        %2790 = vmatprep.subr.bf16.mxu0 0
        %2791 = vmatpush1.bf16.msra.mxu0 0
        %2792 = vmatprep.mubr.bf16.mxu0 0
        %2793 = vmatmul.mubr.bf16.gmra.mrb[0].mxu0 %v871
        %v2794 = vpop.f32.mrb[0].mxu0
        %v2795 = vadd.f32 0.0, %v2794
        %v2796 = vpop.f32.mrb[0].mxu0
        %v2797 = vpop.f32.mrb[0].mxu0
        %v2798 = vadd.f32 0.0, %v2797
        %v2799 = vpop.f32.mrb[0].mxu0
        %2800 = vdwg.mxu0
        %v2801 = vpack.c.bf16 %v454, %v451
        %v2802 = vpack.c.bf16 %v513, %v510
        %v2803 = vpack.c.bf16 %v572, %v569
        %v2804 = vpack.c.bf16 %v631, %v628
        %v2805 = vpack.c.bf16 %v690, %v687
        %v2806 = vpack.c.bf16 %v749, %v746
        %v2807 = vpack.c.bf16 %v808, %v805
        %v2808 = vpack.c.bf16 %v867, %v864
        %v2809 = vpack.c.bf16 %v911, %v908
        %v2810 = vpack.c.bf16 %v952, %v949
        %v2811 = vpack.c.bf16 %v993, %v990
        %v2812 = vpack.c.bf16 %v1034, %v1031
        %v2813 = vpack.c.bf16 %v1075, %v1072
        %v2814 = vpack.c.bf16 %v1116, %v1113
        %v2815 = vpack.c.bf16 %v1157, %v1154
        %v2816 = vpack.c.bf16 %v1198, %v1195
        %v2817 = vpack.c.bf16 %v1257, %v1254
        %v2818 = vpack.c.bf16 %v1316, %v1313
        %v2819 = vpack.c.bf16 %v1375, %v1372
        %v2820 = vpack.c.bf16 %v1434, %v1431
        %v2821 = vpack.c.bf16 %v1493, %v1490
        %v2822 = vpack.c.bf16 %v1552, %v1549
        %v2823 = vpack.c.bf16 %v1611, %v1608
        %v2824 = vpack.c.bf16 %v1670, %v1667
        %v2825 = vpack.c.bf16 %v1711, %v1708
        %v2826 = vpack.c.bf16 %v1752, %v1749
        %v2827 = vpack.c.bf16 %v1793, %v1790
        %v2828 = vpack.c.bf16 %v1834, %v1831
        %v2829 = vpack.c.bf16 %v1875, %v1872
        %v2830 = vpack.c.bf16 %v1916, %v1913
        %v2831 = vpack.c.bf16 %v1957, %v1954
        %v2832 = vpack.c.bf16 %v1998, %v1995
        %vm2833 = vcmask 64512
        %v2835 = vsel %vm2833, %v2801, 0
        %v2838 = vsel %vm2833, %v2817, 0
        %2840 = vmatprep.subr.bf16.mxu0 0
        %2841 = vmatpush1.bf16.xpose.msra.mxu0 %v2838
        %2842 = vmatprep.subr.bf16.mxu0 0
        %2843 = vmatpush1.bf16.xpose.msra.mxu0 0
        %2844 = vmatprep.subr.bf16.mxu0 0
        %2845 = vmatpush1.bf16.xpose.msra.mxu0 0
        %2846 = vmatprep.subr.bf16.mxu0 0
        %2847 = vmatpush1.bf16.xpose.msra.mxu0 0
        %2848 = vmatprep.subr.bf16.mxu0 0
        %2849 = vmatpush1.bf16.xpose.msra.mxu0 0
        %2850 = vmatprep.subr.bf16.mxu0 0
        %2851 = vmatpush1.bf16.xpose.msra.mxu0 0
        %2852 = vmatprep.subr.bf16.mxu0 0
        %2853 = vmatpush1.bf16.xpose.msra.mxu0 0
        %2854 = vmatprep.subr.bf16.mxu0 0
        %2855 = vmatpush1.bf16.xpose.msra.mxu0 0
        %2856 = vmatprep.subr.bf16.mxu0 0
        %2857 = vmatpush1.bf16.xpose.msra.mxu0 0
        %2858 = vmatprep.subr.bf16.mxu0 0
        %2859 = vmatpush1.bf16.xpose.msra.mxu0 0
        %2860 = vmatprep.subr.bf16.mxu0 0
        %2861 = vmatpush1.bf16.xpose.msra.mxu0 0
        %2862 = vmatprep.subr.bf16.mxu0 0
        %2863 = vmatpush1.bf16.xpose.msra.mxu0 0
        %2864 = vmatprep.subr.bf16.mxu0 0
        %2865 = vmatpush1.bf16.xpose.msra.mxu0 0
        %2866 = vmatprep.subr.bf16.mxu0 0
        %2867 = vmatpush1.bf16.xpose.msra.mxu0 0
        %2868 = vmatprep.subr.bf16.mxu0 0
        %2869 = vmatpush1.bf16.xpose.msra.mxu0 0
        %2870 = vmatprep.subr.bf16.mxu0 0
        %2871 = vmatpush1.bf16.xpose.msra.mxu0 0
        %2872 = vmatprep.mubr.bf16.mxu0 0
        %2873 = vmatmul.mubr.bf16.gmra.mrb[0].mxu0 %v2835
        %v2874 = vpop.f32.mrb[0].mxu0
        %v2875 = vadd.f32 0.0, %v2874
        %v2876 = vpop.f32.mrb[0].mxu0
        %v2877 = vpop.f32.mrb[0].mxu0
        %v2878 = vadd.f32 0.0, %v2877
        %v2879 = vpop.f32.mrb[0].mxu0
        %2880 = vdwg.mxu0
        %v2882 = vsel %vm2833, %v2802, 0
        %v2885 = vsel %vm2833, %v2818, 0
        %2887 = vmatprep.subr.bf16.mxu0 0
        %2888 = vmatpush1.bf16.xpose.msra.mxu0 %v2885
        %2889 = vmatprep.subr.bf16.mxu0 0
        %2890 = vmatpush1.bf16.xpose.msra.mxu0 0
        %2891 = vmatprep.subr.bf16.mxu0 0
        %2892 = vmatpush1.bf16.xpose.msra.mxu0 0
        %2893 = vmatprep.subr.bf16.mxu0 0
        %2894 = vmatpush1.bf16.xpose.msra.mxu0 0
        %2895 = vmatprep.subr.bf16.mxu0 0
        %2896 = vmatpush1.bf16.xpose.msra.mxu0 0
        %2897 = vmatprep.subr.bf16.mxu0 0
        %2898 = vmatpush1.bf16.xpose.msra.mxu0 0
        %2899 = vmatprep.subr.bf16.mxu0 0
        %2900 = vmatpush1.bf16.xpose.msra.mxu0 0
        %2901 = vmatprep.subr.bf16.mxu0 0
        %2902 = vmatpush1.bf16.xpose.msra.mxu0 0
        %2903 = vmatprep.subr.bf16.mxu0 0
        %2904 = vmatpush1.bf16.xpose.msra.mxu0 0
        %2905 = vmatprep.subr.bf16.mxu0 0
        %2906 = vmatpush1.bf16.xpose.msra.mxu0 0
        %2907 = vmatprep.subr.bf16.mxu0 0
        %2908 = vmatpush1.bf16.xpose.msra.mxu0 0
        %2909 = vmatprep.subr.bf16.mxu0 0
        %2910 = vmatpush1.bf16.xpose.msra.mxu0 0
        %2911 = vmatprep.subr.bf16.mxu0 0
        %2912 = vmatpush1.bf16.xpose.msra.mxu0 0
        %2913 = vmatprep.subr.bf16.mxu0 0
        %2914 = vmatpush1.bf16.xpose.msra.mxu0 0
        %2915 = vmatprep.subr.bf16.mxu0 0
        %2916 = vmatpush1.bf16.xpose.msra.mxu0 0
        %2917 = vmatprep.subr.bf16.mxu0 0
        %2918 = vmatpush1.bf16.xpose.msra.mxu0 0
        %2919 = vmatprep.mubr.bf16.mxu0 0
        %2920 = vmatmul.mubr.bf16.gmra.mrb[0].mxu0 %v2882
        %v2921 = vpop.f32.mrb[0].mxu0
        %v2922 = vadd.f32 0.0, %v2921
        %v2923 = vpop.f32.mrb[0].mxu0
        %v2924 = vpop.f32.mrb[0].mxu0
        %v2925 = vadd.f32 0.0, %v2924
        %v2926 = vpop.f32.mrb[0].mxu0
        %2927 = vdwg.mxu0
        %v2929 = vsel %vm2833, %v2803, 0
        %v2932 = vsel %vm2833, %v2819, 0
        %2934 = vmatprep.subr.bf16.mxu0 0
        %2935 = vmatpush1.bf16.xpose.msra.mxu0 %v2932
        %2936 = vmatprep.subr.bf16.mxu0 0
        %2937 = vmatpush1.bf16.xpose.msra.mxu0 0
        %2938 = vmatprep.subr.bf16.mxu0 0
        %2939 = vmatpush1.bf16.xpose.msra.mxu0 0
        %2940 = vmatprep.subr.bf16.mxu0 0
        %2941 = vmatpush1.bf16.xpose.msra.mxu0 0
        %2942 = vmatprep.subr.bf16.mxu0 0
        %2943 = vmatpush1.bf16.xpose.msra.mxu0 0
        %2944 = vmatprep.subr.bf16.mxu0 0
        %2945 = vmatpush1.bf16.xpose.msra.mxu0 0
        %2946 = vmatprep.subr.bf16.mxu0 0
        %2947 = vmatpush1.bf16.xpose.msra.mxu0 0
        %2948 = vmatprep.subr.bf16.mxu0 0
        %2949 = vmatpush1.bf16.xpose.msra.mxu0 0
        %2950 = vmatprep.subr.bf16.mxu0 0
        %2951 = vmatpush1.bf16.xpose.msra.mxu0 0
        %2952 = vmatprep.subr.bf16.mxu0 0
        %2953 = vmatpush1.bf16.xpose.msra.mxu0 0
        %2954 = vmatprep.subr.bf16.mxu0 0
        %2955 = vmatpush1.bf16.xpose.msra.mxu0 0
        %2956 = vmatprep.subr.bf16.mxu0 0
        %2957 = vmatpush1.bf16.xpose.msra.mxu0 0
        %2958 = vmatprep.subr.bf16.mxu0 0
        %2959 = vmatpush1.bf16.xpose.msra.mxu0 0
        %2960 = vmatprep.subr.bf16.mxu0 0
        %2961 = vmatpush1.bf16.xpose.msra.mxu0 0
        %2962 = vmatprep.subr.bf16.mxu0 0
        %2963 = vmatpush1.bf16.xpose.msra.mxu0 0
        %2964 = vmatprep.subr.bf16.mxu0 0
        %2965 = vmatpush1.bf16.xpose.msra.mxu0 0
        %2966 = vmatprep.mubr.bf16.mxu0 0
        %2967 = vmatmul.mubr.bf16.gmra.mrb[0].mxu0 %v2929
        %v2968 = vpop.f32.mrb[0].mxu0
        %v2969 = vadd.f32 0.0, %v2968
        %v2970 = vpop.f32.mrb[0].mxu0
        %v2971 = vpop.f32.mrb[0].mxu0
        %v2972 = vadd.f32 0.0, %v2971
        %v2973 = vpop.f32.mrb[0].mxu0
        %2974 = vdwg.mxu0
        %v2976 = vsel %vm2833, %v2804, 0
        %v2979 = vsel %vm2833, %v2820, 0
        %2981 = vmatprep.subr.bf16.mxu0 0
        %2982 = vmatpush1.bf16.xpose.msra.mxu0 %v2979
        %2983 = vmatprep.subr.bf16.mxu0 0
        %2984 = vmatpush1.bf16.xpose.msra.mxu0 0
        %2985 = vmatprep.subr.bf16.mxu0 0
        %2986 = vmatpush1.bf16.xpose.msra.mxu0 0
        %2987 = vmatprep.subr.bf16.mxu0 0
        %2988 = vmatpush1.bf16.xpose.msra.mxu0 0
        %2989 = vmatprep.subr.bf16.mxu0 0
        %2990 = vmatpush1.bf16.xpose.msra.mxu0 0
        %2991 = vmatprep.subr.bf16.mxu0 0
        %2992 = vmatpush1.bf16.xpose.msra.mxu0 0
        %2993 = vmatprep.subr.bf16.mxu0 0
        %2994 = vmatpush1.bf16.xpose.msra.mxu0 0
        %2995 = vmatprep.subr.bf16.mxu0 0
        %2996 = vmatpush1.bf16.xpose.msra.mxu0 0
        %2997 = vmatprep.subr.bf16.mxu0 0
        %2998 = vmatpush1.bf16.xpose.msra.mxu0 0
        %2999 = vmatprep.subr.bf16.mxu0 0
        %3000 = vmatpush1.bf16.xpose.msra.mxu0 0
        %3001 = vmatprep.subr.bf16.mxu0 0
        %3002 = vmatpush1.bf16.xpose.msra.mxu0 0
        %3003 = vmatprep.subr.bf16.mxu0 0
        %3004 = vmatpush1.bf16.xpose.msra.mxu0 0
        %3005 = vmatprep.subr.bf16.mxu0 0
        %3006 = vmatpush1.bf16.xpose.msra.mxu0 0
        %3007 = vmatprep.subr.bf16.mxu0 0
        %3008 = vmatpush1.bf16.xpose.msra.mxu0 0
        %3009 = vmatprep.subr.bf16.mxu0 0
        %3010 = vmatpush1.bf16.xpose.msra.mxu0 0
        %3011 = vmatprep.subr.bf16.mxu0 0
        %3012 = vmatpush1.bf16.xpose.msra.mxu0 0
        %3013 = vmatprep.mubr.bf16.mxu0 0
        %3014 = vmatmul.mubr.bf16.gmra.mrb[0].mxu0 %v2976
        %v3015 = vpop.f32.mrb[0].mxu0
        %v3016 = vadd.f32 0.0, %v3015
        %v3017 = vpop.f32.mrb[0].mxu0
        %v3018 = vpop.f32.mrb[0].mxu0
        %v3019 = vadd.f32 0.0, %v3018
        %v3020 = vpop.f32.mrb[0].mxu0
        %3021 = vdwg.mxu0
        %v3023 = vsel %vm2833, %v2805, 0
        %v3026 = vsel %vm2833, %v2821, 0
        %3028 = vmatprep.subr.bf16.mxu0 0
        %3029 = vmatpush1.bf16.xpose.msra.mxu0 %v3026
        %3030 = vmatprep.subr.bf16.mxu0 0
        %3031 = vmatpush1.bf16.xpose.msra.mxu0 0
        %3032 = vmatprep.subr.bf16.mxu0 0
        %3033 = vmatpush1.bf16.xpose.msra.mxu0 0
        %3034 = vmatprep.subr.bf16.mxu0 0
        %3035 = vmatpush1.bf16.xpose.msra.mxu0 0
        %3036 = vmatprep.subr.bf16.mxu0 0
        %3037 = vmatpush1.bf16.xpose.msra.mxu0 0
        %3038 = vmatprep.subr.bf16.mxu0 0
        %3039 = vmatpush1.bf16.xpose.msra.mxu0 0
        %3040 = vmatprep.subr.bf16.mxu0 0
        %3041 = vmatpush1.bf16.xpose.msra.mxu0 0
        %3042 = vmatprep.subr.bf16.mxu0 0
        %3043 = vmatpush1.bf16.xpose.msra.mxu0 0
        %3044 = vmatprep.subr.bf16.mxu0 0
        %3045 = vmatpush1.bf16.xpose.msra.mxu0 0
        %3046 = vmatprep.subr.bf16.mxu0 0
        %3047 = vmatpush1.bf16.xpose.msra.mxu0 0
        %3048 = vmatprep.subr.bf16.mxu0 0
        %3049 = vmatpush1.bf16.xpose.msra.mxu0 0
        %3050 = vmatprep.subr.bf16.mxu0 0
        %3051 = vmatpush1.bf16.xpose.msra.mxu0 0
        %3052 = vmatprep.subr.bf16.mxu0 0
        %3053 = vmatpush1.bf16.xpose.msra.mxu0 0
        %3054 = vmatprep.subr.bf16.mxu0 0
        %3055 = vmatpush1.bf16.xpose.msra.mxu0 0
        %3056 = vmatprep.subr.bf16.mxu0 0
        %3057 = vmatpush1.bf16.xpose.msra.mxu0 0
        %3058 = vmatprep.subr.bf16.mxu0 0
        %3059 = vmatpush1.bf16.xpose.msra.mxu0 0
        %3060 = vmatprep.mubr.bf16.mxu0 0
        %3061 = vmatmul.mubr.bf16.gmra.mrb[0].mxu0 %v3023
        %v3062 = vpop.f32.mrb[0].mxu0
        %v3063 = vadd.f32 0.0, %v3062
        %v3064 = vpop.f32.mrb[0].mxu0
        %v3065 = vpop.f32.mrb[0].mxu0
        %v3066 = vadd.f32 0.0, %v3065
        %v3067 = vpop.f32.mrb[0].mxu0
        %3068 = vdwg.mxu0
        %v3070 = vsel %vm2833, %v2806, 0
        %v3073 = vsel %vm2833, %v2822, 0
        %3075 = vmatprep.subr.bf16.mxu0 0
        %3076 = vmatpush1.bf16.xpose.msra.mxu0 %v3073
        %3077 = vmatprep.subr.bf16.mxu0 0
        %3078 = vmatpush1.bf16.xpose.msra.mxu0 0
        %3079 = vmatprep.subr.bf16.mxu0 0
        %3080 = vmatpush1.bf16.xpose.msra.mxu0 0
        %3081 = vmatprep.subr.bf16.mxu0 0
        %3082 = vmatpush1.bf16.xpose.msra.mxu0 0
        %3083 = vmatprep.subr.bf16.mxu0 0
        %3084 = vmatpush1.bf16.xpose.msra.mxu0 0
        %3085 = vmatprep.subr.bf16.mxu0 0
        %3086 = vmatpush1.bf16.xpose.msra.mxu0 0
        %3087 = vmatprep.subr.bf16.mxu0 0
        %3088 = vmatpush1.bf16.xpose.msra.mxu0 0
        %3089 = vmatprep.subr.bf16.mxu0 0
        %3090 = vmatpush1.bf16.xpose.msra.mxu0 0
        %3091 = vmatprep.subr.bf16.mxu0 0
        %3092 = vmatpush1.bf16.xpose.msra.mxu0 0
        %3093 = vmatprep.subr.bf16.mxu0 0
        %3094 = vmatpush1.bf16.xpose.msra.mxu0 0
        %3095 = vmatprep.subr.bf16.mxu0 0
        %3096 = vmatpush1.bf16.xpose.msra.mxu0 0
        %3097 = vmatprep.subr.bf16.mxu0 0
        %3098 = vmatpush1.bf16.xpose.msra.mxu0 0
        %3099 = vmatprep.subr.bf16.mxu0 0
        %3100 = vmatpush1.bf16.xpose.msra.mxu0 0
        %3101 = vmatprep.subr.bf16.mxu0 0
        %3102 = vmatpush1.bf16.xpose.msra.mxu0 0
        %3103 = vmatprep.subr.bf16.mxu0 0
        %3104 = vmatpush1.bf16.xpose.msra.mxu0 0
        %3105 = vmatprep.subr.bf16.mxu0 0
        %3106 = vmatpush1.bf16.xpose.msra.mxu0 0
        %3107 = vmatprep.mubr.bf16.mxu0 0
        %3108 = vmatmul.mubr.bf16.gmra.mrb[0].mxu0 %v3070
        %v3109 = vpop.f32.mrb[0].mxu0
        %v3110 = vadd.f32 0.0, %v3109
        %v3111 = vpop.f32.mrb[0].mxu0
        %v3112 = vpop.f32.mrb[0].mxu0
        %v3113 = vadd.f32 0.0, %v3112
        %v3114 = vpop.f32.mrb[0].mxu0
        %3115 = vdwg.mxu0
        %v3117 = vsel %vm2833, %v2807, 0
        %v3120 = vsel %vm2833, %v2823, 0
        %3122 = vmatprep.subr.bf16.mxu0 0
        %3123 = vmatpush1.bf16.xpose.msra.mxu0 %v3120
        %3124 = vmatprep.subr.bf16.mxu0 0
        %3125 = vmatpush1.bf16.xpose.msra.mxu0 0
        %3126 = vmatprep.subr.bf16.mxu0 0
        %3127 = vmatpush1.bf16.xpose.msra.mxu0 0
        %3128 = vmatprep.subr.bf16.mxu0 0
        %3129 = vmatpush1.bf16.xpose.msra.mxu0 0
        %3130 = vmatprep.subr.bf16.mxu0 0
        %3131 = vmatpush1.bf16.xpose.msra.mxu0 0
        %3132 = vmatprep.subr.bf16.mxu0 0
        %3133 = vmatpush1.bf16.xpose.msra.mxu0 0
        %3134 = vmatprep.subr.bf16.mxu0 0
        %3135 = vmatpush1.bf16.xpose.msra.mxu0 0
        %3136 = vmatprep.subr.bf16.mxu0 0
        %3137 = vmatpush1.bf16.xpose.msra.mxu0 0
        %3138 = vmatprep.subr.bf16.mxu0 0
        %3139 = vmatpush1.bf16.xpose.msra.mxu0 0
        %3140 = vmatprep.subr.bf16.mxu0 0
        %3141 = vmatpush1.bf16.xpose.msra.mxu0 0
        %3142 = vmatprep.subr.bf16.mxu0 0
        %3143 = vmatpush1.bf16.xpose.msra.mxu0 0
        %3144 = vmatprep.subr.bf16.mxu0 0
        %3145 = vmatpush1.bf16.xpose.msra.mxu0 0
        %3146 = vmatprep.subr.bf16.mxu0 0
        %3147 = vmatpush1.bf16.xpose.msra.mxu0 0
        %3148 = vmatprep.subr.bf16.mxu0 0
        %3149 = vmatpush1.bf16.xpose.msra.mxu0 0
        %3150 = vmatprep.subr.bf16.mxu0 0
        %3151 = vmatpush1.bf16.xpose.msra.mxu0 0
        %3152 = vmatprep.subr.bf16.mxu0 0
        %3153 = vmatpush1.bf16.xpose.msra.mxu0 0
        %3154 = vmatprep.mubr.bf16.mxu0 0
        %3155 = vmatmul.mubr.bf16.gmra.mrb[0].mxu0 %v3117
        %v3156 = vpop.f32.mrb[0].mxu0
        %v3157 = vadd.f32 0.0, %v3156
        %v3158 = vpop.f32.mrb[0].mxu0
        %v3159 = vpop.f32.mrb[0].mxu0
        %v3160 = vadd.f32 0.0, %v3159
        %v3161 = vpop.f32.mrb[0].mxu0
        %3162 = vdwg.mxu0
        %v3164 = vsel %vm2833, %v2808, 0
        %v3167 = vsel %vm2833, %v2824, 0
        %3169 = vmatprep.subr.bf16.mxu0 0
        %3170 = vmatpush1.bf16.xpose.msra.mxu0 %v3167
        %3171 = vmatprep.subr.bf16.mxu0 0
        %3172 = vmatpush1.bf16.xpose.msra.mxu0 0
        %3173 = vmatprep.subr.bf16.mxu0 0
        %3174 = vmatpush1.bf16.xpose.msra.mxu0 0
        %3175 = vmatprep.subr.bf16.mxu0 0
        %3176 = vmatpush1.bf16.xpose.msra.mxu0 0
        %3177 = vmatprep.subr.bf16.mxu0 0
        %3178 = vmatpush1.bf16.xpose.msra.mxu0 0
        %3179 = vmatprep.subr.bf16.mxu0 0
        %3180 = vmatpush1.bf16.xpose.msra.mxu0 0
        %3181 = vmatprep.subr.bf16.mxu0 0
        %3182 = vmatpush1.bf16.xpose.msra.mxu0 0
        %3183 = vmatprep.subr.bf16.mxu0 0
        %3184 = vmatpush1.bf16.xpose.msra.mxu0 0
        %3185 = vmatprep.subr.bf16.mxu0 0
        %3186 = vmatpush1.bf16.xpose.msra.mxu0 0
        %3187 = vmatprep.subr.bf16.mxu0 0
        %3188 = vmatpush1.bf16.xpose.msra.mxu0 0
        %3189 = vmatprep.subr.bf16.mxu0 0
        %3190 = vmatpush1.bf16.xpose.msra.mxu0 0
        %3191 = vmatprep.subr.bf16.mxu0 0
        %3192 = vmatpush1.bf16.xpose.msra.mxu0 0
        %3193 = vmatprep.subr.bf16.mxu0 0
        %3194 = vmatpush1.bf16.xpose.msra.mxu0 0
        %3195 = vmatprep.subr.bf16.mxu0 0
        %3196 = vmatpush1.bf16.xpose.msra.mxu0 0
        %3197 = vmatprep.subr.bf16.mxu0 0
        %3198 = vmatpush1.bf16.xpose.msra.mxu0 0
        %3199 = vmatprep.subr.bf16.mxu0 0
        %3200 = vmatpush1.bf16.xpose.msra.mxu0 0
        %3201 = vmatprep.mubr.bf16.mxu0 0
        %3202 = vmatmul.mubr.bf16.gmra.mrb[0].mxu0 %v3164
        %v3203 = vpop.f32.mrb[0].mxu0
        %v3204 = vadd.f32 0.0, %v3203
        %v3205 = vpop.f32.mrb[0].mxu0
        %v3206 = vpop.f32.mrb[0].mxu0
        %v3207 = vadd.f32 0.0, %v3206
        %v3208 = vpop.f32.mrb[0].mxu0
        %3209 = vdwg.mxu0
        %v3211 = vsel %vm2833, %v2809, 0
        %v3214 = vsel %vm2833, %v2825, 0
        %3216 = vmatprep.subr.bf16.mxu0 0
        %3217 = vmatpush1.bf16.xpose.msra.mxu0 %v3214
        %3218 = vmatprep.subr.bf16.mxu0 0
        %3219 = vmatpush1.bf16.xpose.msra.mxu0 0
        %3220 = vmatprep.subr.bf16.mxu0 0
        %3221 = vmatpush1.bf16.xpose.msra.mxu0 0
        %3222 = vmatprep.subr.bf16.mxu0 0
        %3223 = vmatpush1.bf16.xpose.msra.mxu0 0
        %3224 = vmatprep.subr.bf16.mxu0 0
        %3225 = vmatpush1.bf16.xpose.msra.mxu0 0
        %3226 = vmatprep.subr.bf16.mxu0 0
        %3227 = vmatpush1.bf16.xpose.msra.mxu0 0
        %3228 = vmatprep.subr.bf16.mxu0 0
        %3229 = vmatpush1.bf16.xpose.msra.mxu0 0
        %3230 = vmatprep.subr.bf16.mxu0 0
        %3231 = vmatpush1.bf16.xpose.msra.mxu0 0
        %3232 = vmatprep.subr.bf16.mxu0 0
        %3233 = vmatpush1.bf16.xpose.msra.mxu0 0
        %3234 = vmatprep.subr.bf16.mxu0 0
        %3235 = vmatpush1.bf16.xpose.msra.mxu0 0
        %3236 = vmatprep.subr.bf16.mxu0 0
        %3237 = vmatpush1.bf16.xpose.msra.mxu0 0
        %3238 = vmatprep.subr.bf16.mxu0 0
        %3239 = vmatpush1.bf16.xpose.msra.mxu0 0
        %3240 = vmatprep.subr.bf16.mxu0 0
        %3241 = vmatpush1.bf16.xpose.msra.mxu0 0
        %3242 = vmatprep.subr.bf16.mxu0 0
        %3243 = vmatpush1.bf16.xpose.msra.mxu0 0
        %3244 = vmatprep.subr.bf16.mxu0 0
        %3245 = vmatpush1.bf16.xpose.msra.mxu0 0
        %3246 = vmatprep.subr.bf16.mxu0 0
        %3247 = vmatpush1.bf16.xpose.msra.mxu0 0
        %3248 = vmatprep.mubr.bf16.mxu0 0
        %3249 = vmatmul.mubr.bf16.gmra.mrb[0].mxu0 %v3211
        %v3250 = vpop.f32.mrb[0].mxu0
        %v3251 = vadd.f32 0.0, %v3250
        %v3252 = vpop.f32.mrb[0].mxu0
        %v3253 = vpop.f32.mrb[0].mxu0
        %v3254 = vadd.f32 0.0, %v3253
        %v3255 = vpop.f32.mrb[0].mxu0
        %3256 = vdwg.mxu0
        %v3258 = vsel %vm2833, %v2810, 0
        %v3261 = vsel %vm2833, %v2826, 0
        %3263 = vmatprep.subr.bf16.mxu0 0
        %3264 = vmatpush1.bf16.xpose.msra.mxu0 %v3261
        %3265 = vmatprep.subr.bf16.mxu0 0
        %3266 = vmatpush1.bf16.xpose.msra.mxu0 0
        %3267 = vmatprep.subr.bf16.mxu0 0
        %3268 = vmatpush1.bf16.xpose.msra.mxu0 0
        %3269 = vmatprep.subr.bf16.mxu0 0
        %3270 = vmatpush1.bf16.xpose.msra.mxu0 0
        %3271 = vmatprep.subr.bf16.mxu0 0
        %3272 = vmatpush1.bf16.xpose.msra.mxu0 0
        %3273 = vmatprep.subr.bf16.mxu0 0
        %3274 = vmatpush1.bf16.xpose.msra.mxu0 0
        %3275 = vmatprep.subr.bf16.mxu0 0
        %3276 = vmatpush1.bf16.xpose.msra.mxu0 0
        %3277 = vmatprep.subr.bf16.mxu0 0
        %3278 = vmatpush1.bf16.xpose.msra.mxu0 0
        %3279 = vmatprep.subr.bf16.mxu0 0
        %3280 = vmatpush1.bf16.xpose.msra.mxu0 0
        %3281 = vmatprep.subr.bf16.mxu0 0
        %3282 = vmatpush1.bf16.xpose.msra.mxu0 0
        %3283 = vmatprep.subr.bf16.mxu0 0
        %3284 = vmatpush1.bf16.xpose.msra.mxu0 0
        %3285 = vmatprep.subr.bf16.mxu0 0
        %3286 = vmatpush1.bf16.xpose.msra.mxu0 0
        %3287 = vmatprep.subr.bf16.mxu0 0
        %3288 = vmatpush1.bf16.xpose.msra.mxu0 0
        %3289 = vmatprep.subr.bf16.mxu0 0
        %3290 = vmatpush1.bf16.xpose.msra.mxu0 0
        %3291 = vmatprep.subr.bf16.mxu0 0
        %3292 = vmatpush1.bf16.xpose.msra.mxu0 0
        %3293 = vmatprep.subr.bf16.mxu0 0
        %3294 = vmatpush1.bf16.xpose.msra.mxu0 0
        %3295 = vmatprep.mubr.bf16.mxu0 0
        %3296 = vmatmul.mubr.bf16.gmra.mrb[0].mxu0 %v3258
        %v3297 = vpop.f32.mrb[0].mxu0
        %v3298 = vadd.f32 0.0, %v3297
        %v3299 = vpop.f32.mrb[0].mxu0
        %v3300 = vpop.f32.mrb[0].mxu0
        %v3301 = vadd.f32 0.0, %v3300
        %v3302 = vpop.f32.mrb[0].mxu0
        %3303 = vdwg.mxu0
        %v3305 = vsel %vm2833, %v2811, 0
        %v3308 = vsel %vm2833, %v2827, 0
        %3310 = vmatprep.subr.bf16.mxu0 0
        %3311 = vmatpush1.bf16.xpose.msra.mxu0 %v3308
        %3312 = vmatprep.subr.bf16.mxu0 0
        %3313 = vmatpush1.bf16.xpose.msra.mxu0 0
        %3314 = vmatprep.subr.bf16.mxu0 0
        %3315 = vmatpush1.bf16.xpose.msra.mxu0 0
        %3316 = vmatprep.subr.bf16.mxu0 0
        %3317 = vmatpush1.bf16.xpose.msra.mxu0 0
        %3318 = vmatprep.subr.bf16.mxu0 0
        %3319 = vmatpush1.bf16.xpose.msra.mxu0 0
        %3320 = vmatprep.subr.bf16.mxu0 0
        %3321 = vmatpush1.bf16.xpose.msra.mxu0 0
        %3322 = vmatprep.subr.bf16.mxu0 0
        %3323 = vmatpush1.bf16.xpose.msra.mxu0 0
        %3324 = vmatprep.subr.bf16.mxu0 0
        %3325 = vmatpush1.bf16.xpose.msra.mxu0 0
        %3326 = vmatprep.subr.bf16.mxu0 0
        %3327 = vmatpush1.bf16.xpose.msra.mxu0 0
        %3328 = vmatprep.subr.bf16.mxu0 0
        %3329 = vmatpush1.bf16.xpose.msra.mxu0 0
        %3330 = vmatprep.subr.bf16.mxu0 0
        %3331 = vmatpush1.bf16.xpose.msra.mxu0 0
        %3332 = vmatprep.subr.bf16.mxu0 0
        %3333 = vmatpush1.bf16.xpose.msra.mxu0 0
        %3334 = vmatprep.subr.bf16.mxu0 0
        %3335 = vmatpush1.bf16.xpose.msra.mxu0 0
        %3336 = vmatprep.subr.bf16.mxu0 0
        %3337 = vmatpush1.bf16.xpose.msra.mxu0 0
        %3338 = vmatprep.subr.bf16.mxu0 0
        %3339 = vmatpush1.bf16.xpose.msra.mxu0 0
        %3340 = vmatprep.subr.bf16.mxu0 0
        %3341 = vmatpush1.bf16.xpose.msra.mxu0 0
        %3342 = vmatprep.mubr.bf16.mxu0 0
        %3343 = vmatmul.mubr.bf16.gmra.mrb[0].mxu0 %v3305
        %v3344 = vpop.f32.mrb[0].mxu0
        %v3345 = vadd.f32 0.0, %v3344
        %v3346 = vpop.f32.mrb[0].mxu0
        %v3347 = vpop.f32.mrb[0].mxu0
        %v3348 = vadd.f32 0.0, %v3347
        %v3349 = vpop.f32.mrb[0].mxu0
        %3350 = vdwg.mxu0
        %v3352 = vsel %vm2833, %v2812, 0
        %v3355 = vsel %vm2833, %v2828, 0
        %3357 = vmatprep.subr.bf16.mxu0 0
        %3358 = vmatpush1.bf16.xpose.msra.mxu0 %v3355
        %3359 = vmatprep.subr.bf16.mxu0 0
        %3360 = vmatpush1.bf16.xpose.msra.mxu0 0
        %3361 = vmatprep.subr.bf16.mxu0 0
        %3362 = vmatpush1.bf16.xpose.msra.mxu0 0
        %3363 = vmatprep.subr.bf16.mxu0 0
        %3364 = vmatpush1.bf16.xpose.msra.mxu0 0
        %3365 = vmatprep.subr.bf16.mxu0 0
        %3366 = vmatpush1.bf16.xpose.msra.mxu0 0
        %3367 = vmatprep.subr.bf16.mxu0 0
        %3368 = vmatpush1.bf16.xpose.msra.mxu0 0
        %3369 = vmatprep.subr.bf16.mxu0 0
        %3370 = vmatpush1.bf16.xpose.msra.mxu0 0
        %3371 = vmatprep.subr.bf16.mxu0 0
        %3372 = vmatpush1.bf16.xpose.msra.mxu0 0
        %3373 = vmatprep.subr.bf16.mxu0 0
        %3374 = vmatpush1.bf16.xpose.msra.mxu0 0
        %3375 = vmatprep.subr.bf16.mxu0 0
        %3376 = vmatpush1.bf16.xpose.msra.mxu0 0
        %3377 = vmatprep.subr.bf16.mxu0 0
        %3378 = vmatpush1.bf16.xpose.msra.mxu0 0
        %3379 = vmatprep.subr.bf16.mxu0 0
        %3380 = vmatpush1.bf16.xpose.msra.mxu0 0
        %3381 = vmatprep.subr.bf16.mxu0 0
        %3382 = vmatpush1.bf16.xpose.msra.mxu0 0
        %3383 = vmatprep.subr.bf16.mxu0 0
        %3384 = vmatpush1.bf16.xpose.msra.mxu0 0
        %3385 = vmatprep.subr.bf16.mxu0 0
        %3386 = vmatpush1.bf16.xpose.msra.mxu0 0
        %3387 = vmatprep.subr.bf16.mxu0 0
        %3388 = vmatpush1.bf16.xpose.msra.mxu0 0
        %3389 = vmatprep.mubr.bf16.mxu0 0
        %3390 = vmatmul.mubr.bf16.gmra.mrb[0].mxu0 %v3352
        %v3391 = vpop.f32.mrb[0].mxu0
        %v3392 = vadd.f32 0.0, %v3391
        %v3393 = vpop.f32.mrb[0].mxu0
        %v3394 = vpop.f32.mrb[0].mxu0
        %v3395 = vadd.f32 0.0, %v3394
        %v3396 = vpop.f32.mrb[0].mxu0
        %3397 = vdwg.mxu0
        %v3399 = vsel %vm2833, %v2813, 0
        %v3402 = vsel %vm2833, %v2829, 0
        %3404 = vmatprep.subr.bf16.mxu0 0
        %3405 = vmatpush1.bf16.xpose.msra.mxu0 %v3402
        %3406 = vmatprep.subr.bf16.mxu0 0
        %3407 = vmatpush1.bf16.xpose.msra.mxu0 0
        %3408 = vmatprep.subr.bf16.mxu0 0
        %3409 = vmatpush1.bf16.xpose.msra.mxu0 0
        %3410 = vmatprep.subr.bf16.mxu0 0
        %3411 = vmatpush1.bf16.xpose.msra.mxu0 0
        %3412 = vmatprep.subr.bf16.mxu0 0
        %3413 = vmatpush1.bf16.xpose.msra.mxu0 0
        %3414 = vmatprep.subr.bf16.mxu0 0
        %3415 = vmatpush1.bf16.xpose.msra.mxu0 0
        %3416 = vmatprep.subr.bf16.mxu0 0
        %3417 = vmatpush1.bf16.xpose.msra.mxu0 0
        %3418 = vmatprep.subr.bf16.mxu0 0
        %3419 = vmatpush1.bf16.xpose.msra.mxu0 0
        %3420 = vmatprep.subr.bf16.mxu0 0
        %3421 = vmatpush1.bf16.xpose.msra.mxu0 0
        %3422 = vmatprep.subr.bf16.mxu0 0
        %3423 = vmatpush1.bf16.xpose.msra.mxu0 0
        %3424 = vmatprep.subr.bf16.mxu0 0
        %3425 = vmatpush1.bf16.xpose.msra.mxu0 0
        %3426 = vmatprep.subr.bf16.mxu0 0
        %3427 = vmatpush1.bf16.xpose.msra.mxu0 0
        %3428 = vmatprep.subr.bf16.mxu0 0
        %3429 = vmatpush1.bf16.xpose.msra.mxu0 0
        %3430 = vmatprep.subr.bf16.mxu0 0
        %3431 = vmatpush1.bf16.xpose.msra.mxu0 0
        %3432 = vmatprep.subr.bf16.mxu0 0
        %3433 = vmatpush1.bf16.xpose.msra.mxu0 0
        %3434 = vmatprep.subr.bf16.mxu0 0
        %3435 = vmatpush1.bf16.xpose.msra.mxu0 0
        %3436 = vmatprep.mubr.bf16.mxu0 0
        %3437 = vmatmul.mubr.bf16.gmra.mrb[0].mxu0 %v3399
        %v3438 = vpop.f32.mrb[0].mxu0
        %v3439 = vadd.f32 0.0, %v3438
        %v3440 = vpop.f32.mrb[0].mxu0
        %v3441 = vpop.f32.mrb[0].mxu0
        %v3442 = vadd.f32 0.0, %v3441
        %v3443 = vpop.f32.mrb[0].mxu0
        %3444 = vdwg.mxu0
        %v3446 = vsel %vm2833, %v2814, 0
        %v3449 = vsel %vm2833, %v2830, 0
        %3451 = vmatprep.subr.bf16.mxu0 0
        %3452 = vmatpush1.bf16.xpose.msra.mxu0 %v3449
        %3453 = vmatprep.subr.bf16.mxu0 0
        %3454 = vmatpush1.bf16.xpose.msra.mxu0 0
        %3455 = vmatprep.subr.bf16.mxu0 0
        %3456 = vmatpush1.bf16.xpose.msra.mxu0 0
        %3457 = vmatprep.subr.bf16.mxu0 0
        %3458 = vmatpush1.bf16.xpose.msra.mxu0 0
        %3459 = vmatprep.subr.bf16.mxu0 0
        %3460 = vmatpush1.bf16.xpose.msra.mxu0 0
        %3461 = vmatprep.subr.bf16.mxu0 0
        %3462 = vmatpush1.bf16.xpose.msra.mxu0 0
        %3463 = vmatprep.subr.bf16.mxu0 0
        %3464 = vmatpush1.bf16.xpose.msra.mxu0 0
        %3465 = vmatprep.subr.bf16.mxu0 0
        %3466 = vmatpush1.bf16.xpose.msra.mxu0 0
        %3467 = vmatprep.subr.bf16.mxu0 0
        %3468 = vmatpush1.bf16.xpose.msra.mxu0 0
        %3469 = vmatprep.subr.bf16.mxu0 0
        %3470 = vmatpush1.bf16.xpose.msra.mxu0 0
        %3471 = vmatprep.subr.bf16.mxu0 0
        %3472 = vmatpush1.bf16.xpose.msra.mxu0 0
        %3473 = vmatprep.subr.bf16.mxu0 0
        %3474 = vmatpush1.bf16.xpose.msra.mxu0 0
        %3475 = vmatprep.subr.bf16.mxu0 0
        %3476 = vmatpush1.bf16.xpose.msra.mxu0 0
        %3477 = vmatprep.subr.bf16.mxu0 0
        %3478 = vmatpush1.bf16.xpose.msra.mxu0 0
        %3479 = vmatprep.subr.bf16.mxu0 0
        %3480 = vmatpush1.bf16.xpose.msra.mxu0 0
        %3481 = vmatprep.subr.bf16.mxu0 0
        %3482 = vmatpush1.bf16.xpose.msra.mxu0 0
        %3483 = vmatprep.mubr.bf16.mxu0 0
        %3484 = vmatmul.mubr.bf16.gmra.mrb[0].mxu0 %v3446
        %v3485 = vpop.f32.mrb[0].mxu0
        %v3486 = vadd.f32 0.0, %v3485
        %v3487 = vpop.f32.mrb[0].mxu0
        %v3488 = vpop.f32.mrb[0].mxu0
        %v3489 = vadd.f32 0.0, %v3488
        %v3490 = vpop.f32.mrb[0].mxu0
        %3491 = vdwg.mxu0
        %v3493 = vsel %vm2833, %v2815, 0
        %v3496 = vsel %vm2833, %v2831, 0
        %3498 = vmatprep.subr.bf16.mxu0 0
        %3499 = vmatpush1.bf16.xpose.msra.mxu0 %v3496
        %3500 = vmatprep.subr.bf16.mxu0 0
        %3501 = vmatpush1.bf16.xpose.msra.mxu0 0
        %3502 = vmatprep.subr.bf16.mxu0 0
        %3503 = vmatpush1.bf16.xpose.msra.mxu0 0
        %3504 = vmatprep.subr.bf16.mxu0 0
        %3505 = vmatpush1.bf16.xpose.msra.mxu0 0
        %3506 = vmatprep.subr.bf16.mxu0 0
        %3507 = vmatpush1.bf16.xpose.msra.mxu0 0
        %3508 = vmatprep.subr.bf16.mxu0 0
        %3509 = vmatpush1.bf16.xpose.msra.mxu0 0
        %3510 = vmatprep.subr.bf16.mxu0 0
        %3511 = vmatpush1.bf16.xpose.msra.mxu0 0
        %3512 = vmatprep.subr.bf16.mxu0 0
        %3513 = vmatpush1.bf16.xpose.msra.mxu0 0
        %3514 = vmatprep.subr.bf16.mxu0 0
        %3515 = vmatpush1.bf16.xpose.msra.mxu0 0
        %3516 = vmatprep.subr.bf16.mxu0 0
        %3517 = vmatpush1.bf16.xpose.msra.mxu0 0
        %3518 = vmatprep.subr.bf16.mxu0 0
        %3519 = vmatpush1.bf16.xpose.msra.mxu0 0
        %3520 = vmatprep.subr.bf16.mxu0 0
        %3521 = vmatpush1.bf16.xpose.msra.mxu0 0
        %3522 = vmatprep.subr.bf16.mxu0 0
        %3523 = vmatpush1.bf16.xpose.msra.mxu0 0
        %3524 = vmatprep.subr.bf16.mxu0 0
        %3525 = vmatpush1.bf16.xpose.msra.mxu0 0
        %3526 = vmatprep.subr.bf16.mxu0 0
        %3527 = vmatpush1.bf16.xpose.msra.mxu0 0
        %3528 = vmatprep.subr.bf16.mxu0 0
        %3529 = vmatpush1.bf16.xpose.msra.mxu0 0
        %3530 = vmatprep.mubr.bf16.mxu0 0
        %3531 = vmatmul.mubr.bf16.gmra.mrb[0].mxu0 %v3493
        %v3532 = vpop.f32.mrb[0].mxu0
        %v3533 = vadd.f32 0.0, %v3532
        %v3534 = vpop.f32.mrb[0].mxu0
        %v3535 = vpop.f32.mrb[0].mxu0
        %v3536 = vadd.f32 0.0, %v3535
        %v3537 = vpop.f32.mrb[0].mxu0
        %3538 = vdwg.mxu0
        %v3540 = vsel %vm2833, %v2816, 0
        %v3543 = vsel %vm2833, %v2832, 0
        %3545 = vmatprep.subr.bf16.mxu0 0
        %3546 = vmatpush1.bf16.xpose.msra.mxu0 %v3543
        %3547 = vmatprep.subr.bf16.mxu0 0
        %3548 = vmatpush1.bf16.xpose.msra.mxu0 0
        %3549 = vmatprep.subr.bf16.mxu0 0
        %3550 = vmatpush1.bf16.xpose.msra.mxu0 0
        %3551 = vmatprep.subr.bf16.mxu0 0
        %3552 = vmatpush1.bf16.xpose.msra.mxu0 0
        %3553 = vmatprep.subr.bf16.mxu0 0
        %3554 = vmatpush1.bf16.xpose.msra.mxu0 0
        %3555 = vmatprep.subr.bf16.mxu0 0
        %3556 = vmatpush1.bf16.xpose.msra.mxu0 0
        %3557 = vmatprep.subr.bf16.mxu0 0
        %3558 = vmatpush1.bf16.xpose.msra.mxu0 0
        %3559 = vmatprep.subr.bf16.mxu0 0
        %3560 = vmatpush1.bf16.xpose.msra.mxu0 0
        %3561 = vmatprep.subr.bf16.mxu0 0
        %3562 = vmatpush1.bf16.xpose.msra.mxu0 0
        %3563 = vmatprep.subr.bf16.mxu0 0
        %3564 = vmatpush1.bf16.xpose.msra.mxu0 0
        %3565 = vmatprep.subr.bf16.mxu0 0
        %3566 = vmatpush1.bf16.xpose.msra.mxu0 0
        %3567 = vmatprep.subr.bf16.mxu0 0
        %3568 = vmatpush1.bf16.xpose.msra.mxu0 0
        %3569 = vmatprep.subr.bf16.mxu0 0
        %3570 = vmatpush1.bf16.xpose.msra.mxu0 0
        %3571 = vmatprep.subr.bf16.mxu0 0
        %3572 = vmatpush1.bf16.xpose.msra.mxu0 0
        %3573 = vmatprep.subr.bf16.mxu0 0
        %3574 = vmatpush1.bf16.xpose.msra.mxu0 0
        %3575 = vmatprep.subr.bf16.mxu0 0
        %3576 = vmatpush1.bf16.xpose.msra.mxu0 0
        %3577 = vmatprep.mubr.bf16.mxu0 0
        %3578 = vmatmul.mubr.bf16.gmra.mrb[0].mxu0 %v3540
        %v3579 = vpop.f32.mrb[0].mxu0
        %v3580 = vadd.f32 0.0, %v3579
        %v3581 = vpop.f32.mrb[0].mxu0
        %v3582 = vpop.f32.mrb[0].mxu0
        %v3583 = vadd.f32 0.0, %v3582
        %v3584 = vpop.f32.mrb[0].mxu0
        %3585 = vdwg.mxu0
        %vm3586 = vcmask 130048
        %v3587 = vsel %vm3586, %v2875, -inf
        %3588 = vmax.xlane.f32.xlu0 %v3587
        %v3589 = vpop.xlane.xlu0 %3588
        %v3590 = vsel %vm3586, %v2878, -inf
        %3591 = vmax.xlane.f32.xlu0 %v3590
        %v3592 = vpop.xlane.xlu0 %3591
        %v3593 = vsel %vm3586, %v2922, -inf
        %3594 = vmax.xlane.f32.xlu0 %v3593
        %v3595 = vpop.xlane.xlu0 %3594
        %v3596 = vsel %vm3586, %v2925, -inf
        %3597 = vmax.xlane.f32.xlu0 %v3596
        %v3598 = vpop.xlane.xlu0 %3597
        %v3599 = vsel %vm3586, %v2969, -inf
        %3600 = vmax.xlane.f32.xlu0 %v3599
        %v3601 = vpop.xlane.xlu0 %3600
        %v3602 = vsel %vm3586, %v2972, -inf
        %3603 = vmax.xlane.f32.xlu0 %v3602
        %v3604 = vpop.xlane.xlu0 %3603
        %v3605 = vsel %vm3586, %v3016, -inf
        %3606 = vmax.xlane.f32.xlu0 %v3605
        %v3607 = vpop.xlane.xlu0 %3606
        %v3608 = vsel %vm3586, %v3019, -inf
        %3609 = vmax.xlane.f32.xlu0 %v3608
        %v3610 = vpop.xlane.xlu0 %3609
        %v3611 = vsel %vm3586, %v3063, -inf
        %3612 = vmax.xlane.f32.xlu0 %v3611
        %v3613 = vpop.xlane.xlu0 %3612
        %v3614 = vsel %vm3586, %v3066, -inf
        %3615 = vmax.xlane.f32.xlu0 %v3614
        %v3616 = vpop.xlane.xlu0 %3615
        %v3617 = vsel %vm3586, %v3110, -inf
        %3618 = vmax.xlane.f32.xlu0 %v3617
        %v3619 = vpop.xlane.xlu0 %3618
        %v3620 = vsel %vm3586, %v3113, -inf
        %3621 = vmax.xlane.f32.xlu0 %v3620
        %v3622 = vpop.xlane.xlu0 %3621
        %v3623 = vsel %vm3586, %v3157, -inf
        %3624 = vmax.xlane.f32.xlu0 %v3623
        %v3625 = vpop.xlane.xlu0 %3624
        %v3626 = vsel %vm3586, %v3160, -inf
        %3627 = vmax.xlane.f32.xlu0 %v3626
        %v3628 = vpop.xlane.xlu0 %3627
        %v3629 = vsel %vm3586, %v3204, -inf
        %3630 = vmax.xlane.f32.xlu0 %v3629
        %v3631 = vpop.xlane.xlu0 %3630
        %v3632 = vsel %vm3586, %v3207, -inf
        %3633 = vmax.xlane.f32.xlu0 %v3632
        %v3634 = vpop.xlane.xlu0 %3633
        %v3635 = vsel %vm3586, %v3251, -inf
        %3636 = vmax.xlane.f32.xlu0 %v3635
        %v3637 = vpop.xlane.xlu0 %3636
        %v3638 = vsel %vm3586, %v3254, -inf
        %3639 = vmax.xlane.f32.xlu0 %v3638
        %v3640 = vpop.xlane.xlu0 %3639
        %v3641 = vsel %vm3586, %v3298, -inf
        %3642 = vmax.xlane.f32.xlu0 %v3641
        %v3643 = vpop.xlane.xlu0 %3642
        %v3644 = vsel %vm3586, %v3301, -inf
        %3645 = vmax.xlane.f32.xlu0 %v3644
        %v3646 = vpop.xlane.xlu0 %3645
        %v3647 = vsel %vm3586, %v3345, -inf
        %3648 = vmax.xlane.f32.xlu0 %v3647
        %v3649 = vpop.xlane.xlu0 %3648
        %v3650 = vsel %vm3586, %v3348, -inf
        %3651 = vmax.xlane.f32.xlu0 %v3650
        %v3652 = vpop.xlane.xlu0 %3651
        %v3653 = vsel %vm3586, %v3392, -inf
        %3654 = vmax.xlane.f32.xlu0 %v3653
        %v3655 = vpop.xlane.xlu0 %3654
        %v3656 = vsel %vm3586, %v3395, -inf
        %3657 = vmax.xlane.f32.xlu0 %v3656
        %v3658 = vpop.xlane.xlu0 %3657
        %v3659 = vsel %vm3586, %v3439, -inf
        %3660 = vmax.xlane.f32.xlu0 %v3659
        %v3661 = vpop.xlane.xlu0 %3660
        %v3662 = vsel %vm3586, %v3442, -inf
        %3663 = vmax.xlane.f32.xlu0 %v3662
        %v3664 = vpop.xlane.xlu0 %3663
        %v3665 = vsel %vm3586, %v3486, -inf
        %3666 = vmax.xlane.f32.xlu0 %v3665
        %v3667 = vpop.xlane.xlu0 %3666
        %v3668 = vsel %vm3586, %v3489, -inf
        %3669 = vmax.xlane.f32.xlu0 %v3668
        %v3670 = vpop.xlane.xlu0 %3669
        %v3671 = vsel %vm3586, %v3533, -inf
        %3672 = vmax.xlane.f32.xlu0 %v3671
        %v3673 = vpop.xlane.xlu0 %3672
        %v3674 = vsel %vm3586, %v3536, -inf
        %3675 = vmax.xlane.f32.xlu0 %v3674
        %v3676 = vpop.xlane.xlu0 %3675
        %v3677 = vsel %vm3586, %v3580, -inf
        %3678 = vmax.xlane.f32.xlu0 %v3677
        %v3679 = vpop.xlane.xlu0 %3678
        %v3680 = vsel %vm3586, %v3583, -inf
        %3681 = vmax.xlane.f32.xlu0 %v3680
        %v3682 = vpop.xlane.xlu0 %3681
        %v3683 = vsub.f32 %v2875, %v3589
        %v3684 = vsub.f32 %v2878, %v3592
        %v3685 = vsub.f32 %v2922, %v3595
        %v3686 = vsub.f32 %v2925, %v3598
        %v3687 = vsub.f32 %v2969, %v3601
        %v3688 = vsub.f32 %v2972, %v3604
        %v3689 = vsub.f32 %v3016, %v3607
        %v3690 = vsub.f32 %v3019, %v3610
        %v3691 = vsub.f32 %v3063, %v3613
        %v3692 = vsub.f32 %v3066, %v3616
        %v3693 = vsub.f32 %v3110, %v3619
        %v3694 = vsub.f32 %v3113, %v3622
        %v3695 = vsub.f32 %v3157, %v3625
        %v3696 = vsub.f32 %v3160, %v3628
        %v3697 = vsub.f32 %v3204, %v3631
        %v3698 = vsub.f32 %v3207, %v3634
        %v3699 = vsub.f32 %v3251, %v3637
        %v3700 = vsub.f32 %v3254, %v3640
        %v3701 = vsub.f32 %v3298, %v3643
        %v3702 = vsub.f32 %v3301, %v3646
        %v3703 = vsub.f32 %v3345, %v3649
        %v3704 = vsub.f32 %v3348, %v3652
        %v3705 = vsub.f32 %v3392, %v3655
        %v3706 = vsub.f32 %v3395, %v3658
        %v3707 = vsub.f32 %v3439, %v3661
        %v3708 = vsub.f32 %v3442, %v3664
        %v3709 = vsub.f32 %v3486, %v3667
        %v3710 = vsub.f32 %v3489, %v3670
        %v3711 = vsub.f32 %v3533, %v3673
        %v3712 = vsub.f32 %v3536, %v3676
        %v3713 = vsub.f32 %v3580, %v3679
        %v3714 = vsub.f32 %v3583, %v3682
        %v3715 = vmul.f32 %v3683, 1.442695
        %v3716 = vpow.pop %v3715
        %v3717 = vmul.f32 %v3684, 1.442695
        %v3718 = vpow.pop %v3717
        %v3719 = vmul.f32 %v3685, 1.442695
        %v3720 = vpow.pop %v3719
        %v3721 = vmul.f32 %v3686, 1.442695
        %v3722 = vpow.pop %v3721
        %v3723 = vmul.f32 %v3687, 1.442695
        %v3724 = vpow.pop %v3723
        %v3725 = vmul.f32 %v3688, 1.442695
        %v3726 = vpow.pop %v3725
        %v3727 = vmul.f32 %v3689, 1.442695
        %v3728 = vpow.pop %v3727
        %v3729 = vmul.f32 %v3690, 1.442695
        %v3730 = vpow.pop %v3729
        %v3731 = vmul.f32 %v3691, 1.442695
        %v3732 = vpow.pop %v3731
        %v3733 = vmul.f32 %v3692, 1.442695
        %v3734 = vpow.pop %v3733
        %v3735 = vmul.f32 %v3693, 1.442695
        %v3736 = vpow.pop %v3735
        %v3737 = vmul.f32 %v3694, 1.442695
        %v3738 = vpow.pop %v3737
        %v3739 = vmul.f32 %v3695, 1.442695
        %v3740 = vpow.pop %v3739
        %v3741 = vmul.f32 %v3696, 1.442695
        %v3742 = vpow.pop %v3741
        %v3743 = vmul.f32 %v3697, 1.442695
        %v3744 = vpow.pop %v3743
        %v3745 = vmul.f32 %v3698, 1.442695
        %v3746 = vpow.pop %v3745
        %v3747 = vmul.f32 %v3699, 1.442695
        %v3748 = vpow.pop %v3747
        %v3749 = vmul.f32 %v3700, 1.442695
        %v3750 = vpow.pop %v3749
        %v3751 = vmul.f32 %v3701, 1.442695
        %v3752 = vpow.pop %v3751
        %v3753 = vmul.f32 %v3702, 1.442695
        %v3754 = vpow.pop %v3753
        %v3755 = vmul.f32 %v3703, 1.442695
        %v3756 = vpow.pop %v3755
        %v3757 = vmul.f32 %v3704, 1.442695
        %v3758 = vpow.pop %v3757
        %v3759 = vmul.f32 %v3705, 1.442695
        %v3760 = vpow.pop %v3759
        %v3761 = vmul.f32 %v3706, 1.442695
        %v3762 = vpow.pop %v3761
        %v3763 = vmul.f32 %v3707, 1.442695
        %v3764 = vpow.pop %v3763
        %v3765 = vmul.f32 %v3708, 1.442695
        %v3766 = vpow.pop %v3765
        %v3767 = vmul.f32 %v3709, 1.442695
        %v3768 = vpow.pop %v3767
        %v3769 = vmul.f32 %v3710, 1.442695
        %v3770 = vpow.pop %v3769
        %v3771 = vmul.f32 %v3711, 1.442695
        %v3772 = vpow.pop %v3771
        %v3773 = vmul.f32 %v3712, 1.442695
        %v3774 = vpow.pop %v3773
        %v3775 = vmul.f32 %v3713, 1.442695
        %v3776 = vpow.pop %v3775
        %v3777 = vmul.f32 %v3714, 1.442695
        %v3778 = vpow.pop %v3777
        %v3779 = vsel %vm3586, %v3716, 0.0
        %3780 = vadd.xlane.f32.xlu0 %v3779
        %v3781 = vpop.xlane.xlu0 %3780
        %v3782 = vsel %vm3586, %v3718, 0.0
        %3783 = vadd.xlane.f32.xlu0 %v3782
        %v3784 = vpop.xlane.xlu0 %3783
        %v3785 = vsel %vm3586, %v3720, 0.0
        %3786 = vadd.xlane.f32.xlu0 %v3785
        %v3787 = vpop.xlane.xlu0 %3786
        %v3788 = vsel %vm3586, %v3722, 0.0
        %3789 = vadd.xlane.f32.xlu0 %v3788
        %v3790 = vpop.xlane.xlu0 %3789
        %v3791 = vsel %vm3586, %v3724, 0.0
        %3792 = vadd.xlane.f32.xlu0 %v3791
        %v3793 = vpop.xlane.xlu0 %3792
        %v3794 = vsel %vm3586, %v3726, 0.0
        %3795 = vadd.xlane.f32.xlu0 %v3794
        %v3796 = vpop.xlane.xlu0 %3795
        %v3797 = vsel %vm3586, %v3728, 0.0
        %3798 = vadd.xlane.f32.xlu0 %v3797
        %v3799 = vpop.xlane.xlu0 %3798
        %v3800 = vsel %vm3586, %v3730, 0.0
        %3801 = vadd.xlane.f32.xlu0 %v3800
        %v3802 = vpop.xlane.xlu0 %3801
        %v3803 = vsel %vm3586, %v3732, 0.0
        %3804 = vadd.xlane.f32.xlu0 %v3803
        %v3805 = vpop.xlane.xlu0 %3804
        %v3806 = vsel %vm3586, %v3734, 0.0
        %3807 = vadd.xlane.f32.xlu0 %v3806
        %v3808 = vpop.xlane.xlu0 %3807
        %v3809 = vsel %vm3586, %v3736, 0.0
        %3810 = vadd.xlane.f32.xlu0 %v3809
        %v3811 = vpop.xlane.xlu0 %3810
        %v3812 = vsel %vm3586, %v3738, 0.0
        %3813 = vadd.xlane.f32.xlu0 %v3812
        %v3814 = vpop.xlane.xlu0 %3813
        %v3815 = vsel %vm3586, %v3740, 0.0
        %3816 = vadd.xlane.f32.xlu0 %v3815
        %v3817 = vpop.xlane.xlu0 %3816
        %v3818 = vsel %vm3586, %v3742, 0.0
        %3819 = vadd.xlane.f32.xlu0 %v3818
        %v3820 = vpop.xlane.xlu0 %3819
        %v3821 = vsel %vm3586, %v3744, 0.0
        %3822 = vadd.xlane.f32.xlu0 %v3821
        %v3823 = vpop.xlane.xlu0 %3822
        %v3824 = vsel %vm3586, %v3746, 0.0
        %3825 = vadd.xlane.f32.xlu0 %v3824
        %v3826 = vpop.xlane.xlu0 %3825
        %v3827 = vsel %vm3586, %v3748, 0.0
        %3828 = vadd.xlane.f32.xlu0 %v3827
        %v3829 = vpop.xlane.xlu0 %3828
        %v3830 = vsel %vm3586, %v3750, 0.0
        %3831 = vadd.xlane.f32.xlu0 %v3830
        %v3832 = vpop.xlane.xlu0 %3831
        %v3833 = vsel %vm3586, %v3752, 0.0
        %3834 = vadd.xlane.f32.xlu0 %v3833
        %v3835 = vpop.xlane.xlu0 %3834
        %v3836 = vsel %vm3586, %v3754, 0.0
        %3837 = vadd.xlane.f32.xlu0 %v3836
        %v3838 = vpop.xlane.xlu0 %3837
        %v3839 = vsel %vm3586, %v3756, 0.0
        %3840 = vadd.xlane.f32.xlu0 %v3839
        %v3841 = vpop.xlane.xlu0 %3840
        %v3842 = vsel %vm3586, %v3758, 0.0
        %3843 = vadd.xlane.f32.xlu0 %v3842
        %v3844 = vpop.xlane.xlu0 %3843
        %v3845 = vsel %vm3586, %v3760, 0.0
        %3846 = vadd.xlane.f32.xlu0 %v3845
        %v3847 = vpop.xlane.xlu0 %3846
        %v3848 = vsel %vm3586, %v3762, 0.0
        %3849 = vadd.xlane.f32.xlu0 %v3848
        %v3850 = vpop.xlane.xlu0 %3849
        %v3851 = vsel %vm3586, %v3764, 0.0
        %3852 = vadd.xlane.f32.xlu0 %v3851
        %v3853 = vpop.xlane.xlu0 %3852
        %v3854 = vsel %vm3586, %v3766, 0.0
        %3855 = vadd.xlane.f32.xlu0 %v3854
        %v3856 = vpop.xlane.xlu0 %3855
        %v3857 = vsel %vm3586, %v3768, 0.0
        %3858 = vadd.xlane.f32.xlu0 %v3857
        %v3859 = vpop.xlane.xlu0 %3858
        %v3860 = vsel %vm3586, %v3770, 0.0
        %3861 = vadd.xlane.f32.xlu0 %v3860
        %v3862 = vpop.xlane.xlu0 %3861
        %v3863 = vsel %vm3586, %v3772, 0.0
        %3864 = vadd.xlane.f32.xlu0 %v3863
        %v3865 = vpop.xlane.xlu0 %3864
        %v3866 = vsel %vm3586, %v3774, 0.0
        %3867 = vadd.xlane.f32.xlu0 %v3866
        %v3868 = vpop.xlane.xlu0 %3867
        %v3869 = vsel %vm3586, %v3776, 0.0
        %3870 = vadd.xlane.f32.xlu0 %v3869
        %v3871 = vpop.xlane.xlu0 %3870
        %v3872 = vsel %vm3586, %v3778, 0.0
        %3873 = vadd.xlane.f32.xlu0 %v3872
        %v3874 = vpop.xlane.xlu0 %3873
        %v3875 = vpack.c.bf16 %v3718, %v3716
        %v3876 = vpack.c.bf16 %v3722, %v3720
        %v3877 = vpack.c.bf16 %v3726, %v3724
        %v3878 = vpack.c.bf16 %v3730, %v3728
        %v3879 = vpack.c.bf16 %v3734, %v3732
        %v3880 = vpack.c.bf16 %v3738, %v3736
        %v3881 = vpack.c.bf16 %v3742, %v3740
        %v3882 = vpack.c.bf16 %v3746, %v3744
        %v3883 = vpack.c.bf16 %v3750, %v3748
        %v3884 = vpack.c.bf16 %v3754, %v3752
        %v3885 = vpack.c.bf16 %v3758, %v3756
        %v3886 = vpack.c.bf16 %v3762, %v3760
        %v3887 = vpack.c.bf16 %v3766, %v3764
        %v3888 = vpack.c.bf16 %v3770, %v3768
        %v3889 = vpack.c.bf16 %v3774, %v3772
        %v3890 = vpack.c.bf16 %v3778, %v3776
        %v3891 = vpack.c.bf16 %v2057, %v2054
        %v3892 = vpack.c.bf16 %v2116, %v2113
        %v3893 = vpack.c.bf16 %v2175, %v2172
        %v3894 = vpack.c.bf16 %v2234, %v2231
        %v3895 = vpack.c.bf16 %v2293, %v2290
        %v3896 = vpack.c.bf16 %v2352, %v2349
        %v3897 = vpack.c.bf16 %v2411, %v2408
        %v3898 = vpack.c.bf16 %v2470, %v2467
        %v3899 = vpack.c.bf16 %v2511, %v2508
        %v3900 = vpack.c.bf16 %v2552, %v2549
        %v3901 = vpack.c.bf16 %v2593, %v2590
        %v3902 = vpack.c.bf16 %v2634, %v2631
        %v3903 = vpack.c.bf16 %v2675, %v2672
        %v3904 = vpack.c.bf16 %v2716, %v2713
        %v3905 = vpack.c.bf16 %v2757, %v2754
        %v3906 = vpack.c.bf16 %v2798, %v2795
        %v3908 = vsel %vm3586, %v3875, 0
        %3910 = vmatprep.subr.bf16.mxu0 0
        %3911 = vmatpush1.bf16.msra.mxu0 %v3891
        %3912 = vmatprep.subr.bf16.mxu0 0
        %3913 = vmatpush1.bf16.msra.mxu0 0
        %3914 = vmatprep.subr.bf16.mxu0 0
        %3915 = vmatpush1.bf16.msra.mxu0 0
        %3916 = vmatprep.subr.bf16.mxu0 0
        %3917 = vmatpush1.bf16.msra.mxu0 0
        %3918 = vmatprep.subr.bf16.mxu0 0
        %3919 = vmatpush1.bf16.msra.mxu0 0
        %3920 = vmatprep.subr.bf16.mxu0 0
        %3921 = vmatpush1.bf16.msra.mxu0 0
        %3922 = vmatprep.subr.bf16.mxu0 0
        %3923 = vmatpush1.bf16.msra.mxu0 0
        %3924 = vmatprep.subr.bf16.mxu0 0
        %3925 = vmatpush1.bf16.msra.mxu0 0
        %3926 = vmatprep.subr.bf16.mxu0 0
        %3927 = vmatpush1.bf16.msra.mxu0 0
        %3928 = vmatprep.subr.bf16.mxu0 0
        %3929 = vmatpush1.bf16.msra.mxu0 0
        %3930 = vmatprep.subr.bf16.mxu0 0
        %3931 = vmatpush1.bf16.msra.mxu0 0
        %3932 = vmatprep.subr.bf16.mxu0 0
        %3933 = vmatpush1.bf16.msra.mxu0 0
        %3934 = vmatprep.subr.bf16.mxu0 0
        %3935 = vmatpush1.bf16.msra.mxu0 0
        %3936 = vmatprep.subr.bf16.mxu0 0
        %3937 = vmatpush1.bf16.msra.mxu0 0
        %3938 = vmatprep.subr.bf16.mxu0 0
        %3939 = vmatpush1.bf16.msra.mxu0 0
        %3940 = vmatprep.subr.bf16.mxu0 0
        %3941 = vmatpush1.bf16.msra.mxu0 0
        %3942 = vmatprep.mubr.bf16.mxu0 0
        %3943 = vmatmul.mubr.bf16.gmra.mrb[0].mxu0 %v3908
        %v3944 = vpop.f32.mrb[0].mxu0
        %v3945 = vadd.f32 0.0, %v3944
        %v3946 = vpop.f32.mrb[0].mxu0
        %v3947 = vpop.f32.mrb[0].mxu0
        %v3948 = vadd.f32 0.0, %v3947
        %v3949 = vpop.f32.mrb[0].mxu0
        %3950 = vdwg.mxu0
        %v3952 = vsel %vm3586, %v3876, 0
        %3954 = vmatprep.subr.bf16.mxu0 0
        %3955 = vmatpush1.bf16.msra.mxu0 %v3892
        %3956 = vmatprep.subr.bf16.mxu0 0
        %3957 = vmatpush1.bf16.msra.mxu0 0
        %3958 = vmatprep.subr.bf16.mxu0 0
        %3959 = vmatpush1.bf16.msra.mxu0 0
        %3960 = vmatprep.subr.bf16.mxu0 0
        %3961 = vmatpush1.bf16.msra.mxu0 0
        %3962 = vmatprep.subr.bf16.mxu0 0
        %3963 = vmatpush1.bf16.msra.mxu0 0
        %3964 = vmatprep.subr.bf16.mxu0 0
        %3965 = vmatpush1.bf16.msra.mxu0 0
        %3966 = vmatprep.subr.bf16.mxu0 0
        %3967 = vmatpush1.bf16.msra.mxu0 0
        %3968 = vmatprep.subr.bf16.mxu0 0
        %3969 = vmatpush1.bf16.msra.mxu0 0
        %3970 = vmatprep.subr.bf16.mxu0 0
        %3971 = vmatpush1.bf16.msra.mxu0 0
        %3972 = vmatprep.subr.bf16.mxu0 0
        %3973 = vmatpush1.bf16.msra.mxu0 0
        %3974 = vmatprep.subr.bf16.mxu0 0
        %3975 = vmatpush1.bf16.msra.mxu0 0
        %3976 = vmatprep.subr.bf16.mxu0 0
        %3977 = vmatpush1.bf16.msra.mxu0 0
        %3978 = vmatprep.subr.bf16.mxu0 0
        %3979 = vmatpush1.bf16.msra.mxu0 0
        %3980 = vmatprep.subr.bf16.mxu0 0
        %3981 = vmatpush1.bf16.msra.mxu0 0
        %3982 = vmatprep.subr.bf16.mxu0 0
        %3983 = vmatpush1.bf16.msra.mxu0 0
        %3984 = vmatprep.subr.bf16.mxu0 0
        %3985 = vmatpush1.bf16.msra.mxu0 0
        %3986 = vmatprep.mubr.bf16.mxu0 0
        %3987 = vmatmul.mubr.bf16.gmra.mrb[0].mxu0 %v3952
        %v3988 = vpop.f32.mrb[0].mxu0
        %v3989 = vadd.f32 0.0, %v3988
        %v3990 = vpop.f32.mrb[0].mxu0
        %v3991 = vpop.f32.mrb[0].mxu0
        %v3992 = vadd.f32 0.0, %v3991
        %v3993 = vpop.f32.mrb[0].mxu0
        %3994 = vdwg.mxu0
        %v3996 = vsel %vm3586, %v3877, 0
        %3998 = vmatprep.subr.bf16.mxu0 0
        %3999 = vmatpush1.bf16.msra.mxu0 %v3893
        %4000 = vmatprep.subr.bf16.mxu0 0
        %4001 = vmatpush1.bf16.msra.mxu0 0
        %4002 = vmatprep.subr.bf16.mxu0 0
        %4003 = vmatpush1.bf16.msra.mxu0 0
        %4004 = vmatprep.subr.bf16.mxu0 0
        %4005 = vmatpush1.bf16.msra.mxu0 0
        %4006 = vmatprep.subr.bf16.mxu0 0
        %4007 = vmatpush1.bf16.msra.mxu0 0
        %4008 = vmatprep.subr.bf16.mxu0 0
        %4009 = vmatpush1.bf16.msra.mxu0 0
        %4010 = vmatprep.subr.bf16.mxu0 0
        %4011 = vmatpush1.bf16.msra.mxu0 0
        %4012 = vmatprep.subr.bf16.mxu0 0
        %4013 = vmatpush1.bf16.msra.mxu0 0
        %4014 = vmatprep.subr.bf16.mxu0 0
        %4015 = vmatpush1.bf16.msra.mxu0 0
        %4016 = vmatprep.subr.bf16.mxu0 0
        %4017 = vmatpush1.bf16.msra.mxu0 0
        %4018 = vmatprep.subr.bf16.mxu0 0
        %4019 = vmatpush1.bf16.msra.mxu0 0
        %4020 = vmatprep.subr.bf16.mxu0 0
        %4021 = vmatpush1.bf16.msra.mxu0 0
        %4022 = vmatprep.subr.bf16.mxu0 0
        %4023 = vmatpush1.bf16.msra.mxu0 0
        %4024 = vmatprep.subr.bf16.mxu0 0
        %4025 = vmatpush1.bf16.msra.mxu0 0
        %4026 = vmatprep.subr.bf16.mxu0 0
        %4027 = vmatpush1.bf16.msra.mxu0 0
        %4028 = vmatprep.subr.bf16.mxu0 0
        %4029 = vmatpush1.bf16.msra.mxu0 0
        %4030 = vmatprep.mubr.bf16.mxu0 0
        %4031 = vmatmul.mubr.bf16.gmra.mrb[0].mxu0 %v3996
        %v4032 = vpop.f32.mrb[0].mxu0
        %v4033 = vadd.f32 0.0, %v4032
        %v4034 = vpop.f32.mrb[0].mxu0
        %v4035 = vpop.f32.mrb[0].mxu0
        %v4036 = vadd.f32 0.0, %v4035
        %v4037 = vpop.f32.mrb[0].mxu0
        %4038 = vdwg.mxu0
        %v4040 = vsel %vm3586, %v3878, 0
        %4042 = vmatprep.subr.bf16.mxu0 0
        %4043 = vmatpush1.bf16.msra.mxu0 %v3894
        %4044 = vmatprep.subr.bf16.mxu0 0
        %4045 = vmatpush1.bf16.msra.mxu0 0
        %4046 = vmatprep.subr.bf16.mxu0 0
        %4047 = vmatpush1.bf16.msra.mxu0 0
        %4048 = vmatprep.subr.bf16.mxu0 0
        %4049 = vmatpush1.bf16.msra.mxu0 0
        %4050 = vmatprep.subr.bf16.mxu0 0
        %4051 = vmatpush1.bf16.msra.mxu0 0
        %4052 = vmatprep.subr.bf16.mxu0 0
        %4053 = vmatpush1.bf16.msra.mxu0 0
        %4054 = vmatprep.subr.bf16.mxu0 0
        %4055 = vmatpush1.bf16.msra.mxu0 0
        %4056 = vmatprep.subr.bf16.mxu0 0
        %4057 = vmatpush1.bf16.msra.mxu0 0
        %4058 = vmatprep.subr.bf16.mxu0 0
        %4059 = vmatpush1.bf16.msra.mxu0 0
        %4060 = vmatprep.subr.bf16.mxu0 0
        %4061 = vmatpush1.bf16.msra.mxu0 0
        %4062 = vmatprep.subr.bf16.mxu0 0
        %4063 = vmatpush1.bf16.msra.mxu0 0
        %4064 = vmatprep.subr.bf16.mxu0 0
        %4065 = vmatpush1.bf16.msra.mxu0 0
        %4066 = vmatprep.subr.bf16.mxu0 0
        %4067 = vmatpush1.bf16.msra.mxu0 0
        %4068 = vmatprep.subr.bf16.mxu0 0
        %4069 = vmatpush1.bf16.msra.mxu0 0
        %4070 = vmatprep.subr.bf16.mxu0 0
        %4071 = vmatpush1.bf16.msra.mxu0 0
        %4072 = vmatprep.subr.bf16.mxu0 0
        %4073 = vmatpush1.bf16.msra.mxu0 0
        %4074 = vmatprep.mubr.bf16.mxu0 0
        %4075 = vmatmul.mubr.bf16.gmra.mrb[0].mxu0 %v4040
        %v4076 = vpop.f32.mrb[0].mxu0
        %v4077 = vadd.f32 0.0, %v4076
        %v4078 = vpop.f32.mrb[0].mxu0
        %v4079 = vpop.f32.mrb[0].mxu0
        %v4080 = vadd.f32 0.0, %v4079
        %v4081 = vpop.f32.mrb[0].mxu0
        %4082 = vdwg.mxu0
        %v4084 = vsel %vm3586, %v3879, 0
        %4086 = vmatprep.subr.bf16.mxu0 0
        %4087 = vmatpush1.bf16.msra.mxu0 %v3895
        %4088 = vmatprep.subr.bf16.mxu0 0
        %4089 = vmatpush1.bf16.msra.mxu0 0
        %4090 = vmatprep.subr.bf16.mxu0 0
        %4091 = vmatpush1.bf16.msra.mxu0 0
        %4092 = vmatprep.subr.bf16.mxu0 0
        %4093 = vmatpush1.bf16.msra.mxu0 0
        %4094 = vmatprep.subr.bf16.mxu0 0
        %4095 = vmatpush1.bf16.msra.mxu0 0
        %4096 = vmatprep.subr.bf16.mxu0 0
        %4097 = vmatpush1.bf16.msra.mxu0 0
        %4098 = vmatprep.subr.bf16.mxu0 0
        %4099 = vmatpush1.bf16.msra.mxu0 0
        %4100 = vmatprep.subr.bf16.mxu0 0
        %4101 = vmatpush1.bf16.msra.mxu0 0
        %4102 = vmatprep.subr.bf16.mxu0 0
        %4103 = vmatpush1.bf16.msra.mxu0 0
        %4104 = vmatprep.subr.bf16.mxu0 0
        %4105 = vmatpush1.bf16.msra.mxu0 0
        %4106 = vmatprep.subr.bf16.mxu0 0
        %4107 = vmatpush1.bf16.msra.mxu0 0
        %4108 = vmatprep.subr.bf16.mxu0 0
        %4109 = vmatpush1.bf16.msra.mxu0 0
        %4110 = vmatprep.subr.bf16.mxu0 0
        %4111 = vmatpush1.bf16.msra.mxu0 0
        %4112 = vmatprep.subr.bf16.mxu0 0
        %4113 = vmatpush1.bf16.msra.mxu0 0
        %4114 = vmatprep.subr.bf16.mxu0 0
        %4115 = vmatpush1.bf16.msra.mxu0 0
        %4116 = vmatprep.subr.bf16.mxu0 0
        %4117 = vmatpush1.bf16.msra.mxu0 0
        %4118 = vmatprep.mubr.bf16.mxu0 0
        %4119 = vmatmul.mubr.bf16.gmra.mrb[0].mxu0 %v4084
        %v4120 = vpop.f32.mrb[0].mxu0
        %v4121 = vadd.f32 0.0, %v4120
        %v4122 = vpop.f32.mrb[0].mxu0
        %v4123 = vpop.f32.mrb[0].mxu0
        %v4124 = vadd.f32 0.0, %v4123
        %v4125 = vpop.f32.mrb[0].mxu0
        %4126 = vdwg.mxu0
        %v4128 = vsel %vm3586, %v3880, 0
        %4130 = vmatprep.subr.bf16.mxu0 0
        %4131 = vmatpush1.bf16.msra.mxu0 %v3896
        %4132 = vmatprep.subr.bf16.mxu0 0
        %4133 = vmatpush1.bf16.msra.mxu0 0
        %4134 = vmatprep.subr.bf16.mxu0 0
        %4135 = vmatpush1.bf16.msra.mxu0 0
        %4136 = vmatprep.subr.bf16.mxu0 0
        %4137 = vmatpush1.bf16.msra.mxu0 0
        %4138 = vmatprep.subr.bf16.mxu0 0
        %4139 = vmatpush1.bf16.msra.mxu0 0
        %4140 = vmatprep.subr.bf16.mxu0 0
        %4141 = vmatpush1.bf16.msra.mxu0 0
        %4142 = vmatprep.subr.bf16.mxu0 0
        %4143 = vmatpush1.bf16.msra.mxu0 0
        %4144 = vmatprep.subr.bf16.mxu0 0
        %4145 = vmatpush1.bf16.msra.mxu0 0
        %4146 = vmatprep.subr.bf16.mxu0 0
        %4147 = vmatpush1.bf16.msra.mxu0 0
        %4148 = vmatprep.subr.bf16.mxu0 0
        %4149 = vmatpush1.bf16.msra.mxu0 0
        %4150 = vmatprep.subr.bf16.mxu0 0
        %4151 = vmatpush1.bf16.msra.mxu0 0
        %4152 = vmatprep.subr.bf16.mxu0 0
        %4153 = vmatpush1.bf16.msra.mxu0 0
        %4154 = vmatprep.subr.bf16.mxu0 0
        %4155 = vmatpush1.bf16.msra.mxu0 0
        %4156 = vmatprep.subr.bf16.mxu0 0
        %4157 = vmatpush1.bf16.msra.mxu0 0
        %4158 = vmatprep.subr.bf16.mxu0 0
        %4159 = vmatpush1.bf16.msra.mxu0 0
        %4160 = vmatprep.subr.bf16.mxu0 0
        %4161 = vmatpush1.bf16.msra.mxu0 0
        %4162 = vmatprep.mubr.bf16.mxu0 0
        %4163 = vmatmul.mubr.bf16.gmra.mrb[0].mxu0 %v4128
        %v4164 = vpop.f32.mrb[0].mxu0
        %v4165 = vadd.f32 0.0, %v4164
        %v4166 = vpop.f32.mrb[0].mxu0
        %v4167 = vpop.f32.mrb[0].mxu0
        %v4168 = vadd.f32 0.0, %v4167
        %v4169 = vpop.f32.mrb[0].mxu0
        %4170 = vdwg.mxu0
        %v4172 = vsel %vm3586, %v3881, 0
        %4174 = vmatprep.subr.bf16.mxu0 0
        %4175 = vmatpush1.bf16.msra.mxu0 %v3897
        %4176 = vmatprep.subr.bf16.mxu0 0
        %4177 = vmatpush1.bf16.msra.mxu0 0
        %4178 = vmatprep.subr.bf16.mxu0 0
        %4179 = vmatpush1.bf16.msra.mxu0 0
        %4180 = vmatprep.subr.bf16.mxu0 0
        %4181 = vmatpush1.bf16.msra.mxu0 0
        %4182 = vmatprep.subr.bf16.mxu0 0
        %4183 = vmatpush1.bf16.msra.mxu0 0
        %4184 = vmatprep.subr.bf16.mxu0 0
        %4185 = vmatpush1.bf16.msra.mxu0 0
        %4186 = vmatprep.subr.bf16.mxu0 0
        %4187 = vmatpush1.bf16.msra.mxu0 0
        %4188 = vmatprep.subr.bf16.mxu0 0
        %4189 = vmatpush1.bf16.msra.mxu0 0
        %4190 = vmatprep.subr.bf16.mxu0 0
        %4191 = vmatpush1.bf16.msra.mxu0 0
        %4192 = vmatprep.subr.bf16.mxu0 0
        %4193 = vmatpush1.bf16.msra.mxu0 0
        %4194 = vmatprep.subr.bf16.mxu0 0
        %4195 = vmatpush1.bf16.msra.mxu0 0
        %4196 = vmatprep.subr.bf16.mxu0 0
        %4197 = vmatpush1.bf16.msra.mxu0 0
        %4198 = vmatprep.subr.bf16.mxu0 0
        %4199 = vmatpush1.bf16.msra.mxu0 0
        %4200 = vmatprep.subr.bf16.mxu0 0
        %4201 = vmatpush1.bf16.msra.mxu0 0
        %4202 = vmatprep.subr.bf16.mxu0 0
        %4203 = vmatpush1.bf16.msra.mxu0 0
        %4204 = vmatprep.subr.bf16.mxu0 0
        %4205 = vmatpush1.bf16.msra.mxu0 0
        %4206 = vmatprep.mubr.bf16.mxu0 0
        %4207 = vmatmul.mubr.bf16.gmra.mrb[0].mxu0 %v4172
        %v4208 = vpop.f32.mrb[0].mxu0
        %v4209 = vadd.f32 0.0, %v4208
        %v4210 = vpop.f32.mrb[0].mxu0
        %v4211 = vpop.f32.mrb[0].mxu0
        %v4212 = vadd.f32 0.0, %v4211
        %v4213 = vpop.f32.mrb[0].mxu0
        %4214 = vdwg.mxu0
        %v4216 = vsel %vm3586, %v3882, 0
        %4218 = vmatprep.subr.bf16.mxu0 0
        %4219 = vmatpush1.bf16.msra.mxu0 %v3898
        %4220 = vmatprep.subr.bf16.mxu0 0
        %4221 = vmatpush1.bf16.msra.mxu0 0
        %4222 = vmatprep.subr.bf16.mxu0 0
        %4223 = vmatpush1.bf16.msra.mxu0 0
        %4224 = vmatprep.subr.bf16.mxu0 0
        %4225 = vmatpush1.bf16.msra.mxu0 0
        %4226 = vmatprep.subr.bf16.mxu0 0
        %4227 = vmatpush1.bf16.msra.mxu0 0
        %4228 = vmatprep.subr.bf16.mxu0 0
        %4229 = vmatpush1.bf16.msra.mxu0 0
        %4230 = vmatprep.subr.bf16.mxu0 0
        %4231 = vmatpush1.bf16.msra.mxu0 0
        %4232 = vmatprep.subr.bf16.mxu0 0
        %4233 = vmatpush1.bf16.msra.mxu0 0
        %4234 = vmatprep.subr.bf16.mxu0 0
        %4235 = vmatpush1.bf16.msra.mxu0 0
        %4236 = vmatprep.subr.bf16.mxu0 0
        %4237 = vmatpush1.bf16.msra.mxu0 0
        %4238 = vmatprep.subr.bf16.mxu0 0
        %4239 = vmatpush1.bf16.msra.mxu0 0
        %4240 = vmatprep.subr.bf16.mxu0 0
        %4241 = vmatpush1.bf16.msra.mxu0 0
        %4242 = vmatprep.subr.bf16.mxu0 0
        %4243 = vmatpush1.bf16.msra.mxu0 0
        %4244 = vmatprep.subr.bf16.mxu0 0
        %4245 = vmatpush1.bf16.msra.mxu0 0
        %4246 = vmatprep.subr.bf16.mxu0 0
        %4247 = vmatpush1.bf16.msra.mxu0 0
        %4248 = vmatprep.subr.bf16.mxu0 0
        %4249 = vmatpush1.bf16.msra.mxu0 0
        %4250 = vmatprep.mubr.bf16.mxu0 0
        %4251 = vmatmul.mubr.bf16.gmra.mrb[0].mxu0 %v4216
        %v4252 = vpop.f32.mrb[0].mxu0
        %v4253 = vadd.f32 0.0, %v4252
        %v4254 = vpop.f32.mrb[0].mxu0
        %v4255 = vpop.f32.mrb[0].mxu0
        %v4256 = vadd.f32 0.0, %v4255
        %v4257 = vpop.f32.mrb[0].mxu0
        %4258 = vdwg.mxu0
        %v4260 = vsel %vm3586, %v3883, 0
        %4262 = vmatprep.subr.bf16.mxu0 0
        %4263 = vmatpush1.bf16.msra.mxu0 %v3899
        %4264 = vmatprep.subr.bf16.mxu0 0
        %4265 = vmatpush1.bf16.msra.mxu0 0
        %4266 = vmatprep.subr.bf16.mxu0 0
        %4267 = vmatpush1.bf16.msra.mxu0 0
        %4268 = vmatprep.subr.bf16.mxu0 0
        %4269 = vmatpush1.bf16.msra.mxu0 0
        %4270 = vmatprep.subr.bf16.mxu0 0
        %4271 = vmatpush1.bf16.msra.mxu0 0
        %4272 = vmatprep.subr.bf16.mxu0 0
        %4273 = vmatpush1.bf16.msra.mxu0 0
        %4274 = vmatprep.subr.bf16.mxu0 0
        %4275 = vmatpush1.bf16.msra.mxu0 0
        %4276 = vmatprep.subr.bf16.mxu0 0
        %4277 = vmatpush1.bf16.msra.mxu0 0
        %4278 = vmatprep.subr.bf16.mxu0 0
        %4279 = vmatpush1.bf16.msra.mxu0 0
        %4280 = vmatprep.subr.bf16.mxu0 0
        %4281 = vmatpush1.bf16.msra.mxu0 0
        %4282 = vmatprep.subr.bf16.mxu0 0
        %4283 = vmatpush1.bf16.msra.mxu0 0
        %4284 = vmatprep.subr.bf16.mxu0 0
        %4285 = vmatpush1.bf16.msra.mxu0 0
        %4286 = vmatprep.subr.bf16.mxu0 0
        %4287 = vmatpush1.bf16.msra.mxu0 0
        %4288 = vmatprep.subr.bf16.mxu0 0
        %4289 = vmatpush1.bf16.msra.mxu0 0
        %4290 = vmatprep.subr.bf16.mxu0 0
        %4291 = vmatpush1.bf16.msra.mxu0 0
        %4292 = vmatprep.subr.bf16.mxu0 0
        %4293 = vmatpush1.bf16.msra.mxu0 0
        %4294 = vmatprep.mubr.bf16.mxu0 0
        %4295 = vmatmul.mubr.bf16.gmra.mrb[0].mxu0 %v4260
        %v4296 = vpop.f32.mrb[0].mxu0
        %v4297 = vadd.f32 0.0, %v4296
        %v4298 = vpop.f32.mrb[0].mxu0
        %v4299 = vpop.f32.mrb[0].mxu0
        %v4300 = vadd.f32 0.0, %v4299
        %v4301 = vpop.f32.mrb[0].mxu0
        %4302 = vdwg.mxu0
        %v4304 = vsel %vm3586, %v3884, 0
        %4306 = vmatprep.subr.bf16.mxu0 0
        %4307 = vmatpush1.bf16.msra.mxu0 %v3900
        %4308 = vmatprep.subr.bf16.mxu0 0
        %4309 = vmatpush1.bf16.msra.mxu0 0
        %4310 = vmatprep.subr.bf16.mxu0 0
        %4311 = vmatpush1.bf16.msra.mxu0 0
        %4312 = vmatprep.subr.bf16.mxu0 0
        %4313 = vmatpush1.bf16.msra.mxu0 0
        %4314 = vmatprep.subr.bf16.mxu0 0
        %4315 = vmatpush1.bf16.msra.mxu0 0
        %4316 = vmatprep.subr.bf16.mxu0 0
        %4317 = vmatpush1.bf16.msra.mxu0 0
        %4318 = vmatprep.subr.bf16.mxu0 0
        %4319 = vmatpush1.bf16.msra.mxu0 0
        %4320 = vmatprep.subr.bf16.mxu0 0
        %4321 = vmatpush1.bf16.msra.mxu0 0
        %4322 = vmatprep.subr.bf16.mxu0 0
        %4323 = vmatpush1.bf16.msra.mxu0 0
        %4324 = vmatprep.subr.bf16.mxu0 0
        %4325 = vmatpush1.bf16.msra.mxu0 0
        %4326 = vmatprep.subr.bf16.mxu0 0
        %4327 = vmatpush1.bf16.msra.mxu0 0
        %4328 = vmatprep.subr.bf16.mxu0 0
        %4329 = vmatpush1.bf16.msra.mxu0 0
        %4330 = vmatprep.subr.bf16.mxu0 0
        %4331 = vmatpush1.bf16.msra.mxu0 0
        %4332 = vmatprep.subr.bf16.mxu0 0
        %4333 = vmatpush1.bf16.msra.mxu0 0
        %4334 = vmatprep.subr.bf16.mxu0 0
        %4335 = vmatpush1.bf16.msra.mxu0 0
        %4336 = vmatprep.subr.bf16.mxu0 0
        %4337 = vmatpush1.bf16.msra.mxu0 0
        %4338 = vmatprep.mubr.bf16.mxu0 0
        %4339 = vmatmul.mubr.bf16.gmra.mrb[0].mxu0 %v4304
        %v4340 = vpop.f32.mrb[0].mxu0
        %v4341 = vadd.f32 0.0, %v4340
        %v4342 = vpop.f32.mrb[0].mxu0
        %v4343 = vpop.f32.mrb[0].mxu0
        %v4344 = vadd.f32 0.0, %v4343
        %v4345 = vpop.f32.mrb[0].mxu0
        %4346 = vdwg.mxu0
        %v4348 = vsel %vm3586, %v3885, 0
        %4350 = vmatprep.subr.bf16.mxu0 0
        %4351 = vmatpush1.bf16.msra.mxu0 %v3901
        %4352 = vmatprep.subr.bf16.mxu0 0
        %4353 = vmatpush1.bf16.msra.mxu0 0
        %4354 = vmatprep.subr.bf16.mxu0 0
        %4355 = vmatpush1.bf16.msra.mxu0 0
        %4356 = vmatprep.subr.bf16.mxu0 0
        %4357 = vmatpush1.bf16.msra.mxu0 0
        %4358 = vmatprep.subr.bf16.mxu0 0
        %4359 = vmatpush1.bf16.msra.mxu0 0
        %4360 = vmatprep.subr.bf16.mxu0 0
        %4361 = vmatpush1.bf16.msra.mxu0 0
        %4362 = vmatprep.subr.bf16.mxu0 0
        %4363 = vmatpush1.bf16.msra.mxu0 0
        %4364 = vmatprep.subr.bf16.mxu0 0
        %4365 = vmatpush1.bf16.msra.mxu0 0
        %4366 = vmatprep.subr.bf16.mxu0 0
        %4367 = vmatpush1.bf16.msra.mxu0 0
        %4368 = vmatprep.subr.bf16.mxu0 0
        %4369 = vmatpush1.bf16.msra.mxu0 0
        %4370 = vmatprep.subr.bf16.mxu0 0
        %4371 = vmatpush1.bf16.msra.mxu0 0
        %4372 = vmatprep.subr.bf16.mxu0 0
        %4373 = vmatpush1.bf16.msra.mxu0 0
        %4374 = vmatprep.subr.bf16.mxu0 0
        %4375 = vmatpush1.bf16.msra.mxu0 0
        %4376 = vmatprep.subr.bf16.mxu0 0
        %4377 = vmatpush1.bf16.msra.mxu0 0
        %4378 = vmatprep.subr.bf16.mxu0 0
        %4379 = vmatpush1.bf16.msra.mxu0 0
        %4380 = vmatprep.subr.bf16.mxu0 0
        %4381 = vmatpush1.bf16.msra.mxu0 0
        %4382 = vmatprep.mubr.bf16.mxu0 0
        %4383 = vmatmul.mubr.bf16.gmra.mrb[0].mxu0 %v4348
        %v4384 = vpop.f32.mrb[0].mxu0
        %v4385 = vadd.f32 0.0, %v4384
        %v4386 = vpop.f32.mrb[0].mxu0
        %v4387 = vpop.f32.mrb[0].mxu0
        %v4388 = vadd.f32 0.0, %v4387
        %v4389 = vpop.f32.mrb[0].mxu0
        %4390 = vdwg.mxu0
        %v4392 = vsel %vm3586, %v3886, 0
        %4394 = vmatprep.subr.bf16.mxu0 0
        %4395 = vmatpush1.bf16.msra.mxu0 %v3902
        %4396 = vmatprep.subr.bf16.mxu0 0
        %4397 = vmatpush1.bf16.msra.mxu0 0
        %4398 = vmatprep.subr.bf16.mxu0 0
        %4399 = vmatpush1.bf16.msra.mxu0 0
        %4400 = vmatprep.subr.bf16.mxu0 0
        %4401 = vmatpush1.bf16.msra.mxu0 0
        %4402 = vmatprep.subr.bf16.mxu0 0
        %4403 = vmatpush1.bf16.msra.mxu0 0
        %4404 = vmatprep.subr.bf16.mxu0 0
        %4405 = vmatpush1.bf16.msra.mxu0 0
        %4406 = vmatprep.subr.bf16.mxu0 0
        %4407 = vmatpush1.bf16.msra.mxu0 0
        %4408 = vmatprep.subr.bf16.mxu0 0
        %4409 = vmatpush1.bf16.msra.mxu0 0
        %4410 = vmatprep.subr.bf16.mxu0 0
        %4411 = vmatpush1.bf16.msra.mxu0 0
        %4412 = vmatprep.subr.bf16.mxu0 0
        %4413 = vmatpush1.bf16.msra.mxu0 0
        %4414 = vmatprep.subr.bf16.mxu0 0
        %4415 = vmatpush1.bf16.msra.mxu0 0
        %4416 = vmatprep.subr.bf16.mxu0 0
        %4417 = vmatpush1.bf16.msra.mxu0 0
        %4418 = vmatprep.subr.bf16.mxu0 0
        %4419 = vmatpush1.bf16.msra.mxu0 0
        %4420 = vmatprep.subr.bf16.mxu0 0
        %4421 = vmatpush1.bf16.msra.mxu0 0
        %4422 = vmatprep.subr.bf16.mxu0 0
        %4423 = vmatpush1.bf16.msra.mxu0 0
        %4424 = vmatprep.subr.bf16.mxu0 0
        %4425 = vmatpush1.bf16.msra.mxu0 0
        %4426 = vmatprep.mubr.bf16.mxu0 0
        %4427 = vmatmul.mubr.bf16.gmra.mrb[0].mxu0 %v4392
        %v4428 = vpop.f32.mrb[0].mxu0
        %v4429 = vadd.f32 0.0, %v4428
        %v4430 = vpop.f32.mrb[0].mxu0
        %v4431 = vpop.f32.mrb[0].mxu0
        %v4432 = vadd.f32 0.0, %v4431
        %v4433 = vpop.f32.mrb[0].mxu0
        %4434 = vdwg.mxu0
        %v4436 = vsel %vm3586, %v3887, 0
        %4438 = vmatprep.subr.bf16.mxu0 0
        %4439 = vmatpush1.bf16.msra.mxu0 %v3903
        %4440 = vmatprep.subr.bf16.mxu0 0
        %4441 = vmatpush1.bf16.msra.mxu0 0
        %4442 = vmatprep.subr.bf16.mxu0 0
        %4443 = vmatpush1.bf16.msra.mxu0 0
        %4444 = vmatprep.subr.bf16.mxu0 0
        %4445 = vmatpush1.bf16.msra.mxu0 0
        %4446 = vmatprep.subr.bf16.mxu0 0
        %4447 = vmatpush1.bf16.msra.mxu0 0
        %4448 = vmatprep.subr.bf16.mxu0 0
        %4449 = vmatpush1.bf16.msra.mxu0 0
        %4450 = vmatprep.subr.bf16.mxu0 0
        %4451 = vmatpush1.bf16.msra.mxu0 0
        %4452 = vmatprep.subr.bf16.mxu0 0
        %4453 = vmatpush1.bf16.msra.mxu0 0
        %4454 = vmatprep.subr.bf16.mxu0 0
        %4455 = vmatpush1.bf16.msra.mxu0 0
        %4456 = vmatprep.subr.bf16.mxu0 0
        %4457 = vmatpush1.bf16.msra.mxu0 0
        %4458 = vmatprep.subr.bf16.mxu0 0
        %4459 = vmatpush1.bf16.msra.mxu0 0
        %4460 = vmatprep.subr.bf16.mxu0 0
        %4461 = vmatpush1.bf16.msra.mxu0 0
        %4462 = vmatprep.subr.bf16.mxu0 0
        %4463 = vmatpush1.bf16.msra.mxu0 0
        %4464 = vmatprep.subr.bf16.mxu0 0
        %4465 = vmatpush1.bf16.msra.mxu0 0
        %4466 = vmatprep.subr.bf16.mxu0 0
        %4467 = vmatpush1.bf16.msra.mxu0 0
        %4468 = vmatprep.subr.bf16.mxu0 0
        %4469 = vmatpush1.bf16.msra.mxu0 0
        %4470 = vmatprep.mubr.bf16.mxu0 0
        %4471 = vmatmul.mubr.bf16.gmra.mrb[0].mxu0 %v4436
        %v4472 = vpop.f32.mrb[0].mxu0
        %v4473 = vadd.f32 0.0, %v4472
        %v4474 = vpop.f32.mrb[0].mxu0
        %v4475 = vpop.f32.mrb[0].mxu0
        %v4476 = vadd.f32 0.0, %v4475
        %v4477 = vpop.f32.mrb[0].mxu0
        %4478 = vdwg.mxu0
        %v4480 = vsel %vm3586, %v3888, 0
        %4482 = vmatprep.subr.bf16.mxu0 0
        %4483 = vmatpush1.bf16.msra.mxu0 %v3904
        %4484 = vmatprep.subr.bf16.mxu0 0
        %4485 = vmatpush1.bf16.msra.mxu0 0
        %4486 = vmatprep.subr.bf16.mxu0 0
        %4487 = vmatpush1.bf16.msra.mxu0 0
        %4488 = vmatprep.subr.bf16.mxu0 0
        %4489 = vmatpush1.bf16.msra.mxu0 0
        %4490 = vmatprep.subr.bf16.mxu0 0
        %4491 = vmatpush1.bf16.msra.mxu0 0
        %4492 = vmatprep.subr.bf16.mxu0 0
        %4493 = vmatpush1.bf16.msra.mxu0 0
        %4494 = vmatprep.subr.bf16.mxu0 0
        %4495 = vmatpush1.bf16.msra.mxu0 0
        %4496 = vmatprep.subr.bf16.mxu0 0
        %4497 = vmatpush1.bf16.msra.mxu0 0
        %4498 = vmatprep.subr.bf16.mxu0 0
        %4499 = vmatpush1.bf16.msra.mxu0 0
        %4500 = vmatprep.subr.bf16.mxu0 0
        %4501 = vmatpush1.bf16.msra.mxu0 0
        %4502 = vmatprep.subr.bf16.mxu0 0
        %4503 = vmatpush1.bf16.msra.mxu0 0
        %4504 = vmatprep.subr.bf16.mxu0 0
        %4505 = vmatpush1.bf16.msra.mxu0 0
        %4506 = vmatprep.subr.bf16.mxu0 0
        %4507 = vmatpush1.bf16.msra.mxu0 0
        %4508 = vmatprep.subr.bf16.mxu0 0
        %4509 = vmatpush1.bf16.msra.mxu0 0
        %4510 = vmatprep.subr.bf16.mxu0 0
        %4511 = vmatpush1.bf16.msra.mxu0 0
        %4512 = vmatprep.subr.bf16.mxu0 0
        %4513 = vmatpush1.bf16.msra.mxu0 0
        %4514 = vmatprep.mubr.bf16.mxu0 0
        %4515 = vmatmul.mubr.bf16.gmra.mrb[0].mxu0 %v4480
        %v4516 = vpop.f32.mrb[0].mxu0
        %v4517 = vadd.f32 0.0, %v4516
        %v4518 = vpop.f32.mrb[0].mxu0
        %v4519 = vpop.f32.mrb[0].mxu0
        %v4520 = vadd.f32 0.0, %v4519
        %v4521 = vpop.f32.mrb[0].mxu0
        %4522 = vdwg.mxu0
        %v4524 = vsel %vm3586, %v3889, 0
        %4526 = vmatprep.subr.bf16.mxu0 0
        %4527 = vmatpush1.bf16.msra.mxu0 %v3905
        %4528 = vmatprep.subr.bf16.mxu0 0
        %4529 = vmatpush1.bf16.msra.mxu0 0
        %4530 = vmatprep.subr.bf16.mxu0 0
        %4531 = vmatpush1.bf16.msra.mxu0 0
        %4532 = vmatprep.subr.bf16.mxu0 0
        %4533 = vmatpush1.bf16.msra.mxu0 0
        %4534 = vmatprep.subr.bf16.mxu0 0
        %4535 = vmatpush1.bf16.msra.mxu0 0
        %4536 = vmatprep.subr.bf16.mxu0 0
        %4537 = vmatpush1.bf16.msra.mxu0 0
        %4538 = vmatprep.subr.bf16.mxu0 0
        %4539 = vmatpush1.bf16.msra.mxu0 0
        %4540 = vmatprep.subr.bf16.mxu0 0
        %4541 = vmatpush1.bf16.msra.mxu0 0
        %4542 = vmatprep.subr.bf16.mxu0 0
        %4543 = vmatpush1.bf16.msra.mxu0 0
        %4544 = vmatprep.subr.bf16.mxu0 0
        %4545 = vmatpush1.bf16.msra.mxu0 0
        %4546 = vmatprep.subr.bf16.mxu0 0
        %4547 = vmatpush1.bf16.msra.mxu0 0
        %4548 = vmatprep.subr.bf16.mxu0 0
        %4549 = vmatpush1.bf16.msra.mxu0 0
        %4550 = vmatprep.subr.bf16.mxu0 0
        %4551 = vmatpush1.bf16.msra.mxu0 0
        %4552 = vmatprep.subr.bf16.mxu0 0
        %4553 = vmatpush1.bf16.msra.mxu0 0
        %4554 = vmatprep.subr.bf16.mxu0 0
        %4555 = vmatpush1.bf16.msra.mxu0 0
        %4556 = vmatprep.subr.bf16.mxu0 0
        %4557 = vmatpush1.bf16.msra.mxu0 0
        %4558 = vmatprep.mubr.bf16.mxu0 0
        %4559 = vmatmul.mubr.bf16.gmra.mrb[0].mxu0 %v4524
        %v4560 = vpop.f32.mrb[0].mxu0
        %v4561 = vadd.f32 0.0, %v4560
        %v4562 = vpop.f32.mrb[0].mxu0
        %v4563 = vpop.f32.mrb[0].mxu0
        %v4564 = vadd.f32 0.0, %v4563
        %v4565 = vpop.f32.mrb[0].mxu0
        %4566 = vdwg.mxu0
        %v4568 = vsel %vm3586, %v3890, 0
        %4570 = vmatprep.subr.bf16.mxu0 0
        %4571 = vmatpush1.bf16.msra.mxu0 %v3906
        %4572 = vmatprep.subr.bf16.mxu0 0
        %4573 = vmatpush1.bf16.msra.mxu0 0
        %4574 = vmatprep.subr.bf16.mxu0 0
        %4575 = vmatpush1.bf16.msra.mxu0 0
        %4576 = vmatprep.subr.bf16.mxu0 0
        %4577 = vmatpush1.bf16.msra.mxu0 0
        %4578 = vmatprep.subr.bf16.mxu0 0
        %4579 = vmatpush1.bf16.msra.mxu0 0
        %4580 = vmatprep.subr.bf16.mxu0 0
        %4581 = vmatpush1.bf16.msra.mxu0 0
        %4582 = vmatprep.subr.bf16.mxu0 0
        %4583 = vmatpush1.bf16.msra.mxu0 0
        %4584 = vmatprep.subr.bf16.mxu0 0
        %4585 = vmatpush1.bf16.msra.mxu0 0
        %4586 = vmatprep.subr.bf16.mxu0 0
        %4587 = vmatpush1.bf16.msra.mxu0 0
        %4588 = vmatprep.subr.bf16.mxu0 0
        %4589 = vmatpush1.bf16.msra.mxu0 0
        %4590 = vmatprep.subr.bf16.mxu0 0
        %4591 = vmatpush1.bf16.msra.mxu0 0
        %4592 = vmatprep.subr.bf16.mxu0 0
        %4593 = vmatpush1.bf16.msra.mxu0 0
        %4594 = vmatprep.subr.bf16.mxu0 0
        %4595 = vmatpush1.bf16.msra.mxu0 0
        %4596 = vmatprep.subr.bf16.mxu0 0
        %4597 = vmatpush1.bf16.msra.mxu0 0
        %4598 = vmatprep.subr.bf16.mxu0 0
        %4599 = vmatpush1.bf16.msra.mxu0 0
        %4600 = vmatprep.subr.bf16.mxu0 0
        %4601 = vmatpush1.bf16.msra.mxu0 0
        %4602 = vmatprep.mubr.bf16.mxu0 0
        %4603 = vmatmul.mubr.bf16.gmra.mrb[0].mxu0 %v4568
        %v4604 = vpop.f32.mrb[0].mxu0
        %v4605 = vadd.f32 0.0, %v4604
        %v4606 = vpop.f32.mrb[0].mxu0
        %v4607 = vpop.f32.mrb[0].mxu0
        %v4608 = vadd.f32 0.0, %v4607
        %v4609 = vpop.f32.mrb[0].mxu0
        %4610 = vdwg.mxu0
        %v4611 = vrcp.pop %v3781
        %v4612 = vrcp.pop %v3784
        %v4613 = vrcp.pop %v3787
        %v4614 = vrcp.pop %v3790
        %v4615 = vrcp.pop %v3793
        %v4616 = vrcp.pop %v3796
        %v4617 = vrcp.pop %v3799
        %v4618 = vrcp.pop %v3802
        %v4619 = vrcp.pop %v3805
        %v4620 = vrcp.pop %v3808
        %v4621 = vrcp.pop %v3811
        %v4622 = vrcp.pop %v3814
        %v4623 = vrcp.pop %v3817
        %v4624 = vrcp.pop %v3820
        %v4625 = vrcp.pop %v3823
        %v4626 = vrcp.pop %v3826
        %v4627 = vrcp.pop %v3829
        %v4628 = vrcp.pop %v3832
        %v4629 = vrcp.pop %v3835
        %v4630 = vrcp.pop %v3838
        %v4631 = vrcp.pop %v3841
        %v4632 = vrcp.pop %v3844
        %v4633 = vrcp.pop %v3847
        %v4634 = vrcp.pop %v3850
        %v4635 = vrcp.pop %v3853
        %v4636 = vrcp.pop %v3856
        %v4637 = vrcp.pop %v3859
        %v4638 = vrcp.pop %v3862
        %v4639 = vrcp.pop %v3865
        %v4640 = vrcp.pop %v3868
        %v4641 = vrcp.pop %v3871
        %v4642 = vrcp.pop %v3874
        %v4643 = vmul.f32 %v3945, %v4611
        %v4644 = vmul.f32 %v3948, %v4612
        %v4645 = vmul.f32 %v3989, %v4613
        %v4646 = vmul.f32 %v3992, %v4614
        %v4647 = vmul.f32 %v4033, %v4615
        %v4648 = vmul.f32 %v4036, %v4616
        %v4649 = vmul.f32 %v4077, %v4617
        %v4650 = vmul.f32 %v4080, %v4618
        %v4651 = vmul.f32 %v4121, %v4619
        %v4652 = vmul.f32 %v4124, %v4620
        %v4653 = vmul.f32 %v4165, %v4621
        %v4654 = vmul.f32 %v4168, %v4622
        %v4655 = vmul.f32 %v4209, %v4623
        %v4656 = vmul.f32 %v4212, %v4624
        %v4657 = vmul.f32 %v4253, %v4625
        %v4658 = vmul.f32 %v4256, %v4626
        %v4659 = vmul.f32 %v4297, %v4627
        %v4660 = vmul.f32 %v4300, %v4628
        %v4661 = vmul.f32 %v4341, %v4629
        %v4662 = vmul.f32 %v4344, %v4630
        %v4663 = vmul.f32 %v4385, %v4631
        %v4664 = vmul.f32 %v4388, %v4632
        %v4665 = vmul.f32 %v4429, %v4633
        %v4666 = vmul.f32 %v4432, %v4634
        %v4667 = vmul.f32 %v4473, %v4635
        %v4668 = vmul.f32 %v4476, %v4636
        %v4669 = vmul.f32 %v4517, %v4637
        %v4670 = vmul.f32 %v4520, %v4638
        %v4671 = vmul.f32 %v4561, %v4639
        %v4672 = vmul.f32 %v4564, %v4640
        %v4673 = vmul.f32 %v4605, %v4641
        %v4674 = vmul.f32 %v4608, %v4642
        %v4675 = vpack.c.bf16 %v4644, %v4643
        %v4676 = vpack.c.bf16 %v4646, %v4645
        %v4677 = vpack.c.bf16 %v4648, %v4647
        %v4678 = vpack.c.bf16 %v4650, %v4649
        %v4679 = vpack.c.bf16 %v4652, %v4651
        %v4680 = vpack.c.bf16 %v4654, %v4653
        %v4681 = vpack.c.bf16 %v4656, %v4655
        %v4682 = vpack.c.bf16 %v4658, %v4657
        %v4683 = vpack.c.bf16 %v4660, %v4659
        %v4684 = vpack.c.bf16 %v4662, %v4661
        %v4685 = vpack.c.bf16 %v4664, %v4663
        %v4686 = vpack.c.bf16 %v4666, %v4665
        %v4687 = vpack.c.bf16 %v4668, %v4667
        %v4688 = vpack.c.bf16 %v4670, %v4669
        %v4689 = vpack.c.bf16 %v4672, %v4671
        %v4690 = vpack.c.bf16 %v4674, %v4673
        %v4692 = vsel %vm2833, %v4675, 0
        %vm4694 = vcmask 1043456
        %v4696 = vsel %vm4694, %v383, 0
        %4698 = vmatprep.subr.bf16.mxu0 0
        %4699 = vmatpush1.bf16.msra.mxu0 %v4696
        %4700 = vmatprep.subr.bf16.mxu0 0
        %4701 = vmatpush1.bf16.msra.mxu0 0
        %4702 = vmatprep.subr.bf16.mxu0 0
        %4703 = vmatpush1.bf16.msra.mxu0 0
        %4704 = vmatprep.subr.bf16.mxu0 0
        %4705 = vmatpush1.bf16.msra.mxu0 0
        %4706 = vmatprep.subr.bf16.mxu0 0
        %4707 = vmatpush1.bf16.msra.mxu0 0
        %4708 = vmatprep.subr.bf16.mxu0 0
        %4709 = vmatpush1.bf16.msra.mxu0 0
        %4710 = vmatprep.subr.bf16.mxu0 0
        %4711 = vmatpush1.bf16.msra.mxu0 0
        %4712 = vmatprep.subr.bf16.mxu0 0
        %4713 = vmatpush1.bf16.msra.mxu0 0
        %4714 = vmatprep.subr.bf16.mxu0 0
        %4715 = vmatpush1.bf16.msra.mxu0 0
        %4716 = vmatprep.subr.bf16.mxu0 0
        %4717 = vmatpush1.bf16.msra.mxu0 0
        %4718 = vmatprep.subr.bf16.mxu0 0
        %4719 = vmatpush1.bf16.msra.mxu0 0
        %4720 = vmatprep.subr.bf16.mxu0 0
        %4721 = vmatpush1.bf16.msra.mxu0 0
        %4722 = vmatprep.subr.bf16.mxu0 0
        %4723 = vmatpush1.bf16.msra.mxu0 0
        %4724 = vmatprep.subr.bf16.mxu0 0
        %4725 = vmatpush1.bf16.msra.mxu0 0
        %4726 = vmatprep.subr.bf16.mxu0 0
        %4727 = vmatpush1.bf16.msra.mxu0 0
        %4728 = vmatprep.subr.bf16.mxu0 0
        %4729 = vmatpush1.bf16.msra.mxu0 0
        %4730 = vmatprep.mubr.bf16.mxu0 0
        %4731 = vmatmul.mubr.bf16.gmra.mrb[0].mxu0 %v4692
        %v4732 = vpop.f32.mrb[0].mxu0
        %v4733 = vadd.f32 0.0, %v4732
        %v4734 = vpop.f32.mrb[0].mxu0
        %v4735 = vpop.f32.mrb[0].mxu0
        %v4736 = vadd.f32 0.0, %v4735
        %v4737 = vpop.f32.mrb[0].mxu0
        %4738 = vdwg.mxu0
        %v4740 = vsel %vm2833, %v4676, 0
        %v4743 = vsel %vm4694, %v384, 0
        %4745 = vmatprep.subr.bf16.mxu0 0
        %4746 = vmatpush1.bf16.msra.mxu0 %v4743
        %4747 = vmatprep.subr.bf16.mxu0 0
        %4748 = vmatpush1.bf16.msra.mxu0 0
        %4749 = vmatprep.subr.bf16.mxu0 0
        %4750 = vmatpush1.bf16.msra.mxu0 0
        %4751 = vmatprep.subr.bf16.mxu0 0
        %4752 = vmatpush1.bf16.msra.mxu0 0
        %4753 = vmatprep.subr.bf16.mxu0 0
        %4754 = vmatpush1.bf16.msra.mxu0 0
        %4755 = vmatprep.subr.bf16.mxu0 0
        %4756 = vmatpush1.bf16.msra.mxu0 0
        %4757 = vmatprep.subr.bf16.mxu0 0
        %4758 = vmatpush1.bf16.msra.mxu0 0
        %4759 = vmatprep.subr.bf16.mxu0 0
        %4760 = vmatpush1.bf16.msra.mxu0 0
        %4761 = vmatprep.subr.bf16.mxu0 0
        %4762 = vmatpush1.bf16.msra.mxu0 0
        %4763 = vmatprep.subr.bf16.mxu0 0
        %4764 = vmatpush1.bf16.msra.mxu0 0
        %4765 = vmatprep.subr.bf16.mxu0 0
        %4766 = vmatpush1.bf16.msra.mxu0 0
        %4767 = vmatprep.subr.bf16.mxu0 0
        %4768 = vmatpush1.bf16.msra.mxu0 0
        %4769 = vmatprep.subr.bf16.mxu0 0
        %4770 = vmatpush1.bf16.msra.mxu0 0
        %4771 = vmatprep.subr.bf16.mxu0 0
        %4772 = vmatpush1.bf16.msra.mxu0 0
        %4773 = vmatprep.subr.bf16.mxu0 0
        %4774 = vmatpush1.bf16.msra.mxu0 0
        %4775 = vmatprep.subr.bf16.mxu0 0
        %4776 = vmatpush1.bf16.msra.mxu0 0
        %4777 = vmatprep.mubr.bf16.mxu0 0
        %4778 = vmatmul.mubr.bf16.gmra.mrb[0].mxu0 %v4740
        %v4779 = vpop.f32.mrb[0].mxu0
        %v4780 = vadd.f32 0.0, %v4779
        %v4781 = vpop.f32.mrb[0].mxu0
        %v4782 = vpop.f32.mrb[0].mxu0
        %v4783 = vadd.f32 0.0, %v4782
        %v4784 = vpop.f32.mrb[0].mxu0
        %4785 = vdwg.mxu0
        %v4787 = vsel %vm2833, %v4677, 0
        %v4790 = vsel %vm4694, %v385, 0
        %4792 = vmatprep.subr.bf16.mxu0 0
        %4793 = vmatpush1.bf16.msra.mxu0 %v4790
        %4794 = vmatprep.subr.bf16.mxu0 0
        %4795 = vmatpush1.bf16.msra.mxu0 0
        %4796 = vmatprep.subr.bf16.mxu0 0
        %4797 = vmatpush1.bf16.msra.mxu0 0
        %4798 = vmatprep.subr.bf16.mxu0 0
        %4799 = vmatpush1.bf16.msra.mxu0 0
        %4800 = vmatprep.subr.bf16.mxu0 0
        %4801 = vmatpush1.bf16.msra.mxu0 0
        %4802 = vmatprep.subr.bf16.mxu0 0
        %4803 = vmatpush1.bf16.msra.mxu0 0
        %4804 = vmatprep.subr.bf16.mxu0 0
        %4805 = vmatpush1.bf16.msra.mxu0 0
        %4806 = vmatprep.subr.bf16.mxu0 0
        %4807 = vmatpush1.bf16.msra.mxu0 0
        %4808 = vmatprep.subr.bf16.mxu0 0
        %4809 = vmatpush1.bf16.msra.mxu0 0
        %4810 = vmatprep.subr.bf16.mxu0 0
        %4811 = vmatpush1.bf16.msra.mxu0 0
        %4812 = vmatprep.subr.bf16.mxu0 0
        %4813 = vmatpush1.bf16.msra.mxu0 0
        %4814 = vmatprep.subr.bf16.mxu0 0
        %4815 = vmatpush1.bf16.msra.mxu0 0
        %4816 = vmatprep.subr.bf16.mxu0 0
        %4817 = vmatpush1.bf16.msra.mxu0 0
        %4818 = vmatprep.subr.bf16.mxu0 0
        %4819 = vmatpush1.bf16.msra.mxu0 0
        %4820 = vmatprep.subr.bf16.mxu0 0
        %4821 = vmatpush1.bf16.msra.mxu0 0
        %4822 = vmatprep.subr.bf16.mxu0 0
        %4823 = vmatpush1.bf16.msra.mxu0 0
        %4824 = vmatprep.mubr.bf16.mxu0 0
        %4825 = vmatmul.mubr.bf16.gmra.mrb[0].mxu0 %v4787
        %v4826 = vpop.f32.mrb[0].mxu0
        %v4827 = vadd.f32 0.0, %v4826
        %v4828 = vpop.f32.mrb[0].mxu0
        %v4829 = vpop.f32.mrb[0].mxu0
        %v4830 = vadd.f32 0.0, %v4829
        %v4831 = vpop.f32.mrb[0].mxu0
        %4832 = vdwg.mxu0
        %v4834 = vsel %vm2833, %v4678, 0
        %v4837 = vsel %vm4694, %v386, 0
        %4839 = vmatprep.subr.bf16.mxu0 0
        %4840 = vmatpush1.bf16.msra.mxu0 %v4837
        %4841 = vmatprep.subr.bf16.mxu0 0
        %4842 = vmatpush1.bf16.msra.mxu0 0
        %4843 = vmatprep.subr.bf16.mxu0 0
        %4844 = vmatpush1.bf16.msra.mxu0 0
        %4845 = vmatprep.subr.bf16.mxu0 0
        %4846 = vmatpush1.bf16.msra.mxu0 0
        %4847 = vmatprep.subr.bf16.mxu0 0
        %4848 = vmatpush1.bf16.msra.mxu0 0
        %4849 = vmatprep.subr.bf16.mxu0 0
        %4850 = vmatpush1.bf16.msra.mxu0 0
        %4851 = vmatprep.subr.bf16.mxu0 0
        %4852 = vmatpush1.bf16.msra.mxu0 0
        %4853 = vmatprep.subr.bf16.mxu0 0
        %4854 = vmatpush1.bf16.msra.mxu0 0
        %4855 = vmatprep.subr.bf16.mxu0 0
        %4856 = vmatpush1.bf16.msra.mxu0 0
        %4857 = vmatprep.subr.bf16.mxu0 0
        %4858 = vmatpush1.bf16.msra.mxu0 0
        %4859 = vmatprep.subr.bf16.mxu0 0
        %4860 = vmatpush1.bf16.msra.mxu0 0
        %4861 = vmatprep.subr.bf16.mxu0 0
        %4862 = vmatpush1.bf16.msra.mxu0 0
        %4863 = vmatprep.subr.bf16.mxu0 0
        %4864 = vmatpush1.bf16.msra.mxu0 0
        %4865 = vmatprep.subr.bf16.mxu0 0
        %4866 = vmatpush1.bf16.msra.mxu0 0
        %4867 = vmatprep.subr.bf16.mxu0 0
        %4868 = vmatpush1.bf16.msra.mxu0 0
        %4869 = vmatprep.subr.bf16.mxu0 0
        %4870 = vmatpush1.bf16.msra.mxu0 0
        %4871 = vmatprep.mubr.bf16.mxu0 0
        %4872 = vmatmul.mubr.bf16.gmra.mrb[0].mxu0 %v4834
        %v4873 = vpop.f32.mrb[0].mxu0
        %v4874 = vadd.f32 0.0, %v4873
        %v4875 = vpop.f32.mrb[0].mxu0
        %v4876 = vpop.f32.mrb[0].mxu0
        %v4877 = vadd.f32 0.0, %v4876
        %v4878 = vpop.f32.mrb[0].mxu0
        %4879 = vdwg.mxu0
        %v4881 = vsel %vm2833, %v4679, 0
        %v4884 = vsel %vm4694, %v387, 0
        %4886 = vmatprep.subr.bf16.mxu0 0
        %4887 = vmatpush1.bf16.msra.mxu0 %v4884
        %4888 = vmatprep.subr.bf16.mxu0 0
        %4889 = vmatpush1.bf16.msra.mxu0 0
        %4890 = vmatprep.subr.bf16.mxu0 0
        %4891 = vmatpush1.bf16.msra.mxu0 0
        %4892 = vmatprep.subr.bf16.mxu0 0
        %4893 = vmatpush1.bf16.msra.mxu0 0
        %4894 = vmatprep.subr.bf16.mxu0 0
        %4895 = vmatpush1.bf16.msra.mxu0 0
        %4896 = vmatprep.subr.bf16.mxu0 0
        %4897 = vmatpush1.bf16.msra.mxu0 0
        %4898 = vmatprep.subr.bf16.mxu0 0
        %4899 = vmatpush1.bf16.msra.mxu0 0
        %4900 = vmatprep.subr.bf16.mxu0 0
        %4901 = vmatpush1.bf16.msra.mxu0 0
        %4902 = vmatprep.subr.bf16.mxu0 0
        %4903 = vmatpush1.bf16.msra.mxu0 0
        %4904 = vmatprep.subr.bf16.mxu0 0
        %4905 = vmatpush1.bf16.msra.mxu0 0
        %4906 = vmatprep.subr.bf16.mxu0 0
        %4907 = vmatpush1.bf16.msra.mxu0 0
        %4908 = vmatprep.subr.bf16.mxu0 0
        %4909 = vmatpush1.bf16.msra.mxu0 0
        %4910 = vmatprep.subr.bf16.mxu0 0
        %4911 = vmatpush1.bf16.msra.mxu0 0
        %4912 = vmatprep.subr.bf16.mxu0 0
        %4913 = vmatpush1.bf16.msra.mxu0 0
        %4914 = vmatprep.subr.bf16.mxu0 0
        %4915 = vmatpush1.bf16.msra.mxu0 0
        %4916 = vmatprep.subr.bf16.mxu0 0
        %4917 = vmatpush1.bf16.msra.mxu0 0
        %4918 = vmatprep.mubr.bf16.mxu0 0
        %4919 = vmatmul.mubr.bf16.gmra.mrb[0].mxu0 %v4881
        %v4920 = vpop.f32.mrb[0].mxu0
        %v4921 = vadd.f32 0.0, %v4920
        %v4922 = vpop.f32.mrb[0].mxu0
        %v4923 = vpop.f32.mrb[0].mxu0
        %v4924 = vadd.f32 0.0, %v4923
        %v4925 = vpop.f32.mrb[0].mxu0
        %4926 = vdwg.mxu0
        %v4928 = vsel %vm2833, %v4680, 0
        %v4931 = vsel %vm4694, %v388, 0
        %4933 = vmatprep.subr.bf16.mxu0 0
        %4934 = vmatpush1.bf16.msra.mxu0 %v4931
        %4935 = vmatprep.subr.bf16.mxu0 0
        %4936 = vmatpush1.bf16.msra.mxu0 0
        %4937 = vmatprep.subr.bf16.mxu0 0
        %4938 = vmatpush1.bf16.msra.mxu0 0
        %4939 = vmatprep.subr.bf16.mxu0 0
        %4940 = vmatpush1.bf16.msra.mxu0 0
        %4941 = vmatprep.subr.bf16.mxu0 0
        %4942 = vmatpush1.bf16.msra.mxu0 0
        %4943 = vmatprep.subr.bf16.mxu0 0
        %4944 = vmatpush1.bf16.msra.mxu0 0
        %4945 = vmatprep.subr.bf16.mxu0 0
        %4946 = vmatpush1.bf16.msra.mxu0 0
        %4947 = vmatprep.subr.bf16.mxu0 0
        %4948 = vmatpush1.bf16.msra.mxu0 0
        %4949 = vmatprep.subr.bf16.mxu0 0
        %4950 = vmatpush1.bf16.msra.mxu0 0
        %4951 = vmatprep.subr.bf16.mxu0 0
        %4952 = vmatpush1.bf16.msra.mxu0 0
        %4953 = vmatprep.subr.bf16.mxu0 0
        %4954 = vmatpush1.bf16.msra.mxu0 0
        %4955 = vmatprep.subr.bf16.mxu0 0
        %4956 = vmatpush1.bf16.msra.mxu0 0
        %4957 = vmatprep.subr.bf16.mxu0 0
        %4958 = vmatpush1.bf16.msra.mxu0 0
        %4959 = vmatprep.subr.bf16.mxu0 0
        %4960 = vmatpush1.bf16.msra.mxu0 0
        %4961 = vmatprep.subr.bf16.mxu0 0
        %4962 = vmatpush1.bf16.msra.mxu0 0
        %4963 = vmatprep.subr.bf16.mxu0 0
        %4964 = vmatpush1.bf16.msra.mxu0 0
        %4965 = vmatprep.mubr.bf16.mxu0 0
        %4966 = vmatmul.mubr.bf16.gmra.mrb[0].mxu0 %v4928
        %v4967 = vpop.f32.mrb[0].mxu0
        %v4968 = vadd.f32 0.0, %v4967
        %v4969 = vpop.f32.mrb[0].mxu0
        %v4970 = vpop.f32.mrb[0].mxu0
        %v4971 = vadd.f32 0.0, %v4970
        %v4972 = vpop.f32.mrb[0].mxu0
        %4973 = vdwg.mxu0
        %v4975 = vsel %vm2833, %v4681, 0
        %v4978 = vsel %vm4694, %v389, 0
        %4980 = vmatprep.subr.bf16.mxu0 0
        %4981 = vmatpush1.bf16.msra.mxu0 %v4978
        %4982 = vmatprep.subr.bf16.mxu0 0
        %4983 = vmatpush1.bf16.msra.mxu0 0
        %4984 = vmatprep.subr.bf16.mxu0 0
        %4985 = vmatpush1.bf16.msra.mxu0 0
        %4986 = vmatprep.subr.bf16.mxu0 0
        %4987 = vmatpush1.bf16.msra.mxu0 0
        %4988 = vmatprep.subr.bf16.mxu0 0
        %4989 = vmatpush1.bf16.msra.mxu0 0
        %4990 = vmatprep.subr.bf16.mxu0 0
        %4991 = vmatpush1.bf16.msra.mxu0 0
        %4992 = vmatprep.subr.bf16.mxu0 0
        %4993 = vmatpush1.bf16.msra.mxu0 0
        %4994 = vmatprep.subr.bf16.mxu0 0
        %4995 = vmatpush1.bf16.msra.mxu0 0
        %4996 = vmatprep.subr.bf16.mxu0 0
        %4997 = vmatpush1.bf16.msra.mxu0 0
        %4998 = vmatprep.subr.bf16.mxu0 0
        %4999 = vmatpush1.bf16.msra.mxu0 0
        %5000 = vmatprep.subr.bf16.mxu0 0
        %5001 = vmatpush1.bf16.msra.mxu0 0
        %5002 = vmatprep.subr.bf16.mxu0 0
        %5003 = vmatpush1.bf16.msra.mxu0 0
        %5004 = vmatprep.subr.bf16.mxu0 0
        %5005 = vmatpush1.bf16.msra.mxu0 0
        %5006 = vmatprep.subr.bf16.mxu0 0
        %5007 = vmatpush1.bf16.msra.mxu0 0
        %5008 = vmatprep.subr.bf16.mxu0 0
        %5009 = vmatpush1.bf16.msra.mxu0 0
        %5010 = vmatprep.subr.bf16.mxu0 0
        %5011 = vmatpush1.bf16.msra.mxu0 0
        %5012 = vmatprep.mubr.bf16.mxu0 0
        %5013 = vmatmul.mubr.bf16.gmra.mrb[0].mxu0 %v4975
        %v5014 = vpop.f32.mrb[0].mxu0
        %v5015 = vadd.f32 0.0, %v5014
        %v5016 = vpop.f32.mrb[0].mxu0
        %v5017 = vpop.f32.mrb[0].mxu0
        %v5018 = vadd.f32 0.0, %v5017
        %v5019 = vpop.f32.mrb[0].mxu0
        %5020 = vdwg.mxu0
        %v5022 = vsel %vm2833, %v4682, 0
        %v5025 = vsel %vm4694, %v390, 0
        %5027 = vmatprep.subr.bf16.mxu0 0
        %5028 = vmatpush1.bf16.msra.mxu0 %v5025
        %5029 = vmatprep.subr.bf16.mxu0 0
        %5030 = vmatpush1.bf16.msra.mxu0 0
        %5031 = vmatprep.subr.bf16.mxu0 0
        %5032 = vmatpush1.bf16.msra.mxu0 0
        %5033 = vmatprep.subr.bf16.mxu0 0
        %5034 = vmatpush1.bf16.msra.mxu0 0
        %5035 = vmatprep.subr.bf16.mxu0 0
        %5036 = vmatpush1.bf16.msra.mxu0 0
        %5037 = vmatprep.subr.bf16.mxu0 0
        %5038 = vmatpush1.bf16.msra.mxu0 0
        %5039 = vmatprep.subr.bf16.mxu0 0
        %5040 = vmatpush1.bf16.msra.mxu0 0
        %5041 = vmatprep.subr.bf16.mxu0 0
        %5042 = vmatpush1.bf16.msra.mxu0 0
        %5043 = vmatprep.subr.bf16.mxu0 0
        %5044 = vmatpush1.bf16.msra.mxu0 0
        %5045 = vmatprep.subr.bf16.mxu0 0
        %5046 = vmatpush1.bf16.msra.mxu0 0
        %5047 = vmatprep.subr.bf16.mxu0 0
        %5048 = vmatpush1.bf16.msra.mxu0 0
        %5049 = vmatprep.subr.bf16.mxu0 0
        %5050 = vmatpush1.bf16.msra.mxu0 0
        %5051 = vmatprep.subr.bf16.mxu0 0
        %5052 = vmatpush1.bf16.msra.mxu0 0
        %5053 = vmatprep.subr.bf16.mxu0 0
        %5054 = vmatpush1.bf16.msra.mxu0 0
        %5055 = vmatprep.subr.bf16.mxu0 0
        %5056 = vmatpush1.bf16.msra.mxu0 0
        %5057 = vmatprep.subr.bf16.mxu0 0
        %5058 = vmatpush1.bf16.msra.mxu0 0
        %5059 = vmatprep.mubr.bf16.mxu0 0
        %5060 = vmatmul.mubr.bf16.gmra.mrb[0].mxu0 %v5022
        %v5061 = vpop.f32.mrb[0].mxu0
        %v5062 = vadd.f32 0.0, %v5061
        %v5063 = vpop.f32.mrb[0].mxu0
        %v5064 = vpop.f32.mrb[0].mxu0
        %v5065 = vadd.f32 0.0, %v5064
        %v5066 = vpop.f32.mrb[0].mxu0
        %5067 = vdwg.mxu0
        %v5069 = vsel %vm2833, %v4683, 0
        %5071 = vmatprep.subr.bf16.mxu0 0
        %5072 = vmatpush1.bf16.msra.mxu0 %v4696
        %5073 = vmatprep.subr.bf16.mxu0 0
        %5074 = vmatpush1.bf16.msra.mxu0 0
        %5075 = vmatprep.subr.bf16.mxu0 0
        %5076 = vmatpush1.bf16.msra.mxu0 0
        %5077 = vmatprep.subr.bf16.mxu0 0
        %5078 = vmatpush1.bf16.msra.mxu0 0
        %5079 = vmatprep.subr.bf16.mxu0 0
        %5080 = vmatpush1.bf16.msra.mxu0 0
        %5081 = vmatprep.subr.bf16.mxu0 0
        %5082 = vmatpush1.bf16.msra.mxu0 0
        %5083 = vmatprep.subr.bf16.mxu0 0
        %5084 = vmatpush1.bf16.msra.mxu0 0
        %5085 = vmatprep.subr.bf16.mxu0 0
        %5086 = vmatpush1.bf16.msra.mxu0 0
        %5087 = vmatprep.subr.bf16.mxu0 0
        %5088 = vmatpush1.bf16.msra.mxu0 0
        %5089 = vmatprep.subr.bf16.mxu0 0
        %5090 = vmatpush1.bf16.msra.mxu0 0
        %5091 = vmatprep.subr.bf16.mxu0 0
        %5092 = vmatpush1.bf16.msra.mxu0 0
        %5093 = vmatprep.subr.bf16.mxu0 0
        %5094 = vmatpush1.bf16.msra.mxu0 0
        %5095 = vmatprep.subr.bf16.mxu0 0
        %5096 = vmatpush1.bf16.msra.mxu0 0
        %5097 = vmatprep.subr.bf16.mxu0 0
        %5098 = vmatpush1.bf16.msra.mxu0 0
        %5099 = vmatprep.subr.bf16.mxu0 0
        %5100 = vmatpush1.bf16.msra.mxu0 0
        %5101 = vmatprep.subr.bf16.mxu0 0
        %5102 = vmatpush1.bf16.msra.mxu0 0
        %5103 = vmatprep.mubr.bf16.mxu0 0
        %5104 = vmatmul.mubr.bf16.gmra.mrb[0].mxu0 %v5069
        %v5105 = vpop.f32.mrb[0].mxu0
        %v5106 = vadd.f32 0.0, %v5105
        %v5107 = vpop.f32.mrb[0].mxu0
        %v5108 = vpop.f32.mrb[0].mxu0
        %v5109 = vadd.f32 0.0, %v5108
        %v5110 = vpop.f32.mrb[0].mxu0
        %5111 = vdwg.mxu0
        %v5113 = vsel %vm2833, %v4684, 0
        %5115 = vmatprep.subr.bf16.mxu0 0
        %5116 = vmatpush1.bf16.msra.mxu0 %v4743
        %5117 = vmatprep.subr.bf16.mxu0 0
        %5118 = vmatpush1.bf16.msra.mxu0 0
        %5119 = vmatprep.subr.bf16.mxu0 0
        %5120 = vmatpush1.bf16.msra.mxu0 0
        %5121 = vmatprep.subr.bf16.mxu0 0
        %5122 = vmatpush1.bf16.msra.mxu0 0
        %5123 = vmatprep.subr.bf16.mxu0 0
        %5124 = vmatpush1.bf16.msra.mxu0 0
        %5125 = vmatprep.subr.bf16.mxu0 0
        %5126 = vmatpush1.bf16.msra.mxu0 0
        %5127 = vmatprep.subr.bf16.mxu0 0
        %5128 = vmatpush1.bf16.msra.mxu0 0
        %5129 = vmatprep.subr.bf16.mxu0 0
        %5130 = vmatpush1.bf16.msra.mxu0 0
        %5131 = vmatprep.subr.bf16.mxu0 0
        %5132 = vmatpush1.bf16.msra.mxu0 0
        %5133 = vmatprep.subr.bf16.mxu0 0
        %5134 = vmatpush1.bf16.msra.mxu0 0
        %5135 = vmatprep.subr.bf16.mxu0 0
        %5136 = vmatpush1.bf16.msra.mxu0 0
        %5137 = vmatprep.subr.bf16.mxu0 0
        %5138 = vmatpush1.bf16.msra.mxu0 0
        %5139 = vmatprep.subr.bf16.mxu0 0
        %5140 = vmatpush1.bf16.msra.mxu0 0
        %5141 = vmatprep.subr.bf16.mxu0 0
        %5142 = vmatpush1.bf16.msra.mxu0 0
        %5143 = vmatprep.subr.bf16.mxu0 0
        %5144 = vmatpush1.bf16.msra.mxu0 0
        %5145 = vmatprep.subr.bf16.mxu0 0
        %5146 = vmatpush1.bf16.msra.mxu0 0
        %5147 = vmatprep.mubr.bf16.mxu0 0
        %5148 = vmatmul.mubr.bf16.gmra.mrb[0].mxu0 %v5113
        %v5149 = vpop.f32.mrb[0].mxu0
        %v5150 = vadd.f32 0.0, %v5149
        %v5151 = vpop.f32.mrb[0].mxu0
        %v5152 = vpop.f32.mrb[0].mxu0
        %v5153 = vadd.f32 0.0, %v5152
        %v5154 = vpop.f32.mrb[0].mxu0
        %5155 = vdwg.mxu0
        %v5157 = vsel %vm2833, %v4685, 0
        %5159 = vmatprep.subr.bf16.mxu0 0
        %5160 = vmatpush1.bf16.msra.mxu0 %v4790
        %5161 = vmatprep.subr.bf16.mxu0 0
        %5162 = vmatpush1.bf16.msra.mxu0 0
        %5163 = vmatprep.subr.bf16.mxu0 0
        %5164 = vmatpush1.bf16.msra.mxu0 0
        %5165 = vmatprep.subr.bf16.mxu0 0
        %5166 = vmatpush1.bf16.msra.mxu0 0
        %5167 = vmatprep.subr.bf16.mxu0 0
        %5168 = vmatpush1.bf16.msra.mxu0 0
        %5169 = vmatprep.subr.bf16.mxu0 0
        %5170 = vmatpush1.bf16.msra.mxu0 0
        %5171 = vmatprep.subr.bf16.mxu0 0
        %5172 = vmatpush1.bf16.msra.mxu0 0
        %5173 = vmatprep.subr.bf16.mxu0 0
        %5174 = vmatpush1.bf16.msra.mxu0 0
        %5175 = vmatprep.subr.bf16.mxu0 0
        %5176 = vmatpush1.bf16.msra.mxu0 0
        %5177 = vmatprep.subr.bf16.mxu0 0
        %5178 = vmatpush1.bf16.msra.mxu0 0
        %5179 = vmatprep.subr.bf16.mxu0 0
        %5180 = vmatpush1.bf16.msra.mxu0 0
        %5181 = vmatprep.subr.bf16.mxu0 0
        %5182 = vmatpush1.bf16.msra.mxu0 0
        %5183 = vmatprep.subr.bf16.mxu0 0
        %5184 = vmatpush1.bf16.msra.mxu0 0
        %5185 = vmatprep.subr.bf16.mxu0 0
        %5186 = vmatpush1.bf16.msra.mxu0 0
        %5187 = vmatprep.subr.bf16.mxu0 0
        %5188 = vmatpush1.bf16.msra.mxu0 0
        %5189 = vmatprep.subr.bf16.mxu0 0
        %5190 = vmatpush1.bf16.msra.mxu0 0
        %5191 = vmatprep.mubr.bf16.mxu0 0
        %5192 = vmatmul.mubr.bf16.gmra.mrb[0].mxu0 %v5157
        %v5193 = vpop.f32.mrb[0].mxu0
        %v5194 = vadd.f32 0.0, %v5193
        %v5195 = vpop.f32.mrb[0].mxu0
        %v5196 = vpop.f32.mrb[0].mxu0
        %v5197 = vadd.f32 0.0, %v5196
        %v5198 = vpop.f32.mrb[0].mxu0
        %5199 = vdwg.mxu0
        %v5201 = vsel %vm2833, %v4686, 0
        %5203 = vmatprep.subr.bf16.mxu0 0
        %5204 = vmatpush1.bf16.msra.mxu0 %v4837
        %5205 = vmatprep.subr.bf16.mxu0 0
        %5206 = vmatpush1.bf16.msra.mxu0 0
        %5207 = vmatprep.subr.bf16.mxu0 0
        %5208 = vmatpush1.bf16.msra.mxu0 0
        %5209 = vmatprep.subr.bf16.mxu0 0
        %5210 = vmatpush1.bf16.msra.mxu0 0
        %5211 = vmatprep.subr.bf16.mxu0 0
        %5212 = vmatpush1.bf16.msra.mxu0 0
        %5213 = vmatprep.subr.bf16.mxu0 0
        %5214 = vmatpush1.bf16.msra.mxu0 0
        %5215 = vmatprep.subr.bf16.mxu0 0
        %5216 = vmatpush1.bf16.msra.mxu0 0
        %5217 = vmatprep.subr.bf16.mxu0 0
        %5218 = vmatpush1.bf16.msra.mxu0 0
        %5219 = vmatprep.subr.bf16.mxu0 0
        %5220 = vmatpush1.bf16.msra.mxu0 0
        %5221 = vmatprep.subr.bf16.mxu0 0
        %5222 = vmatpush1.bf16.msra.mxu0 0
        %5223 = vmatprep.subr.bf16.mxu0 0
        %5224 = vmatpush1.bf16.msra.mxu0 0
        %5225 = vmatprep.subr.bf16.mxu0 0
        %5226 = vmatpush1.bf16.msra.mxu0 0
        %5227 = vmatprep.subr.bf16.mxu0 0
        %5228 = vmatpush1.bf16.msra.mxu0 0
        %5229 = vmatprep.subr.bf16.mxu0 0
        %5230 = vmatpush1.bf16.msra.mxu0 0
        %5231 = vmatprep.subr.bf16.mxu0 0
        %5232 = vmatpush1.bf16.msra.mxu0 0
        %5233 = vmatprep.subr.bf16.mxu0 0
        %5234 = vmatpush1.bf16.msra.mxu0 0
        %5235 = vmatprep.mubr.bf16.mxu0 0
        %5236 = vmatmul.mubr.bf16.gmra.mrb[0].mxu0 %v5201
        %v5237 = vpop.f32.mrb[0].mxu0
        %v5238 = vadd.f32 0.0, %v5237
        %v5239 = vpop.f32.mrb[0].mxu0
        %v5240 = vpop.f32.mrb[0].mxu0
        %v5241 = vadd.f32 0.0, %v5240
        %v5242 = vpop.f32.mrb[0].mxu0
        %5243 = vdwg.mxu0
        %v5245 = vsel %vm2833, %v4687, 0
        %5247 = vmatprep.subr.bf16.mxu0 0
        %5248 = vmatpush1.bf16.msra.mxu0 %v4884
        %5249 = vmatprep.subr.bf16.mxu0 0
        %5250 = vmatpush1.bf16.msra.mxu0 0
        %5251 = vmatprep.subr.bf16.mxu0 0
        %5252 = vmatpush1.bf16.msra.mxu0 0
        %5253 = vmatprep.subr.bf16.mxu0 0
        %5254 = vmatpush1.bf16.msra.mxu0 0
        %5255 = vmatprep.subr.bf16.mxu0 0
        %5256 = vmatpush1.bf16.msra.mxu0 0
        %5257 = vmatprep.subr.bf16.mxu0 0
        %5258 = vmatpush1.bf16.msra.mxu0 0
        %5259 = vmatprep.subr.bf16.mxu0 0
        %5260 = vmatpush1.bf16.msra.mxu0 0
        %5261 = vmatprep.subr.bf16.mxu0 0
        %5262 = vmatpush1.bf16.msra.mxu0 0
        %5263 = vmatprep.subr.bf16.mxu0 0
        %5264 = vmatpush1.bf16.msra.mxu0 0
        %5265 = vmatprep.subr.bf16.mxu0 0
        %5266 = vmatpush1.bf16.msra.mxu0 0
        %5267 = vmatprep.subr.bf16.mxu0 0
        %5268 = vmatpush1.bf16.msra.mxu0 0
        %5269 = vmatprep.subr.bf16.mxu0 0
        %5270 = vmatpush1.bf16.msra.mxu0 0
        %5271 = vmatprep.subr.bf16.mxu0 0
        %5272 = vmatpush1.bf16.msra.mxu0 0
        %5273 = vmatprep.subr.bf16.mxu0 0
        %5274 = vmatpush1.bf16.msra.mxu0 0
        %5275 = vmatprep.subr.bf16.mxu0 0
        %5276 = vmatpush1.bf16.msra.mxu0 0
        %5277 = vmatprep.subr.bf16.mxu0 0
        %5278 = vmatpush1.bf16.msra.mxu0 0
        %5279 = vmatprep.mubr.bf16.mxu0 0
        %5280 = vmatmul.mubr.bf16.gmra.mrb[0].mxu0 %v5245
        %v5281 = vpop.f32.mrb[0].mxu0
        %v5282 = vadd.f32 0.0, %v5281
        %v5283 = vpop.f32.mrb[0].mxu0
        %v5284 = vpop.f32.mrb[0].mxu0
        %v5285 = vadd.f32 0.0, %v5284
        %v5286 = vpop.f32.mrb[0].mxu0
        %5287 = vdwg.mxu0
        %v5289 = vsel %vm2833, %v4688, 0
        %5291 = vmatprep.subr.bf16.mxu0 0
        %5292 = vmatpush1.bf16.msra.mxu0 %v4931
        %5293 = vmatprep.subr.bf16.mxu0 0
        %5294 = vmatpush1.bf16.msra.mxu0 0
        %5295 = vmatprep.subr.bf16.mxu0 0
        %5296 = vmatpush1.bf16.msra.mxu0 0
        %5297 = vmatprep.subr.bf16.mxu0 0
        %5298 = vmatpush1.bf16.msra.mxu0 0
        %5299 = vmatprep.subr.bf16.mxu0 0
        %5300 = vmatpush1.bf16.msra.mxu0 0
        %5301 = vmatprep.subr.bf16.mxu0 0
        %5302 = vmatpush1.bf16.msra.mxu0 0
        %5303 = vmatprep.subr.bf16.mxu0 0
        %5304 = vmatpush1.bf16.msra.mxu0 0
        %5305 = vmatprep.subr.bf16.mxu0 0
        %5306 = vmatpush1.bf16.msra.mxu0 0
        %5307 = vmatprep.subr.bf16.mxu0 0
        %5308 = vmatpush1.bf16.msra.mxu0 0
        %5309 = vmatprep.subr.bf16.mxu0 0
        %5310 = vmatpush1.bf16.msra.mxu0 0
        %5311 = vmatprep.subr.bf16.mxu0 0
        %5312 = vmatpush1.bf16.msra.mxu0 0
        %5313 = vmatprep.subr.bf16.mxu0 0
        %5314 = vmatpush1.bf16.msra.mxu0 0
        %5315 = vmatprep.subr.bf16.mxu0 0
        %5316 = vmatpush1.bf16.msra.mxu0 0
        %5317 = vmatprep.subr.bf16.mxu0 0
        %5318 = vmatpush1.bf16.msra.mxu0 0
        %5319 = vmatprep.subr.bf16.mxu0 0
        %5320 = vmatpush1.bf16.msra.mxu0 0
        %5321 = vmatprep.subr.bf16.mxu0 0
        %5322 = vmatpush1.bf16.msra.mxu0 0
        %5323 = vmatprep.mubr.bf16.mxu0 0
        %5324 = vmatmul.mubr.bf16.gmra.mrb[0].mxu0 %v5289
        %v5325 = vpop.f32.mrb[0].mxu0
        %v5326 = vadd.f32 0.0, %v5325
        %v5327 = vpop.f32.mrb[0].mxu0
        %v5328 = vpop.f32.mrb[0].mxu0
        %v5329 = vadd.f32 0.0, %v5328
        %v5330 = vpop.f32.mrb[0].mxu0
        %5331 = vdwg.mxu0
        %v5333 = vsel %vm2833, %v4689, 0
        %5335 = vmatprep.subr.bf16.mxu0 0
        %5336 = vmatpush1.bf16.msra.mxu0 %v4978
        %5337 = vmatprep.subr.bf16.mxu0 0
        %5338 = vmatpush1.bf16.msra.mxu0 0
        %5339 = vmatprep.subr.bf16.mxu0 0
        %5340 = vmatpush1.bf16.msra.mxu0 0
        %5341 = vmatprep.subr.bf16.mxu0 0
        %5342 = vmatpush1.bf16.msra.mxu0 0
        %5343 = vmatprep.subr.bf16.mxu0 0
        %5344 = vmatpush1.bf16.msra.mxu0 0
        %5345 = vmatprep.subr.bf16.mxu0 0
        %5346 = vmatpush1.bf16.msra.mxu0 0
        %5347 = vmatprep.subr.bf16.mxu0 0
        %5348 = vmatpush1.bf16.msra.mxu0 0
        %5349 = vmatprep.subr.bf16.mxu0 0
        %5350 = vmatpush1.bf16.msra.mxu0 0
        %5351 = vmatprep.subr.bf16.mxu0 0
        %5352 = vmatpush1.bf16.msra.mxu0 0
        %5353 = vmatprep.subr.bf16.mxu0 0
        %5354 = vmatpush1.bf16.msra.mxu0 0
        %5355 = vmatprep.subr.bf16.mxu0 0
        %5356 = vmatpush1.bf16.msra.mxu0 0
        %5357 = vmatprep.subr.bf16.mxu0 0
        %5358 = vmatpush1.bf16.msra.mxu0 0
        %5359 = vmatprep.subr.bf16.mxu0 0
        %5360 = vmatpush1.bf16.msra.mxu0 0
        %5361 = vmatprep.subr.bf16.mxu0 0
        %5362 = vmatpush1.bf16.msra.mxu0 0
        %5363 = vmatprep.subr.bf16.mxu0 0
        %5364 = vmatpush1.bf16.msra.mxu0 0
        %5365 = vmatprep.subr.bf16.mxu0 0
        %5366 = vmatpush1.bf16.msra.mxu0 0
        %5367 = vmatprep.mubr.bf16.mxu0 0
        %5368 = vmatmul.mubr.bf16.gmra.mrb[0].mxu0 %v5333
        %v5369 = vpop.f32.mrb[0].mxu0
        %v5370 = vadd.f32 0.0, %v5369
        %v5371 = vpop.f32.mrb[0].mxu0
        %v5372 = vpop.f32.mrb[0].mxu0
        %v5373 = vadd.f32 0.0, %v5372
        %v5374 = vpop.f32.mrb[0].mxu0
        %5375 = vdwg.mxu0
        %v5377 = vsel %vm2833, %v4690, 0
        %5379 = vmatprep.subr.bf16.mxu0 0
        %5380 = vmatpush1.bf16.msra.mxu0 %v5025
        %5381 = vmatprep.subr.bf16.mxu0 0
        %5382 = vmatpush1.bf16.msra.mxu0 0
        %5383 = vmatprep.subr.bf16.mxu0 0
        %5384 = vmatpush1.bf16.msra.mxu0 0
        %5385 = vmatprep.subr.bf16.mxu0 0
        %5386 = vmatpush1.bf16.msra.mxu0 0
        %5387 = vmatprep.subr.bf16.mxu0 0
        %5388 = vmatpush1.bf16.msra.mxu0 0
        %5389 = vmatprep.subr.bf16.mxu0 0
        %5390 = vmatpush1.bf16.msra.mxu0 0
        %5391 = vmatprep.subr.bf16.mxu0 0
        %5392 = vmatpush1.bf16.msra.mxu0 0
        %5393 = vmatprep.subr.bf16.mxu0 0
        %5394 = vmatpush1.bf16.msra.mxu0 0
        %5395 = vmatprep.subr.bf16.mxu0 0
        %5396 = vmatpush1.bf16.msra.mxu0 0
        %5397 = vmatprep.subr.bf16.mxu0 0
        %5398 = vmatpush1.bf16.msra.mxu0 0
        %5399 = vmatprep.subr.bf16.mxu0 0
        %5400 = vmatpush1.bf16.msra.mxu0 0
        %5401 = vmatprep.subr.bf16.mxu0 0
        %5402 = vmatpush1.bf16.msra.mxu0 0
        %5403 = vmatprep.subr.bf16.mxu0 0
        %5404 = vmatpush1.bf16.msra.mxu0 0
        %5405 = vmatprep.subr.bf16.mxu0 0
        %5406 = vmatpush1.bf16.msra.mxu0 0
        %5407 = vmatprep.subr.bf16.mxu0 0
        %5408 = vmatpush1.bf16.msra.mxu0 0
        %5409 = vmatprep.subr.bf16.mxu0 0
        %5410 = vmatpush1.bf16.msra.mxu0 0
        %5411 = vmatprep.mubr.bf16.mxu0 0
        %5412 = vmatmul.mubr.bf16.gmra.mrb[0].mxu0 %v5377
        %v5413 = vpop.f32.mrb[0].mxu0
        %v5414 = vadd.f32 0.0, %v5413
        %v5415 = vpop.f32.mrb[0].mxu0
        %v5416 = vpop.f32.mrb[0].mxu0
        %v5417 = vadd.f32 0.0, %v5416
        %v5418 = vpop.f32.mrb[0].mxu0
        %5419 = vdwg.mxu0
        %vm5420 = vcmask 261120
        %v5421 = vsel %vm5420, %v4733, 0.0
        %v5422 = vsel %vm5420, %v4780, 0.0
        %v5423 = vadd.f32 %v5421, %v5422
        %v5424 = vsel %vm5420, %v4827, 0.0
        %v5425 = vadd.f32 %v5423, %v5424
        %v5426 = vsel %vm5420, %v4874, 0.0
        %v5427 = vadd.f32 %v5425, %v5426
        %v5428 = vsel %vm5420, %v4921, 0.0
        %v5429 = vadd.f32 %v5427, %v5428
        %v5430 = vsel %vm5420, %v4968, 0.0
        %v5431 = vadd.f32 %v5429, %v5430
        %v5432 = vsel %vm5420, %v5015, 0.0
        %v5433 = vadd.f32 %v5431, %v5432
        %v5434 = vsel %vm5420, %v5062, 0.0
        %v5435 = vadd.f32 %v5433, %v5434
        %v5436 = vsel %vm5420, %v4736, 0.0
        %v5437 = vsel %vm5420, %v4783, 0.0
        %v5438 = vadd.f32 %v5436, %v5437
        %v5439 = vsel %vm5420, %v4830, 0.0
        %v5440 = vadd.f32 %v5438, %v5439
        %v5441 = vsel %vm5420, %v4877, 0.0
        %v5442 = vadd.f32 %v5440, %v5441
        %v5443 = vsel %vm5420, %v4924, 0.0
        %v5444 = vadd.f32 %v5442, %v5443
        %v5445 = vsel %vm5420, %v4971, 0.0
        %v5446 = vadd.f32 %v5444, %v5445
        %v5447 = vsel %vm5420, %v5018, 0.0
        %v5448 = vadd.f32 %v5446, %v5447
        %v5449 = vsel %vm5420, %v5065, 0.0
        %v5450 = vadd.f32 %v5448, %v5449
        %v5451 = vsel %vm5420, %v5106, 0.0
        %v5452 = vsel %vm5420, %v5150, 0.0
        %v5453 = vadd.f32 %v5451, %v5452
        %v5454 = vsel %vm5420, %v5194, 0.0
        %v5455 = vadd.f32 %v5453, %v5454
        %v5456 = vsel %vm5420, %v5238, 0.0
        %v5457 = vadd.f32 %v5455, %v5456
        %v5458 = vsel %vm5420, %v5282, 0.0
        %v5459 = vadd.f32 %v5457, %v5458
        %v5460 = vsel %vm5420, %v5326, 0.0
        %v5461 = vadd.f32 %v5459, %v5460
        %v5462 = vsel %vm5420, %v5370, 0.0
        %v5463 = vadd.f32 %v5461, %v5462
        %v5464 = vsel %vm5420, %v5414, 0.0
        %v5465 = vadd.f32 %v5463, %v5464
        %v5466 = vsel %vm5420, %v5109, 0.0
        %v5467 = vsel %vm5420, %v5153, 0.0
        %v5468 = vadd.f32 %v5466, %v5467
        %v5469 = vsel %vm5420, %v5197, 0.0
        %v5470 = vadd.f32 %v5468, %v5469
        %v5471 = vsel %vm5420, %v5241, 0.0
        %v5472 = vadd.f32 %v5470, %v5471
        %v5473 = vsel %vm5420, %v5285, 0.0
        %v5474 = vadd.f32 %v5472, %v5473
        %v5475 = vsel %vm5420, %v5329, 0.0
        %v5476 = vadd.f32 %v5474, %v5475
        %v5477 = vsel %vm5420, %v5373, 0.0
        %v5478 = vadd.f32 %v5476, %v5477
        %v5479 = vsel %vm5420, %v5417, 0.0
        %v5480 = vadd.f32 %v5478, %v5479
        %v5481 = vld [vmem:[%s5] sm:$0x1]
        %v5483 = vlaneseq
        %v5484 = vshrl.u32 %v5483, 7
        %v5485 = vsub.s32 0, %v5484
        %v5486 = vrot.slane %v5481, %v5485
        %v5488 = vadd.f32 %v5435, %v5486
        %v5489 = vadd.f32 %v5450, %v5486
        %v5490 = vadd.f32 %v5465, %v5486
        %v5491 = vadd.f32 %v5480, %v5486
        %5492 = vst.msk [vmem:[%s247] sm:$0xff] %vm5420, %v5488
        %5493 = vst.msk [vmem:[%s247 + $0x8] sm:$0xff] %vm5420, %v5489
        %5494 = vst.msk [vmem:[%s247 + $0x10] sm:$0xff] %vm5420, %v5490
        %5495 = vst.msk [vmem:[%s247 + $0x18] sm:$0xff] %vm5420, %v5491
        %s5496 = sand.u32 %s159, 1
        %s5497 = scalar_lea.sflag [#allocation3], %s5496
        %s5498 = sand.u32 %s159, 1
        %s5499 = smul.addr %s5498, 32
        %s5500 = scalar_lea.vmem [#allocation2], %s5499
        // Predicated region
        $region45: #{tpu_custom_call.1} parent=43 // pred_check
          %p5501 = pneg %p169
        $region46: #{tpu_custom_call.1} parent=43 // pred_check_branch
          %5503 = sbr.rel (%p5501) target = $region48
        $region47: #{tpu_custom_call.1} parent=43 // pred_region
          %s5504 = smul.u32 2, %s20
          %s5506 = ssub.s32 512, 512
          %5507 = vsyncadd %s5497, %s5506
          %s5508 = smul.addr %s5504, 2
          %s5509 = smul.addr %s5508, 128
          %s5510 = scalar_lea.hbm %s6, %s5509
          %s5511 = sshll.u32 %s5500, 4
          %s5512 = int_to_ptr.vmem [resolvable:$true] %s5511
          %5517 = dma.vmem_to_hbm [thread:$0]  %s5512, 512, %s5510, %s5497, 128, 128, 8
        $region48: #{tpu_custom_call.1} parent=43 // pred_fallthru
          _
      $region44: #{tpu_custom_call.1} parent=5 // pred_fallthru
        _
      %p5518 = scmp.le.s32.totalorder 2, %s15
      // Predicated region
      $region49: #{tpu_custom_call.1} parent=5 // pred_check
        %p5519 = pneg %p5518
      $region50: #{tpu_custom_call.1} parent=5 // pred_check_branch
        %5521 = sbr.rel (%p5519) target = $region52
      $region51: #{tpu_custom_call.1} parent=5 // pred_region
        %s5522 = ssub.s32 %s15, 2
        // Predicated region
        $region53: #{tpu_custom_call.1} parent=51 // pred_check
          %p5523 = pneg %p175
        $region54: #{tpu_custom_call.1} parent=51 // pred_check_branch
          %5525 = sbr.rel (%p5523) target = $region56
        $region55: #{tpu_custom_call.1} parent=51 // pred_region
          %s5526 = sand.u32 %s160, 1
          %s5527 = scalar_lea.sflag [#allocation3], %s5526
          %s5528 = sand.u32 %s160, 1
          %s5529 = smul.addr %s5528, 32
          %s5530 = scalar_lea.vmem [#allocation2], %s5529
          %5531 = dma.done %s5527, 512
        $region56: #{tpu_custom_call.1} parent=51 // pred_fallthru
          _
      $region52: #{tpu_custom_call.1} parent=5 // pred_fallthru
        _
    $region6: #{tpu_custom_call.1} parent=1 // loop_footer
      %s19 = sadd.s32 1, %s15
    $region7: #{tpu_custom_call.1} parent=1 // loop_footer_branch
      %14 = sbr.rel target = $region3
    $region8: #{tpu_custom_call.1} parent=1 // loop_exit
      _
    %5532 = vsyncpa [#allocation3], 1
    %s5533 = scalar_lea.sflag [#allocation3], 1
    %5534 = vsyncpa %s5533, 1

</llo_original>
